<compile_context>
chip_gen: v7x
topology: tpu7x:2x2x1
jax: 0.10.0
libtpu: 0.0.40
codegen_flags: <defaults>
</compile_context>

<pallas_src>
import functools

import jax
import jax.numpy as jnp
from jax import lax
from jax.experimental import pallas as pl
from jax.experimental.pallas import tpu as pltpu

EXPANSION = 4
BN_EPS = 1e-5


def _round_up(x, m):
    return (x + m - 1) // m * m


def _pick_row_tile(ho, target):
    for t in range(min(target, ho), 0, -1):
        if ho % t == 0:
            return t
    return 1


def _bottleneck_kernel(*refs, stride, has_shortcut):
    if has_shortcut:
        (x_ref, w1_ref, b1_ref, w2_ref, b2_ref, w3_ref, b3_ref,
         wsc_ref, out_ref, pad_ref) = refs
    else:
        (x_ref, w1_ref, b1_ref, w2_ref, b2_ref, w3_ref, b3_ref,
         out_ref, pad_ref) = refs
        wsc_ref = None

    H, W, Cinp = x_ref.shape
    Czp = w2_ref.shape[-1]
    TH, Wo, Coutp = out_ref.shape
    r = pl.program_id(1)

    # ---- conv1 (1x1, BN scale folded) + shift + ReLU: once per image --------
    @pl.when(r == 0)
    def _():
        # Zero only the 1-pixel border of the padded y1 slab.
        zrow = jnp.zeros((1, W + 2, Czp), pad_ref.dtype)
        pad_ref[0:1, :, :] = zrow
        pad_ref[H + 1:H + 2, :, :] = zrow
        zcol = jnp.zeros((H, 1, Czp), pad_ref.dtype)
        pad_ref[1:H + 1, 0:1, :] = zcol
        pad_ref[1:H + 1, W + 1:W + 2, :] = zcol

        x_flat = x_ref[...].reshape(H * W, Cinp)
        y1 = jnp.dot(x_flat, w1_ref[...], preferred_element_type=jnp.float32)
        y1 = jnp.maximum(y1 + b1_ref[...], 0.0)
        pad_ref[1:H + 1, 1:W + 1, :] = y1.reshape(H, W, Czp).astype(pad_ref.dtype)

    # ---- conv2 (3x3, stride, pad=1): 9 shifted matmuls, vreg accumulator ----
    row0 = pl.multiple_of(r * TH * stride, TH * stride)
    acc = None
    for dy in range(3):
        for dx in range(3):
            if stride == 1:
                patch = pad_ref[pl.ds(row0 + dy, TH), pl.ds(dx, Wo), :]
            else:
                # TODO(synk): stride > 1 uses strided ref windows; only the
                # stride == 1 path is exercised / validated in this script.
                patch = pad_ref[pl.ds(row0 + dy, TH, stride=stride),
                                pl.ds(dx, Wo, stride=stride), :]
            contrib = jnp.dot(patch.reshape(TH * Wo, Czp), w2_ref[dy * 3 + dx],
                              preferred_element_type=jnp.float32)
            acc = contrib if acc is None else acc + contrib

    y2 = jnp.maximum(acc + b2_ref[...], 0.0)                 # f32 epilogue

    # ---- conv3 (1x1, BN scale folded) + (shift incl. shortcut-BN shift) -----
    y3 = jnp.dot(y2.astype(w3_ref.dtype), w3_ref[...],
                 preferred_element_type=jnp.float32) + b3_ref[...]

    # ---- shortcut ------------------------------------------------------------
    if has_shortcut:
        if stride == 1:
            xs = x_ref[pl.ds(row0, TH), :, :]
        else:
            xs = x_ref[pl.ds(row0, TH, stride=stride),
                       pl.ds(0, Wo, stride=stride), :]
        sc = jnp.dot(xs.reshape(TH * Wo, Cinp), wsc_ref[...],
                     preferred_element_type=jnp.float32)
    else:
        # Identity shortcut (wrapper asserts stride == 1 and Cin == Cout).
        xs = x_ref[pl.ds(row0, TH), :, :]
        sc = xs.reshape(TH * Wo, Cinp).astype(jnp.float32)

    out = jnp.maximum(y3 + sc, 0.0)
    out_ref[...] = out.reshape(TH, Wo, Coutp).astype(out_ref.dtype)


def _bn_scale_shift(c):
    """PyTorch-default BN (inference form): gamma=1, beta=0, mean=0, var=1."""
    gamma = jnp.ones((c,), jnp.float32)
    beta = jnp.zeros((c,), jnp.float32)
    mean = jnp.zeros((c,), jnp.float32)
    var = jnp.ones((c,), jnp.float32)
    scale = gamma / jnp.sqrt(var + BN_EPS)
    shift = beta - mean * scale
    return scale.reshape(1, c), shift.reshape(1, c)


def make_bottleneck_params(key, in_channels, zip_channels, stride=1):
    out_channels = EXPANSION * zip_channels
    k1, k2, k3, k4 = jax.random.split(key, 4)
    # Stored already transposed for the kernel's matmul layout (Cin, Cout).
    w1 = 0.1 * jax.random.normal(k1, (in_channels, zip_channels), jnp.float32)
    w2 = 0.1 * jax.random.normal(k2, (3, 3, zip_channels, zip_channels), jnp.float32)
    w3 = 0.1 * jax.random.normal(k3, (zip_channels, out_channels), jnp.float32)
    s1, b1 = _bn_scale_shift(zip_channels)
    s2, b2 = _bn_scale_shift(zip_channels)
    s3, b3 = _bn_scale_shift(out_channels)
    has_shortcut = (stride != 1) or (in_channels != out_channels)
    if has_shortcut:
        wsc = 0.1 * jax.random.normal(k4, (in_channels, out_channels), jnp.float32)
    else:
        wsc = jnp.zeros((in_channels, out_channels), jnp.float32)
    ssc, bsc = _bn_scale_shift(out_channels)
    return dict(w1=w1, s1=s1, b1=b1, w2=w2, s2=s2, b2=b2, w3=w3, s3=s3, b3=b3,
                wsc=wsc, ssc=ssc, bsc=bsc, has_shortcut=has_shortcut)


def bottleneck_forward(x_nchw, params, *, stride=1, row_tile=8,
                       compute_dtype=jnp.float32):
    """Fused Bottleneck forward: (N, Cin, H, W) -> (N, Cout, Ho, Wo)."""
    x = jnp.transpose(x_nchw, (0, 2, 3, 1)).astype(jnp.float32)   # NCHW -> NHWC
    N, H, W, Cin = x.shape
    Cz = params["w1"].shape[1]
    Cout = params["w3"].shape[1]
    has_shortcut = bool(params["has_shortcut"])
    Ho = (H + 2 - 3) // stride + 1
    Wo = (W + 2 - 3) // stride + 1
    if not has_shortcut:
        assert stride == 1 and Cin == Cout, "identity shortcut needs stride=1, Cin==Cout"

    # Lane-dense channel padding (multiples of 128).
    Cinp = _round_up(Cin, 128)
    Czp = _round_up(Cz, 128)
    Coutp = _round_up(Cout, 128)

    # Fold BN scale into conv weights; keep the per-channel shifts.
    w1 = params["w1"] * params["s1"]                          # (Cin, Cz)
    w2 = params["w2"] * params["s2"].reshape(1, 1, 1, Cz)     # (3, 3, Cz, Cz)
    w3 = params["w3"] * params["s3"]                          # (Cz, Cout)
    b3 = params["b3"]
    if has_shortcut:
        b3 = b3 + params["bsc"]                               # fold shortcut-BN shift

    def pad2(a, rows, cols):
        return jnp.pad(a, ((0, rows - a.shape[0]), (0, cols - a.shape[1])))

    xpad = jnp.pad(x, ((0, 0), (0, 0), (0, 0), (0, Cinp - Cin))).astype(compute_dtype)
    w1p = pad2(w1, Cinp, Czp).astype(compute_dtype)
    w2p = jnp.pad(w2.reshape(9, Cz, Cz),
                  ((0, 0), (0, Czp - Cz), (0, Czp - Cz))).astype(compute_dtype)
    w3p = pad2(w3, Czp, Coutp).astype(compute_dtype)
    b1p = pad2(params["b1"], 1, Czp).astype(jnp.float32)
    b2p = pad2(params["b2"], 1, Czp).astype(jnp.float32)
    b3p = pad2(b3, 1, Coutp).astype(jnp.float32)

    TH = _pick_row_tile(Ho, row_tile)
    R = Ho // TH

    cmap2 = lambda n, r: (0, 0)
    in_specs = [
        pl.BlockSpec((None, H, W, Cinp), lambda n, r: (n, 0, 0, 0)),   # x (image-resident)
        pl.BlockSpec((Cinp, Czp), cmap2),                              # w1 (scale folded)
        pl.BlockSpec((1, Czp), cmap2),                                 # b1 shift
        pl.BlockSpec((9, Czp, Czp), lambda n, r: (0, 0, 0)),           # w2 (scale folded)
        pl.BlockSpec((1, Czp), cmap2),                                 # b2 shift
        pl.BlockSpec((Czp, Coutp), cmap2),                             # w3 (scale folded)
        pl.BlockSpec((1, Coutp), cmap2),                               # b3 (+bsc) shift
    ]
    args = [xpad, w1p, b1p, w2p, b2p, w3p, b3p]
    if has_shortcut:
        wscp = pad2(params["wsc"] * params["ssc"], Cinp, Coutp).astype(compute_dtype)
        in_specs += [pl.BlockSpec((Cinp, Coutp), cmap2)]
        args += [wscp]

    out_specs = pl.BlockSpec((None, TH, Wo, Coutp), lambda n, r: (n, r, 0, 0))

    # Per-step VMEM working-set estimate; keep the explicit limit under v7x's 64 MiB.
    isz = jnp.dtype(compute_dtype).itemsize
    est = (2 * H * W * Cinp * isz                     # x block (double-buffered)
           + (H + 2) * (W + 2) * Czp * isz            # padded y1 slab scratch
           + 2 * TH * Wo * Coutp * 4                  # output block (double-buffered)
           + (Cinp * Czp + 9 * Czp * Czp + Czp * Coutp + Cinp * Coutp) * isz)
    vmem_limit = int(min(max(2 * est, 32 * 1024 * 1024), 56 * 1024 * 1024))

    kernel = functools.partial(_bottleneck_kernel, stride=stride,
                               has_shortcut=has_shortcut)

    out = pl.pallas_call(
        kernel,
        grid=(N, R),
        in_specs=in_specs,
        out_specs=out_specs,
        out_shape=jax.ShapeDtypeStruct((N, Ho, Wo, Coutp), jnp.float32),
        scratch_shapes=[
            pltpu.VMEM((H + 2, W + 2, Czp), compute_dtype),   # padded y1 slab
        ],
        compiler_params=pltpu.CompilerParams(
            # batch axis "parallel" (megacore); row axis carries the y1-slab
            # dependency (filled at r == 0), so it must stay "arbitrary".
            dimension_semantics=("parallel", "arbitrary"),
            vmem_limit_bytes=vmem_limit),
    )(*args)

    out = out[..., :Cout]                              # drop channel padding
    return jnp.transpose(out, (0, 3, 1, 2))            # NHWC -> NCHW


# -------------------- pure-JAX reference (for verification) --------------------
def bottleneck_reference(x_nchw, params, *, stride=1):
    x = jnp.transpose(x_nchw, (0, 2, 3, 1)).astype(jnp.float32)
    dn = ("NHWC", "HWIO", "NHWC")

    def conv(v, w_hwio, s, pad):
        return lax.conv_general_dilated(v, w_hwio, (s, s), pad,
                                        dimension_numbers=dn,
                                        precision=lax.Precision.HIGHEST)

    def bn(v, scale, shift):
        return v * scale.reshape(1, 1, 1, -1) + shift.reshape(1, 1, 1, -1)

    y = jnp.maximum(bn(conv(x, params["w1"][None, None], 1, "VALID"),
                       params["s1"], params["b1"]), 0.0)
    y = jnp.maximum(bn(conv(y, params["w2"], stride, ((1, 1), (1, 1))),
                       params["s2"], params["b2"]), 0.0)
    y = bn(conv(y, params["w3"][None, None], 1, "VALID"),
           params["s3"], params["b3"])
    if params["has_shortcut"]:
        sc = bn(conv(x, params["wsc"][None, None], stride, "VALID"),
                params["ssc"], params["bsc"])
    else:
        sc = x
    out = jnp.maximum(y + sc, 0.0)
    return jnp.transpose(out, (0, 3, 1, 2))


if __name__ == "__main__":
    key = jax.random.PRNGKey(0)
    kx, kp1, kp2 = jax.random.split(key, 3)

    # Case 1: projection shortcut (in_channels != expansion*zip), stride = 1.
    N, Cin, H, W = 2, 4, 16, 16
    zip_channels, stride = 4, 1
    x = jax.random.normal(kx, (N, Cin, H, W), jnp.float32)
    params = make_bottleneck_params(kp1, Cin, zip_channels, stride=stride)
    out = jax.block_until_ready(bottleneck_forward(x, params, stride=stride))
    ref = bottleneck_reference(x, params, stride=stride)
    assert out.shape == (N, EXPANSION * zip_channels, H // stride, W // stride)
    assert jnp.allclose(out, ref, atol=2e-3, rtol=2e-3), "mismatch (projection shortcut)"

    # Case 2: identity shortcut (in_channels == expansion*zip, stride = 1) —
    # exercises the path where no shortcut weights are passed / DMA'd.
    Cin2 = EXPANSION * zip_channels
    x2 = jax.random.normal(kx, (N, Cin2, H, W), jnp.float32)
    params2 = make_bottleneck_params(kp2, Cin2, zip_channels, stride=1)
    out2 = jax.block_until_ready(bottleneck_forward(x2, params2, stride=1))
    ref2 = bottleneck_reference(x2, params2, stride=1)
    assert out2.shape == (N, EXPANSION * zip_channels, H, W)
    assert jnp.allclose(out2, ref2, atol=2e-3, rtol=2e-3), "mismatch (identity shortcut)"

    print("KERNEL_OK")
</pallas_src>

<mosaic_0001>
module attributes {stable_mosaic.version = 11 : i64} {
  func.func @_bottleneck_kernel(%arg0: i32, %arg1: i32, %arg2: memref<1x16x16x128xf32, #tpu.memory_space<vmem>>, %arg3: memref<128x128xf32, #tpu.memory_space<vmem>>, %arg4: memref<1x128xf32, #tpu.memory_space<vmem>>, %arg5: memref<9x128x128xf32, #tpu.memory_space<vmem>>, %arg6: memref<1x128xf32, #tpu.memory_space<vmem>>, %arg7: memref<128x128xf32, #tpu.memory_space<vmem>>, %arg8: memref<1x128xf32, #tpu.memory_space<vmem>>, %arg9: memref<128x128xf32, #tpu.memory_space<vmem>>, %arg10: memref<1x8x16x128xf32, #tpu.memory_space<vmem>>, %arg11: memref<18x18x128xf32, #tpu.memory_space<vmem>>) attributes {dimension_semantics = [#tpu.dimension_semantics<parallel>, #tpu.dimension_semantics<arbitrary>], iteration_bounds = array<i64: 2, 2>, scalar_prefetch = 0 : i64, scratch_operands = 1 : i64, tpu.core_type = #tpu.core_type<tc>, window_params = [{transform_indices = @transform_0, window_bounds = array<i64: 1, 16, 16, 128>}, {pipeline_mode = #tpu.pipeline_mode<synchronous>, transform_indices = @transform_1, window_bounds = array<i64: 128, 128>}, {pipeline_mode = #tpu.pipeline_mode<synchronous>, transform_indices = @transform_2, window_bounds = array<i64: 1, 128>}, {pipeline_mode = #tpu.pipeline_mode<synchronous>, transform_indices = @transform_3, window_bounds = array<i64: 9, 128, 128>}, {pipeline_mode = #tpu.pipeline_mode<synchronous>, transform_indices = @transform_4, window_bounds = array<i64: 1, 128>}, {pipeline_mode = #tpu.pipeline_mode<synchronous>, transform_indices = @transform_5, window_bounds = array<i64: 128, 128>}, {pipeline_mode = #tpu.pipeline_mode<synchronous>, transform_indices = @transform_6, window_bounds = array<i64: 1, 128>}, {pipeline_mode = #tpu.pipeline_mode<synchronous>, transform_indices = @transform_7, window_bounds = array<i64: 128, 128>}, {transform_indices = @transform_8, window_bounds = array<i64: 1, 8, 16, 128>}]} {
    %c0_i32 = arith.constant 0 : i32
    %0 = arith.cmpi eq, %arg1, %c0_i32 : i32
    %1 = arith.extui %0 : i1 to i32
    %c0_i32_0 = arith.constant 0 : i32
    %2 = arith.cmpi ne, %1, %c0_i32_0 : i32
    scf.if %2 {
      %cst_72 = arith.constant 0.000000e+00 : f32
      %100 = vector.broadcast %cst_72 : f32 to vector<1x18x128xf32>
      %c0_73 = arith.constant 0 : index
      %c0_74 = arith.constant 0 : index
      %c0_75 = arith.constant 0 : index
      %101 = vector.load %arg11[%c0_73, %c0_74, %c0_75] : memref<18x18x128xf32, #tpu.memory_space<vmem>>, vector<1x18x128xf32>
      tpu.vector_store %arg11[%c0_73, %c0_74, %c0_75], %100 {strides = array<i32>} : memref<18x18x128xf32, #tpu.memory_space<vmem>>, vector<1x18x128xf32>,
      %c17 = arith.constant 17 : index
      %c0_76 = arith.constant 0 : index
      %c0_77 = arith.constant 0 : index
      %102 = vector.load %arg11[%c17, %c0_76, %c0_77] : memref<18x18x128xf32, #tpu.memory_space<vmem>>, vector<1x18x128xf32>
      tpu.vector_store %arg11[%c17, %c0_76, %c0_77], %100 {strides = array<i32>} : memref<18x18x128xf32, #tpu.memory_space<vmem>>, vector<1x18x128xf32>,
      %cst_78 = arith.constant 0.000000e+00 : f32
      %103 = vector.broadcast %cst_78 : f32 to vector<16x1x128xf32>
      %c1_79 = arith.constant 1 : index
      %c0_80 = arith.constant 0 : index
      %c0_81 = arith.constant 0 : index
      %104 = vector.load %arg11[%c1_79, %c0_80, %c0_81] : memref<18x18x128xf32, #tpu.memory_space<vmem>>, vector<16x1x128xf32>
      tpu.vector_store %arg11[%c1_79, %c0_80, %c0_81], %103 {strides = array<i32>} : memref<18x18x128xf32, #tpu.memory_space<vmem>>, vector<16x1x128xf32>,
      %c1_82 = arith.constant 1 : index
      %c17_83 = arith.constant 17 : index
      %c0_84 = arith.constant 0 : index
      %105 = vector.load %arg11[%c1_82, %c17_83, %c0_84] : memref<18x18x128xf32, #tpu.memory_space<vmem>>, vector<16x1x128xf32>
      tpu.vector_store %arg11[%c1_82, %c17_83, %c0_84], %103 {strides = array<i32>} : memref<18x18x128xf32, #tpu.memory_space<vmem>>, vector<16x1x128xf32>,
      %c0_85 = arith.constant 0 : index
      %c0_86 = arith.constant 0 : index
      %c0_87 = arith.constant 0 : index
      %c0_88 = arith.constant 0 : index
      %106 = vector.load %arg2[%c0_85, %c0_86, %c0_87, %c0_88] : memref<1x16x16x128xf32, #tpu.memory_space<vmem>>, vector<1x16x16x128xf32>
      %107 = vector.shape_cast %106 : vector<1x16x16x128xf32> to vector<16x16x128xf32>
      %108 = vector.shape_cast %107 : vector<16x16x128xf32> to vector<256x128xf32>
      %c0_89 = arith.constant 0 : index
      %c0_90 = arith.constant 0 : index
      %109 = vector.load %arg3[%c0_89, %c0_90] : memref<128x128xf32, #tpu.memory_space<vmem>>, vector<128x128xf32>
      %cst_91 = arith.constant dense<0.000000e+00> : vector<256x128xf32>
      %110 = tpu.matmul %108, %109, %cst_91 {dimension_numbers = #tpu.dot_dimension_numbers<[1], [0], [0], [1], [0, 0, 1, 1], [], []>} : vector<256x128xf32>, vector<128x128xf32>, vector<256x128xf32> -> vector<256x128xf32>
      %c0_92 = arith.constant 0 : index
      %c0_93 = arith.constant 0 : index
      %111 = vector.load %arg4[%c0_92, %c0_93] : memref<1x128xf32, #tpu.memory_space<vmem>>, vector<1x128xf32>
      %112 = vector.broadcast %111 : vector<1x128xf32> to vector<256x128xf32>
      %113 = arith.addf %110, %112 : vector<256x128xf32>
      %cst_94 = arith.constant 0.000000e+00 : f32
      %114 = vector.broadcast %cst_94 : f32 to vector<256x128xf32>
      %115 = arith.maximumf %113, %114 : vector<256x128xf32>
      %116 = vector.shape_cast %115 : vector<256x128xf32> to vector<16x16x128xf32>
      %c1_95 = arith.constant 1 : index
      %c1_96 = arith.constant 1 : index
      %c0_97 = arith.constant 0 : index
      %117 = vector.load %arg11[%c1_95, %c1_96, %c0_97] : memref<18x18x128xf32, #tpu.memory_space<vmem>>, vector<16x16x128xf32>
      tpu.vector_store %arg11[%c1_95, %c1_96, %c0_97], %116 {strides = array<i32>} : memref<18x18x128xf32, #tpu.memory_space<vmem>>, vector<16x16x128xf32>,
    } else {
    }
    %c8_i32 = arith.constant 8 : i32
    %3 = arith.muli %arg1, %c8_i32 : i32
    %c1_i32 = arith.constant 1 : i32
    %4 = arith.muli %3, %c1_i32 : i32
    %5 = tpu.assume_multiple %4, 8 : i32
    %c0_i32_1 = arith.constant 0 : i32
    %6 = arith.addi %5, %c0_i32_1 : i32
    %7 = arith.index_cast %6 : i32 to index
    %c0 = arith.constant 0 : index
    %c0_2 = arith.constant 0 : index
    %8 = vector.load %arg11[%7, %c0, %c0_2] : memref<18x18x128xf32, #tpu.memory_space<vmem>>, vector<8x16x128xf32>
    %9 = vector.shape_cast %8 : vector<8x16x128xf32> to vector<128x128xf32>
    %c0_3 = arith.constant 0 : index
    %c0_4 = arith.constant 0 : index
    %c0_5 = arith.constant 0 : index
    %10 = vector.load %arg5[%c0_3, %c0_4, %c0_5] : memref<9x128x128xf32, #tpu.memory_space<vmem>>, vector<1x128x128xf32>
    %11 = vector.shape_cast %10 : vector<1x128x128xf32> to vector<128x128xf32>
    %cst = arith.constant dense<0.000000e+00> : vector<128x128xf32>
    %12 = tpu.matmul %9, %11, %cst {dimension_numbers = #tpu.dot_dimension_numbers<[1], [0], [0], [1], [0, 0, 1, 1], [], []>} : vector<128x128xf32>, vector<128x128xf32>, vector<128x128xf32> -> vector<128x128xf32>
    %c0_i32_6 = arith.constant 0 : i32
    %13 = arith.addi %5, %c0_i32_6 : i32
    %14 = arith.index_cast %13 : i32 to index
    %c1 = arith.constant 1 : index
    %c0_7 = arith.constant 0 : index
    %15 = vector.load %arg11[%14, %c1, %c0_7] : memref<18x18x128xf32, #tpu.memory_space<vmem>>, vector<8x16x128xf32>
    %16 = vector.shape_cast %15 : vector<8x16x128xf32> to vector<128x128xf32>
    %c1_8 = arith.constant 1 : index
    %c0_9 = arith.constant 0 : index
    %c0_10 = arith.constant 0 : index
    %17 = vector.load %arg5[%c1_8, %c0_9, %c0_10] : memref<9x128x128xf32, #tpu.memory_space<vmem>>, vector<1x128x128xf32>
    %18 = vector.shape_cast %17 : vector<1x128x128xf32> to vector<128x128xf32>
    %cst_11 = arith.constant dense<0.000000e+00> : vector<128x128xf32>
    %19 = tpu.matmul %16, %18, %cst_11 {dimension_numbers = #tpu.dot_dimension_numbers<[1], [0], [0], [1], [0, 0, 1, 1], [], []>} : vector<128x128xf32>, vector<128x128xf32>, vector<128x128xf32> -> vector<128x128xf32>
    %20 = arith.addf %12, %19 : vector<128x128xf32>
    %c0_i32_12 = arith.constant 0 : i32
    %21 = arith.addi %5, %c0_i32_12 : i32
    %22 = arith.index_cast %21 : i32 to index
    %c2 = arith.constant 2 : index
    %c0_13 = arith.constant 0 : index
    %23 = vector.load %arg11[%22, %c2, %c0_13] : memref<18x18x128xf32, #tpu.memory_space<vmem>>, vector<8x16x128xf32>
    %24 = vector.shape_cast %23 : vector<8x16x128xf32> to vector<128x128xf32>
    %c2_14 = arith.constant 2 : index
    %c0_15 = arith.constant 0 : index
    %c0_16 = arith.constant 0 : index
    %25 = vector.load %arg5[%c2_14, %c0_15, %c0_16] : memref<9x128x128xf32, #tpu.memory_space<vmem>>, vector<1x128x128xf32>
    %26 = vector.shape_cast %25 : vector<1x128x128xf32> to vector<128x128xf32>
    %cst_17 = arith.constant dense<0.000000e+00> : vector<128x128xf32>
    %27 = tpu.matmul %24, %26, %cst_17 {dimension_numbers = #tpu.dot_dimension_numbers<[1], [0], [0], [1], [0, 0, 1, 1], [], []>} : vector<128x128xf32>, vector<128x128xf32>, vector<128x128xf32> -> vector<128x128xf32>
    %28 = arith.addf %20, %27 : vector<128x128xf32>
    %c1_i32_18 = arith.constant 1 : i32
    %29 = arith.addi %5, %c1_i32_18 : i32
    %30 = arith.index_cast %29 : i32 to index
    %c0_19 = arith.constant 0 : index
    %c0_20 = arith.constant 0 : index
    %31 = vector.load %arg11[%30, %c0_19, %c0_20] : memref<18x18x128xf32, #tpu.memory_space<vmem>>, vector<8x16x128xf32>
    %32 = vector.shape_cast %31 : vector<8x16x128xf32> to vector<128x128xf32>
    %c3 = arith.constant 3 : index
    %c0_21 = arith.constant 0 : index
    %c0_22 = arith.constant 0 : index
    %33 = vector.load %arg5[%c3, %c0_21, %c0_22] : memref<9x128x128xf32, #tpu.memory_space<vmem>>, vector<1x128x128xf32>
    %34 = vector.shape_cast %33 : vector<1x128x128xf32> to vector<128x128xf32>
    %cst_23 = arith.constant dense<0.000000e+00> : vector<128x128xf32>
    %35 = tpu.matmul %32, %34, %cst_23 {dimension_numbers = #tpu.dot_dimension_numbers<[1], [0], [0], [1], [0, 0, 1, 1], [], []>} : vector<128x128xf32>, vector<128x128xf32>, vector<128x128xf32> -> vector<128x128xf32>
    %36 = arith.addf %28, %35 : vector<128x128xf32>
    %c1_i32_24 = arith.constant 1 : i32
    %37 = arith.addi %5, %c1_i32_24 : i32
    %38 = arith.index_cast %37 : i32 to index
    %c1_25 = arith.constant 1 : index
    %c0_26 = arith.constant 0 : index
    %39 = vector.load %arg11[%38, %c1_25, %c0_26] : memref<18x18x128xf32, #tpu.memory_space<vmem>>, vector<8x16x128xf32>
    %40 = vector.shape_cast %39 : vector<8x16x128xf32> to vector<128x128xf32>
    %c4 = arith.constant 4 : index
    %c0_27 = arith.constant 0 : index
    %c0_28 = arith.constant 0 : index
    %41 = vector.load %arg5[%c4, %c0_27, %c0_28] : memref<9x128x128xf32, #tpu.memory_space<vmem>>, vector<1x128x128xf32>
    %42 = vector.shape_cast %41 : vector<1x128x128xf32> to vector<128x128xf32>
    %cst_29 = arith.constant dense<0.000000e+00> : vector<128x128xf32>
    %43 = tpu.matmul %40, %42, %cst_29 {dimension_numbers = #tpu.dot_dimension_numbers<[1], [0], [0], [1], [0, 0, 1, 1], [], []>} : vector<128x128xf32>, vector<128x128xf32>, vector<128x128xf32> -> vector<128x128xf32>
    %44 = arith.addf %36, %43 : vector<128x128xf32>
    %c1_i32_30 = arith.constant 1 : i32
    %45 = arith.addi %5, %c1_i32_30 : i32
    %46 = arith.index_cast %45 : i32 to index
    %c2_31 = arith.constant 2 : index
    %c0_32 = arith.constant 0 : index
    %47 = vector.load %arg11[%46, %c2_31, %c0_32] : memref<18x18x128xf32, #tpu.memory_space<vmem>>, vector<8x16x128xf32>
    %48 = vector.shape_cast %47 : vector<8x16x128xf32> to vector<128x128xf32>
    %c5 = arith.constant 5 : index
    %c0_33 = arith.constant 0 : index
    %c0_34 = arith.constant 0 : index
    %49 = vector.load %arg5[%c5, %c0_33, %c0_34] : memref<9x128x128xf32, #tpu.memory_space<vmem>>, vector<1x128x128xf32>
    %50 = vector.shape_cast %49 : vector<1x128x128xf32> to vector<128x128xf32>
    %cst_35 = arith.constant dense<0.000000e+00> : vector<128x128xf32>
    %51 = tpu.matmul %48, %50, %cst_35 {dimension_numbers = #tpu.dot_dimension_numbers<[1], [0], [0], [1], [0, 0, 1, 1], [], []>} : vector<128x128xf32>, vector<128x128xf32>, vector<128x128xf32> -> vector<128x128xf32>
    %52 = arith.addf %44, %51 : vector<128x128xf32>
    %c2_i32 = arith.constant 2 : i32
    %53 = arith.addi %5, %c2_i32 : i32
    %54 = arith.index_cast %53 : i32 to index
    %c0_36 = arith.constant 0 : index
    %c0_37 = arith.constant 0 : index
    %55 = vector.load %arg11[%54, %c0_36, %c0_37] : memref<18x18x128xf32, #tpu.memory_space<vmem>>, vector<8x16x128xf32>
    %56 = vector.shape_cast %55 : vector<8x16x128xf32> to vector<128x128xf32>
    %c6 = arith.constant 6 : index
    %c0_38 = arith.constant 0 : index
    %c0_39 = arith.constant 0 : index
    %57 = vector.load %arg5[%c6, %c0_38, %c0_39] : memref<9x128x128xf32, #tpu.memory_space<vmem>>, vector<1x128x128xf32>
    %58 = vector.shape_cast %57 : vector<1x128x128xf32> to vector<128x128xf32>
    %cst_40 = arith.constant dense<0.000000e+00> : vector<128x128xf32>
    %59 = tpu.matmul %56, %58, %cst_40 {dimension_numbers = #tpu.dot_dimension_numbers<[1], [0], [0], [1], [0, 0, 1, 1], [], []>} : vector<128x128xf32>, vector<128x128xf32>, vector<128x128xf32> -> vector<128x128xf32>
    %60 = arith.addf %52, %59 : vector<128x128xf32>
    %c2_i32_41 = arith.constant 2 : i32
    %61 = arith.addi %5, %c2_i32_41 : i32
    %62 = arith.index_cast %61 : i32 to index
    %c1_42 = arith.constant 1 : index
    %c0_43 = arith.constant 0 : index
    %63 = vector.load %arg11[%62, %c1_42, %c0_43] : memref<18x18x128xf32, #tpu.memory_space<vmem>>, vector<8x16x128xf32>
    %64 = vector.shape_cast %63 : vector<8x16x128xf32> to vector<128x128xf32>
    %c7 = arith.constant 7 : index
    %c0_44 = arith.constant 0 : index
    %c0_45 = arith.constant 0 : index
    %65 = vector.load %arg5[%c7, %c0_44, %c0_45] : memref<9x128x128xf32, #tpu.memory_space<vmem>>, vector<1x128x128xf32>
    %66 = vector.shape_cast %65 : vector<1x128x128xf32> to vector<128x128xf32>
    %cst_46 = arith.constant dense<0.000000e+00> : vector<128x128xf32>
    %67 = tpu.matmul %64, %66, %cst_46 {dimension_numbers = #tpu.dot_dimension_numbers<[1], [0], [0], [1], [0, 0, 1, 1], [], []>} : vector<128x128xf32>, vector<128x128xf32>, vector<128x128xf32> -> vector<128x128xf32>
    %68 = arith.addf %60, %67 : vector<128x128xf32>
    %c2_i32_47 = arith.constant 2 : i32
    %69 = arith.addi %5, %c2_i32_47 : i32
    %70 = arith.index_cast %69 : i32 to index
    %c2_48 = arith.constant 2 : index
    %c0_49 = arith.constant 0 : index
    %71 = vector.load %arg11[%70, %c2_48, %c0_49] : memref<18x18x128xf32, #tpu.memory_space<vmem>>, vector<8x16x128xf32>
    %72 = vector.shape_cast %71 : vector<8x16x128xf32> to vector<128x128xf32>
    %c8 = arith.constant 8 : index
    %c0_50 = arith.constant 0 : index
    %c0_51 = arith.constant 0 : index
    %73 = vector.load %arg5[%c8, %c0_50, %c0_51] : memref<9x128x128xf32, #tpu.memory_space<vmem>>, vector<1x128x128xf32>
    %74 = vector.shape_cast %73 : vector<1x128x128xf32> to vector<128x128xf32>
    %cst_52 = arith.constant dense<0.000000e+00> : vector<128x128xf32>
    %75 = tpu.matmul %72, %74, %cst_52 {dimension_numbers = #tpu.dot_dimension_numbers<[1], [0], [0], [1], [0, 0, 1, 1], [], []>} : vector<128x128xf32>, vector<128x128xf32>, vector<128x128xf32> -> vector<128x128xf32>
    %76 = arith.addf %68, %75 : vector<128x128xf32>
    %c0_53 = arith.constant 0 : index
    %c0_54 = arith.constant 0 : index
    %77 = vector.load %arg6[%c0_53, %c0_54] : memref<1x128xf32, #tpu.memory_space<vmem>>, vector<1x128xf32>
    %78 = vector.broadcast %77 : vector<1x128xf32> to vector<128x128xf32>
    %79 = arith.addf %76, %78 : vector<128x128xf32>
    %cst_55 = arith.constant 0.000000e+00 : f32
    %80 = vector.broadcast %cst_55 : f32 to vector<128x128xf32>
    %81 = arith.maximumf %79, %80 : vector<128x128xf32>
    %c0_56 = arith.constant 0 : index
    %c0_57 = arith.constant 0 : index
    %82 = vector.load %arg7[%c0_56, %c0_57] : memref<128x128xf32, #tpu.memory_space<vmem>>, vector<128x128xf32>
    %cst_58 = arith.constant dense<0.000000e+00> : vector<128x128xf32>
    %83 = tpu.matmul %81, %82, %cst_58 {dimension_numbers = #tpu.dot_dimension_numbers<[1], [0], [0], [1], [0, 0, 1, 1], [], []>} : vector<128x128xf32>, vector<128x128xf32>, vector<128x128xf32> -> vector<128x128xf32>
    %c0_59 = arith.constant 0 : index
    %c0_60 = arith.constant 0 : index
    %84 = vector.load %arg8[%c0_59, %c0_60] : memref<1x128xf32, #tpu.memory_space<vmem>>, vector<1x128xf32>
    %85 = vector.broadcast %84 : vector<1x128xf32> to vector<128x128xf32>
    %86 = arith.addf %83, %85 : vector<128x128xf32>
    %c0_61 = arith.constant 0 : index
    %87 = arith.index_cast %5 : i32 to index
    %c0_62 = arith.constant 0 : index
    %c0_63 = arith.constant 0 : index
    %88 = vector.load %arg2[%c0_61, %87, %c0_62, %c0_63] : memref<1x16x16x128xf32, #tpu.memory_space<vmem>>, vector<1x8x16x128xf32>
    %89 = vector.shape_cast %88 : vector<1x8x16x128xf32> to vector<8x16x128xf32>
    %90 = vector.shape_cast %89 : vector<8x16x128xf32> to vector<128x128xf32>
    %c0_64 = arith.constant 0 : index
    %c0_65 = arith.constant 0 : index
    %91 = vector.load %arg9[%c0_64, %c0_65] : memref<128x128xf32, #tpu.memory_space<vmem>>, vector<128x128xf32>
    %cst_66 = arith.constant dense<0.000000e+00> : vector<128x128xf32>
    %92 = tpu.matmul %90, %91, %cst_66 {dimension_numbers = #tpu.dot_dimension_numbers<[1], [0], [0], [1], [0, 0, 1, 1], [], []>} : vector<128x128xf32>, vector<128x128xf32>, vector<128x128xf32> -> vector<128x128xf32>
    %93 = arith.addf %86, %92 : vector<128x128xf32>
    %cst_67 = arith.constant 0.000000e+00 : f32
    %94 = vector.broadcast %cst_67 : f32 to vector<128x128xf32>
    %95 = arith.maximumf %93, %94 : vector<128x128xf32>
    %96 = vector.shape_cast %95 : vector<128x128xf32> to vector<8x16x128xf32>
    %c0_68 = arith.constant 0 : index
    %c0_69 = arith.constant 0 : index
    %c0_70 = arith.constant 0 : index
    %c0_71 = arith.constant 0 : index
    %97 = vector.load %arg10[%c0_68, %c0_69, %c0_70, %c0_71] : memref<1x8x16x128xf32, #tpu.memory_space<vmem>>, vector<1x8x16x128xf32>
    %98 = vector.shape_cast %97 : vector<1x8x16x128xf32> to vector<8x16x128xf32>
    %99 = vector.shape_cast %96 : vector<8x16x128xf32> to vector<1x8x16x128xf32>
    tpu.vector_store %arg10[%c0_68, %c0_69, %c0_70, %c0_71], %99 {strides = array<i32>} : memref<1x8x16x128xf32, #tpu.memory_space<vmem>>, vector<1x8x16x128xf32>,
    return
  }
  func.func @transform_0(%arg0: i32, %arg1: i32) -> (i32, i32, i32, i32) {
    %c0_i32 = arith.constant 0 : i32
    %c0_i32_0 = arith.constant 0 : i32
    %c0_i32_1 = arith.constant 0 : i32
    %c0_i32_2 = arith.constant 0 : i32
    return %arg0, %c0_i32, %c0_i32_0, %c0_i32_1 : i32, i32, i32, i32
  }
  func.func @transform_1(%arg0: i32, %arg1: i32) -> (i32, i32) {
    %c0_i32 = arith.constant 0 : i32
    %c0_i32_0 = arith.constant 0 : i32
    %c0_i32_1 = arith.constant 0 : i32
    return %c0_i32, %c0_i32_0 : i32, i32
  }
  func.func @transform_2(%arg0: i32, %arg1: i32) -> (i32, i32) {
    %c0_i32 = arith.constant 0 : i32
    %c0_i32_0 = arith.constant 0 : i32
    %c0_i32_1 = arith.constant 0 : i32
    return %c0_i32, %c0_i32_0 : i32, i32
  }
  func.func @transform_3(%arg0: i32, %arg1: i32) -> (i32, i32, i32) {
    %c0_i32 = arith.constant 0 : i32
    %c0_i32_0 = arith.constant 0 : i32
    %c0_i32_1 = arith.constant 0 : i32
    %c0_i32_2 = arith.constant 0 : i32
    return %c0_i32, %c0_i32_0, %c0_i32_1 : i32, i32, i32
  }
  func.func @transform_4(%arg0: i32, %arg1: i32) -> (i32, i32) {
    %c0_i32 = arith.constant 0 : i32
    %c0_i32_0 = arith.constant 0 : i32
    %c0_i32_1 = arith.constant 0 : i32
    return %c0_i32, %c0_i32_0 : i32, i32
  }
  func.func @transform_5(%arg0: i32, %arg1: i32) -> (i32, i32) {
    %c0_i32 = arith.constant 0 : i32
    %c0_i32_0 = arith.constant 0 : i32
    %c0_i32_1 = arith.constant 0 : i32
    return %c0_i32, %c0_i32_0 : i32, i32
  }
  func.func @transform_6(%arg0: i32, %arg1: i32) -> (i32, i32) {
    %c0_i32 = arith.constant 0 : i32
    %c0_i32_0 = arith.constant 0 : i32
    %c0_i32_1 = arith.constant 0 : i32
    return %c0_i32, %c0_i32_0 : i32, i32
  }
  func.func @transform_7(%arg0: i32, %arg1: i32) -> (i32, i32) {
    %c0_i32 = arith.constant 0 : i32
    %c0_i32_0 = arith.constant 0 : i32
    %c0_i32_1 = arith.constant 0 : i32
    return %c0_i32, %c0_i32_0 : i32, i32
  }
  func.func @transform_8(%arg0: i32, %arg1: i32) -> (i32, i32, i32, i32) {
    %c0_i32 = arith.constant 0 : i32
    %c0_i32_0 = arith.constant 0 : i32
    %c0_i32_1 = arith.constant 0 : i32
    return %arg0, %arg1, %c0_i32, %c0_i32_0 : i32, i32, i32, i32
  }
}

</mosaic_0001>

<llo_original>
// kernel: tpu_custom_call.1
$region0: #{tpu_custom_call.1}
  #allocation0 [shape = 'u32[]', space=smem, size = 0x4, offset = 0x4, fixed_abs, tag = 'smem constant byte address 0x4 - core index']
  #allocation1 [shape = 'u32[144,128]{1,0:T(1,128)}', space=vmem, size = 0x12000, scoped, tag = 'internal scratch']
  #allocation2 [shape = 'f32[18,18,128]{2,1,0:T(8,128)}', space=vmem, size = 0x36000, scoped, tag = 'scratch operand']
  %s0 = inlined_call_operand.hbm [shape: f32[2,16,16,128], index: 0, kind: input, shape index: {}]
  %s1 = inlined_call_operand.hbm [shape: f32[128,128], index: 1, kind: input, shape index: {}]
  %s2 = inlined_call_operand.vmem [shape: f32[1,128], index: 2, kind: input, shape index: {}]
  %s3 = inlined_call_operand.hbm [shape: f32[9,128,128], index: 3, kind: input, shape index: {}]
  %s4 = inlined_call_operand.vmem [shape: f32[1,128], index: 4, kind: input, shape index: {}]
  %s5 = inlined_call_operand.hbm [shape: f32[128,128], index: 5, kind: input, shape index: {}]
  %s6 = inlined_call_operand.vmem [shape: f32[1,128], index: 6, kind: input, shape index: {}]
  %s7 = inlined_call_operand.hbm [shape: f32[128,128], index: 7, kind: input, shape index: {}]
  %s8 = inlined_call_operand.hbm [shape: f32[2,16,16,128], index: 8, kind: output, shape index: {}]
  %s9 = sld [smem:[#allocation0]]
  $region89: #{tpu_custom_call.1} parent=0
    _
  %s11 = ssub.s32 1, %s9
  %s12 = scalar_select 0, %s11, %s9
  $region1: #{tpu_custom_call.1} parent=0
    #allocation3 [shape = 'u8[262144]{0}', space=vmem, size = 0x40000, scoped, tag = 'input window, operand 0']
    #allocation4 [shape = 's32[2]{0}', space=sflag, size = 0x8, scoped, tag = 'scoped memory for tpu_custom_call.1']
    #allocation5 [shape = 's32[2]{0}', space=sflag, size = 0x8, scoped, tag = 'scoped memory for tpu_custom_call.1']
    #allocation6 [shape = 'u8[65536]{0}', space=vmem, size = 0x10000, scoped, tag = 'input window, operand 1, single buffered']
    #allocation7 [shape = 's32[1]{0}', space=sflag, size = 0x4, scoped, tag = 'scoped memory for tpu_custom_call.1']
    #allocation8 [shape = 'u8[589824]{0}', space=vmem, size = 0x90000, scoped, tag = 'input window, operand 3, single buffered']
    #allocation9 [shape = 'u8[65536]{0}', space=vmem, size = 0x10000, scoped, tag = 'input window, operand 5, single buffered']
    #allocation10 [shape = 's32[1]{0}', space=sflag, size = 0x4, scoped, tag = 'scoped memory for tpu_custom_call.1']
    #allocation11 [shape = 'u8[65536]{0}', space=vmem, size = 0x10000, scoped, tag = 'input window, operand 7, single buffered']
    #allocation12 [shape = 'u8[131072]{0}', space=vmem, size = 0x20000, scoped, tag = 'output window, operand 0']
    %13 = vsyncpa [#allocation4], 0
    %s14 = scalar_lea.sflag [#allocation4], 1
    %15 = vsyncpa %s14, 0
    %16 = vsyncpa [#allocation7], 0
    %17 = vsyncpa [#allocation10], 0
    %18 = vsyncpa [#allocation5], 0
    %s19 = scalar_lea.sflag [#allocation5], 1
    %20 = vsyncpa %s19, 0
    loop: start=0, step=1, limit=6
    $region2: #{tpu_custom_call.1} parent=1 // loop_pre_header
      _
    $region3: #{tpu_custom_call.1} parent=1 // loop_header
      %s22 = sphi 0, %s26
      %p23 = scmp.ge.s32.totalorder %s22, 6
      %s29 = sphi 0, %s41
      %s30 = sphi 0, %s37
      %s31 = sphi 0, %s29
      %s32 = sphi 0, %s30
      %s33 = sphi 0, %s31
      %s34 = sphi 0, %s32
      %s44 = sphi 0, %s46
      %s47 = sphi 0, %s44
      %s48 = sphi 0, %s47
      %s64 = sphi 0, %s48
      %s68 = sphi 0, %s68
      %s70 = sphi 0, %s68
      %s71 = sphi 0, %s70
      %s85 = sphi 0, %s71
      %s89 = sphi 0, %s89
      %s91 = sphi 0, %s89
      %s92 = sphi 0, %s91
      %s106 = sphi 0, %s92
      %s110 = sphi 0, %s110
      %s112 = sphi 0, %s110
      %s113 = sphi 0, %s112
      %s127 = sphi 0, %s113
      %s131 = sphi 0, %s131
      %s133 = sphi 0, %s131
      %s134 = sphi 0, %s133
      %s148 = sphi 0, %s134
      %s152 = sphi 0, %s152
      %s154 = sphi 0, %s152
      %s155 = sphi 0, %s154
      %s169 = sphi 0, %s155
      %s173 = sphi 0, %s173
      %s175 = sphi 0, %s173
      %s176 = sphi 0, %s175
      %s190 = sphi 0, %s176
      %s194 = sphi 0, %s194
      %s196 = sphi 0, %s194
      %s197 = sphi 0, %s196
      %s211 = sphi 0, %s197
      %s219 = sphi 0, %s221
      %s222 = sphi 0, %s219
      %s223 = sphi 0, %s222
      %s239 = sphi 0, %s223
    $region4: #{tpu_custom_call.1} parent=1 // loop_header_branch
      %25 = sbr.rel (%p23) target = $region8
    $region5: #{tpu_custom_call.1} parent=1 // loop_body
      %s27 = ssub.s32 %s22, 1
      %s28 = ssub.s32 %s22, 2
      %s35 = sadd.s32 1, %s30
      %p36 = scmp.ge.s32.totalorder %s35, 2
      %s37 = scalar_select %p36, 0, %s35
      %s38 = sadd.s32 1, %s29
      %s39 = scalar_select %p36, %s38, %s29
      %p40 = scmp.ge.s32.totalorder %s39, 2
      %s41 = scalar_select %p40, 0, %s39
      %s42 = ssub.s32 %s29, %s41
      %p43 = scmp.eq.s32.totalorder %s42, 0
      %s45 = sadd.s32 %s44, 1
      %s46 = scalar_select %p43, %s44, %s45
      %p49 = pneg %p43
      %p50 = scmp.eq.s32.totalorder %s22, 3
      %p51 = por %p49, %p50
      %p52 = scmp.ne.s32.totalorder %s44, %s47
      %p53 = scmp.eq.s32.totalorder %s22, 0
      %p54 = por %p52, %p53
      %p55 = scmp.ne.s32.totalorder %s44, %s47
      %p56 = scmp.eq.s32.totalorder %s27, 3
      %p57 = por %p55, %p56
      %p58 = scmp.ne.s32.totalorder %s47, %s48
      %p59 = scmp.eq.s32.totalorder %s27, 0
      %p60 = por %p58, %p59
      %p61 = scmp.ne.s32.totalorder %s47, %s48
      %p62 = scmp.eq.s32.totalorder %s28, 3
      %p63 = por %p61, %p62
      %p65 = scmp.ne.s32.totalorder %s48, %s64
      %p66 = scmp.eq.s32.totalorder %s28, 0
      %p67 = por %p65, %p66
      %s69 = sadd.s32 %s68, 1
      %p72 = scmp.eq.s32.totalorder %s22, 3
      %p73 = scmp.ne.s32.totalorder %s68, %s70
      %p74 = scmp.eq.s32.totalorder %s22, 0
      %p75 = por %p73, %p74
      %p76 = scmp.ne.s32.totalorder %s68, %s70
      %p77 = scmp.eq.s32.totalorder %s27, 3
      %p78 = por %p76, %p77
      %p79 = scmp.ne.s32.totalorder %s70, %s71
      %p80 = scmp.eq.s32.totalorder %s27, 0
      %p81 = por %p79, %p80
      %p82 = scmp.ne.s32.totalorder %s70, %s71
      %p83 = scmp.eq.s32.totalorder %s28, 3
      %p84 = por %p82, %p83
      %p86 = scmp.ne.s32.totalorder %s71, %s85
      %p87 = scmp.eq.s32.totalorder %s28, 0
      %p88 = por %p86, %p87
      %s90 = sadd.s32 %s89, 1
      %p93 = scmp.eq.s32.totalorder %s22, 3
      %p94 = scmp.ne.s32.totalorder %s89, %s91
      %p95 = scmp.eq.s32.totalorder %s22, 0
      %p96 = por %p94, %p95
      %p97 = scmp.ne.s32.totalorder %s89, %s91
      %p98 = scmp.eq.s32.totalorder %s27, 3
      %p99 = por %p97, %p98
      %p100 = scmp.ne.s32.totalorder %s91, %s92
      %p101 = scmp.eq.s32.totalorder %s27, 0
      %p102 = por %p100, %p101
      %p103 = scmp.ne.s32.totalorder %s91, %s92
      %p104 = scmp.eq.s32.totalorder %s28, 3
      %p105 = por %p103, %p104
      %p107 = scmp.ne.s32.totalorder %s92, %s106
      %p108 = scmp.eq.s32.totalorder %s28, 0
      %p109 = por %p107, %p108
      %s111 = sadd.s32 %s110, 1
      %p114 = scmp.eq.s32.totalorder %s22, 3
      %p115 = scmp.ne.s32.totalorder %s110, %s112
      %p116 = scmp.eq.s32.totalorder %s22, 0
      %p117 = por %p115, %p116
      %p118 = scmp.ne.s32.totalorder %s110, %s112
      %p119 = scmp.eq.s32.totalorder %s27, 3
      %p120 = por %p118, %p119
      %p121 = scmp.ne.s32.totalorder %s112, %s113
      %p122 = scmp.eq.s32.totalorder %s27, 0
      %p123 = por %p121, %p122
      %p124 = scmp.ne.s32.totalorder %s112, %s113
      %p125 = scmp.eq.s32.totalorder %s28, 3
      %p126 = por %p124, %p125
      %p128 = scmp.ne.s32.totalorder %s113, %s127
      %p129 = scmp.eq.s32.totalorder %s28, 0
      %p130 = por %p128, %p129
      %s132 = sadd.s32 %s131, 1
      %p135 = scmp.eq.s32.totalorder %s22, 3
      %p136 = scmp.ne.s32.totalorder %s131, %s133
      %p137 = scmp.eq.s32.totalorder %s22, 0
      %p138 = por %p136, %p137
      %p139 = scmp.ne.s32.totalorder %s131, %s133
      %p140 = scmp.eq.s32.totalorder %s27, 3
      %p141 = por %p139, %p140
      %p142 = scmp.ne.s32.totalorder %s133, %s134
      %p143 = scmp.eq.s32.totalorder %s27, 0
      %p144 = por %p142, %p143
      %p145 = scmp.ne.s32.totalorder %s133, %s134
      %p146 = scmp.eq.s32.totalorder %s28, 3
      %p147 = por %p145, %p146
      %p149 = scmp.ne.s32.totalorder %s134, %s148
      %p150 = scmp.eq.s32.totalorder %s28, 0
      %p151 = por %p149, %p150
      %s153 = sadd.s32 %s152, 1
      %p156 = scmp.eq.s32.totalorder %s22, 3
      %p157 = scmp.ne.s32.totalorder %s152, %s154
      %p158 = scmp.eq.s32.totalorder %s22, 0
      %p159 = por %p157, %p158
      %p160 = scmp.ne.s32.totalorder %s152, %s154
      %p161 = scmp.eq.s32.totalorder %s27, 3
      %p162 = por %p160, %p161
      %p163 = scmp.ne.s32.totalorder %s154, %s155
      %p164 = scmp.eq.s32.totalorder %s27, 0
      %p165 = por %p163, %p164
      %p166 = scmp.ne.s32.totalorder %s154, %s155
      %p167 = scmp.eq.s32.totalorder %s28, 3
      %p168 = por %p166, %p167
      %p170 = scmp.ne.s32.totalorder %s155, %s169
      %p171 = scmp.eq.s32.totalorder %s28, 0
      %p172 = por %p170, %p171
      %s174 = sadd.s32 %s173, 1
      %p177 = scmp.eq.s32.totalorder %s22, 3
      %p178 = scmp.ne.s32.totalorder %s173, %s175
      %p179 = scmp.eq.s32.totalorder %s22, 0
      %p180 = por %p178, %p179
      %p181 = scmp.ne.s32.totalorder %s173, %s175
      %p182 = scmp.eq.s32.totalorder %s27, 3
      %p183 = por %p181, %p182
      %p184 = scmp.ne.s32.totalorder %s175, %s176
      %p185 = scmp.eq.s32.totalorder %s27, 0
      %p186 = por %p184, %p185
      %p187 = scmp.ne.s32.totalorder %s175, %s176
      %p188 = scmp.eq.s32.totalorder %s28, 3
      %p189 = por %p187, %p188
      %p191 = scmp.ne.s32.totalorder %s176, %s190
      %p192 = scmp.eq.s32.totalorder %s28, 0
      %p193 = por %p191, %p192
      %s195 = sadd.s32 %s194, 1
      %p198 = scmp.eq.s32.totalorder %s22, 3
      %p199 = scmp.ne.s32.totalorder %s194, %s196
      %p200 = scmp.eq.s32.totalorder %s22, 0
      %p201 = por %p199, %p200
      %p202 = scmp.ne.s32.totalorder %s194, %s196
      %p203 = scmp.eq.s32.totalorder %s27, 3
      %p204 = por %p202, %p203
      %p205 = scmp.ne.s32.totalorder %s196, %s197
      %p206 = scmp.eq.s32.totalorder %s27, 0
      %p207 = por %p205, %p206
      %p208 = scmp.ne.s32.totalorder %s196, %s197
      %p209 = scmp.eq.s32.totalorder %s28, 3
      %p210 = por %p208, %p209
      %p212 = scmp.ne.s32.totalorder %s197, %s211
      %p213 = scmp.eq.s32.totalorder %s28, 0
      %p214 = por %p212, %p213
      %s215 = ssub.s32 %s29, %s41
      %s216 = ssub.s32 %s30, %s37
      %s217 = sor.u32 %s215, %s216
      %p218 = scmp.eq.s32.totalorder %s217, 0
      %s220 = sadd.s32 %s219, 1
      %s221 = scalar_select %p218, %s219, %s220
      %p224 = pneg %p218
      %p225 = scmp.eq.s32.totalorder %s22, 3
      %p226 = por %p224, %p225
      %p227 = scmp.ne.s32.totalorder %s219, %s222
      %p228 = scmp.eq.s32.totalorder %s22, 0
      %p229 = por %p227, %p228
      %p230 = scmp.ne.s32.totalorder %s219, %s222
      %p231 = scmp.eq.s32.totalorder %s27, 3
      %p232 = por %p230, %p231
      %p233 = scmp.ne.s32.totalorder %s222, %s223
      %p234 = scmp.eq.s32.totalorder %s27, 0
      %p235 = por %p233, %p234
      %p236 = scmp.ne.s32.totalorder %s222, %s223
      %p237 = scmp.eq.s32.totalorder %s28, 3
      %p238 = por %p236, %p237
      %p240 = scmp.ne.s32.totalorder %s223, %s239
      %p241 = scmp.eq.s32.totalorder %s28, 0
      %p242 = por %p240, %p241
      %p243 = scmp.le.s32.totalorder 1, %s22
      %p244 = scmp.lt.s32.totalorder %s22, 5
      %p245 = pnand %p243, %p244
      %p246 = pneg %p245
      // Predicated region
      $region9: #{tpu_custom_call.1} parent=5 // pred_check
        _
      $region10: #{tpu_custom_call.1} parent=5 // pred_check_branch
        %248 = sbr.rel (%p245) target = $region12
      $region11: #{tpu_custom_call.1} parent=5 // pred_region
        %s249 = ssub.s32 %s22, 1
        // Predicated region
        $region13: #{tpu_custom_call.1} parent=11 // pred_check
          %p250 = pneg %p81
        $region14: #{tpu_custom_call.1} parent=11 // pred_check_branch
          %252 = sbr.rel (%p250) target = $region16
        $region15: #{tpu_custom_call.1} parent=11 // pred_region
          %s254 = ssub.s32 2048, 2048
          %255 = vsyncadd [#allocation7], %s254
          %s256 = sshll.u32 [#allocation6], 4
          %s257 = int_to_ptr.vmem [resolvable:$true] %s256
          %262 = dma.hbm_to_vmem [thread:$0]  %s1, 2048, %s257, [#allocation7], 128, 128, 8
        $region16: #{tpu_custom_call.1} parent=11 // pred_fallthru
          _
        // Predicated region
        $region17: #{tpu_custom_call.1} parent=11 // pred_check
          %p263 = pneg %p102
        $region18: #{tpu_custom_call.1} parent=11 // pred_check_branch
          %265 = sbr.rel (%p263) target = $region20
        $region19: #{tpu_custom_call.1} parent=11 // pred_region
          _
        $region20: #{tpu_custom_call.1} parent=11 // pred_fallthru
          _
        // Predicated region
        $region21: #{tpu_custom_call.1} parent=11 // pred_check
          %p266 = pneg %p123
        $region22: #{tpu_custom_call.1} parent=11 // pred_check_branch
          %268 = sbr.rel (%p266) target = $region24
        $region23: #{tpu_custom_call.1} parent=11 // pred_region
          %s270 = ssub.s32 18432, 18432
          %271 = vsyncadd [#allocation7], %s270
          %s272 = sshll.u32 [#allocation8], 4
          %s273 = int_to_ptr.vmem [resolvable:$true] %s272
          %278 = dma.hbm_to_vmem [thread:$0]  %s3, 18432, %s273, [#allocation7], 128, 128, 8
        $region24: #{tpu_custom_call.1} parent=11 // pred_fallthru
          _
        // Predicated region
        $region25: #{tpu_custom_call.1} parent=11 // pred_check
          %p279 = pneg %p144
        $region26: #{tpu_custom_call.1} parent=11 // pred_check_branch
          %281 = sbr.rel (%p279) target = $region28
        $region27: #{tpu_custom_call.1} parent=11 // pred_region
          _
        $region28: #{tpu_custom_call.1} parent=11 // pred_fallthru
          _
        // Predicated region
        $region29: #{tpu_custom_call.1} parent=11 // pred_check
          %p282 = pneg %p165
        $region30: #{tpu_custom_call.1} parent=11 // pred_check_branch
          %284 = sbr.rel (%p282) target = $region32
        $region31: #{tpu_custom_call.1} parent=11 // pred_region
          %s286 = ssub.s32 2048, 2048
          %287 = vsyncadd [#allocation10], %s286
          %s288 = sshll.u32 [#allocation9], 4
          %s289 = int_to_ptr.vmem [resolvable:$true] %s288
          %294 = dma.hbm_to_vmem [thread:$0]  %s5, 2048, %s289, [#allocation10], 128, 128, 8
        $region32: #{tpu_custom_call.1} parent=11 // pred_fallthru
          _
        // Predicated region
        $region33: #{tpu_custom_call.1} parent=11 // pred_check
          %p295 = pneg %p186
        $region34: #{tpu_custom_call.1} parent=11 // pred_check_branch
          %297 = sbr.rel (%p295) target = $region36
        $region35: #{tpu_custom_call.1} parent=11 // pred_region
          _
        $region36: #{tpu_custom_call.1} parent=11 // pred_fallthru
          _
        // Predicated region
        $region37: #{tpu_custom_call.1} parent=11 // pred_check
          %p298 = pneg %p207
        $region38: #{tpu_custom_call.1} parent=11 // pred_check_branch
          %300 = sbr.rel (%p298) target = $region40
        $region39: #{tpu_custom_call.1} parent=11 // pred_region
          %s302 = ssub.s32 2048, 2048
          %303 = vsyncadd [#allocation10], %s302
          %s304 = sshll.u32 [#allocation11], 4
          %s305 = int_to_ptr.vmem [resolvable:$true] %s304
          %310 = dma.hbm_to_vmem [thread:$0]  %s7, 2048, %s305, [#allocation10], 128, 128, 8
        $region40: #{tpu_custom_call.1} parent=11 // pred_fallthru
          _
      $region12: #{tpu_custom_call.1} parent=5 // pred_fallthru
        _
      %p311 = scmp.lt.s32.totalorder %s22, 4
      // Predicated region
      $region41: #{tpu_custom_call.1} parent=5 // pred_check
        %p312 = pneg %p311
      $region42: #{tpu_custom_call.1} parent=5 // pred_check_branch
        %314 = sbr.rel (%p312) target = $region44
      $region43: #{tpu_custom_call.1} parent=5 // pred_region
        // Predicated region
        $region45: #{tpu_custom_call.1} parent=43 // pred_check
          %p315 = pneg %p54
        $region46: #{tpu_custom_call.1} parent=43 // pred_check_branch
          %317 = sbr.rel (%p315) target = $region48
        $region47: #{tpu_custom_call.1} parent=43 // pred_region
          %s318 = sand.u32 %s44, 1
          %s319 = scalar_lea.sflag [#allocation4], %s318
          %s320 = sand.u32 %s44, 1
          %s321 = smul.addr %s320, 256
          %s322 = scalar_lea.vmem [#allocation3], %s321
          %s324 = ssub.s32 4096, 4096
          %325 = vsyncadd %s319, %s324
          %s326 = smul.addr %s29, 32
          %s327 = smul.addr %s326, 128
          %s328 = scalar_lea.hbm %s0, %s327
          %s329 = sshll.u32 %s322, 4
          %s330 = int_to_ptr.vmem [resolvable:$true] %s329
          %335 = dma.hbm_to_vmem [thread:$0]  %s328, 4096, %s330, %s319, 128, 128, 8
        $region48: #{tpu_custom_call.1} parent=43 // pred_fallthru
          _
      $region44: #{tpu_custom_call.1} parent=5 // pred_fallthru
        _
      %p336 = scmp.le.s32.totalorder 1, %s22
      %p337 = scmp.lt.s32.totalorder %s22, 5
      %p338 = pnand %p336, %p337
      %p339 = pneg %p338
      // Predicated region
      $region49: #{tpu_custom_call.1} parent=5 // pred_check
        _
      $region50: #{tpu_custom_call.1} parent=5 // pred_check_branch
        %341 = sbr.rel (%p338) target = $region52
      $region51: #{tpu_custom_call.1} parent=5 // pred_region
        %s342 = ssub.s32 %s22, 1
        %s343 = sand.u32 %s47, 1
        %s344 = scalar_lea.sflag [#allocation4], %s343
        %s345 = sand.u32 %s47, 1
        %s346 = smul.addr %s345, 256
        %s347 = scalar_lea.vmem [#allocation3], %s346
        // Predicated region
        $region53: #{tpu_custom_call.1} parent=51 // pred_check
          %p348 = pneg %p60
        $region54: #{tpu_custom_call.1} parent=51 // pred_check_branch
          %350 = sbr.rel (%p348) target = $region56
        $region55: #{tpu_custom_call.1} parent=51 // pred_region
          %351 = dma.done %s344, 4096
        $region56: #{tpu_custom_call.1} parent=51 // pred_fallthru
          _
        // Predicated region
        $region57: #{tpu_custom_call.1} parent=51 // pred_check
          %p352 = pneg %p81
        $region58: #{tpu_custom_call.1} parent=51 // pred_check_branch
          %354 = sbr.rel (%p352) target = $region60
        $region59: #{tpu_custom_call.1} parent=51 // pred_region
          %355 = dma.done [#allocation7], 2048
        $region60: #{tpu_custom_call.1} parent=51 // pred_fallthru
          _
        // Predicated region
        $region61: #{tpu_custom_call.1} parent=51 // pred_check
          %p356 = pneg %p123
        $region62: #{tpu_custom_call.1} parent=51 // pred_check_branch
          %358 = sbr.rel (%p356) target = $region64
        $region63: #{tpu_custom_call.1} parent=51 // pred_region
          %359 = dma.done [#allocation7], 18432
        $region64: #{tpu_custom_call.1} parent=51 // pred_fallthru
          _
        // Predicated region
        $region65: #{tpu_custom_call.1} parent=51 // pred_check
          %p360 = pneg %p165
        $region66: #{tpu_custom_call.1} parent=51 // pred_check_branch
          %362 = sbr.rel (%p360) target = $region68
        $region67: #{tpu_custom_call.1} parent=51 // pred_region
          %363 = dma.done [#allocation10], 2048
        $region68: #{tpu_custom_call.1} parent=51 // pred_fallthru
          _
        // Predicated region
        $region69: #{tpu_custom_call.1} parent=51 // pred_check
          %p364 = pneg %p207
        $region70: #{tpu_custom_call.1} parent=51 // pred_check_branch
          %366 = sbr.rel (%p364) target = $region72
        $region71: #{tpu_custom_call.1} parent=51 // pred_region
          %367 = dma.done [#allocation10], 2048
        $region72: #{tpu_custom_call.1} parent=51 // pred_fallthru
          _
        %s368 = sand.u32 %s47, 1
        %s369 = scalar_lea.sflag [#allocation4], %s368
        %s370 = sand.u32 %s47, 1
        %s371 = smul.addr %s370, 256
        %s372 = scalar_lea.vmem [#allocation3], %s371
        %p373 = pneg %p60
        %p374 = pneg %p57
        %p375 = pneg %p81
        %p376 = pneg %p78
        %p377 = pneg %p102
        %p378 = pneg %p99
        %p379 = pneg %p123
        %p380 = pneg %p120
        %p381 = pneg %p144
        %p382 = pneg %p141
        %p383 = pneg %p165
        %p384 = pneg %p162
        %p385 = pneg %p186
        %p386 = pneg %p183
        %p387 = pneg %p207
        %p388 = pneg %p204
        %p389 = pneg %p235
        %p390 = pneg %p232
        %s391 = sand.u32 %s222, 1
        %s392 = scalar_lea.sflag [#allocation5], %s391
        %s393 = sand.u32 %s222, 1
        %s394 = smul.addr %s393, 128
        %s395 = scalar_lea.vmem [#allocation12], %s394
        %s396 = smul.u32 8, %s32
        %p397 = scmp.eq.s32.totalorder %s32, 0
        // Predicated region
        $region73: #{tpu_custom_call.1} parent=51 // pred_check
          %p398 = pneg %p397
        $region74: #{tpu_custom_call.1} parent=51 // pred_check_branch
          %400 = sbr.rel (%p398) target = $region76
        $region75: #{tpu_custom_call.1} parent=51 // pred_region
          %401 = vst [vmem:[#allocation2] sm:$0xff] 0.0
          %402 = vst [vmem:[#allocation2 + $0x8] sm:$0xff] 0.0
          %403 = vst [vmem:[#allocation2 + $0x10] sm:$0x3] 0.0
          %s404 = scalar_lea.vmem [#allocation2], 408
          %405 = vst [vmem:[%s404] sm:$0xff] 0.0
          %406 = vst [vmem:[%s404 + $0x8] sm:$0xff] 0.0
          %407 = vst [vmem:[%s404 + $0x10] sm:$0x3] 0.0
          %s408 = scalar_lea.vmem [#allocation2], 24
          %409 = vst [vmem:[%s408] sm:$0x1] 0.0
          %410 = vst [vmem:[%s408 + $0x18] sm:$0x1] 0.0
          %411 = vst [vmem:[%s408 + $0x30] sm:$0x1] 0.0
          %412 = vst [vmem:[%s408 + $0x48] sm:$0x1] 0.0
          %413 = vst [vmem:[%s408 + $0x60] sm:$0x1] 0.0
          %414 = vst [vmem:[%s408 + $0x78] sm:$0x1] 0.0
          %415 = vst [vmem:[%s408 + $0x90] sm:$0x1] 0.0
          %416 = vst [vmem:[%s408 + $0xa8] sm:$0x1] 0.0
          %417 = vst [vmem:[%s408 + $0xc0] sm:$0x1] 0.0
          %418 = vst [vmem:[%s408 + $0xd8] sm:$0x1] 0.0
          %419 = vst [vmem:[%s408 + $0xf0] sm:$0x1] 0.0
          %420 = vst [vmem:[%s408 + $0x108] sm:$0x1] 0.0
          %421 = vst [vmem:[%s408 + $0x120] sm:$0x1] 0.0
          %422 = vst [vmem:[%s408 + $0x138] sm:$0x1] 0.0
          %423 = vst [vmem:[%s408 + $0x150] sm:$0x1] 0.0
          %424 = vst [vmem:[%s408 + $0x168] sm:$0x1] 0.0
          %425 = vst [vmem:[%s408 + $0x11] sm:$0x1] 0.0
          %426 = vst [vmem:[%s408 + $0x29] sm:$0x1] 0.0
          %427 = vst [vmem:[%s408 + $0x41] sm:$0x1] 0.0
          %428 = vst [vmem:[%s408 + $0x59] sm:$0x1] 0.0
          %429 = vst [vmem:[%s408 + $0x71] sm:$0x1] 0.0
          %430 = vst [vmem:[%s408 + $0x89] sm:$0x1] 0.0
          %431 = vst [vmem:[%s408 + $0xa1] sm:$0x1] 0.0
          %432 = vst [vmem:[%s408 + $0xb9] sm:$0x1] 0.0
          %433 = vst [vmem:[%s408 + $0xd1] sm:$0x1] 0.0
          %434 = vst [vmem:[%s408 + $0xe9] sm:$0x1] 0.0
          %435 = vst [vmem:[%s408 + $0x101] sm:$0x1] 0.0
          %436 = vst [vmem:[%s408 + $0x119] sm:$0x1] 0.0
          %437 = vst [vmem:[%s408 + $0x131] sm:$0x1] 0.0
          %438 = vst [vmem:[%s408 + $0x149] sm:$0x1] 0.0
          %439 = vst [vmem:[%s408 + $0x161] sm:$0x1] 0.0
          %440 = vst [vmem:[%s408 + $0x179] sm:$0x1] 0.0
          %v441 = vld [vmem:[%s347] sm:$0xff]
          %v442 = vld [vmem:[%s347 + $0x8] sm:$0xff]
          %v443 = vld [vmem:[%s347 + $0x10] sm:$0xff]
          %v444 = vld [vmem:[%s347 + $0x18] sm:$0xff]
          %v445 = vld [vmem:[%s347 + $0x20] sm:$0xff]
          %v446 = vld [vmem:[%s347 + $0x28] sm:$0xff]
          %v447 = vld [vmem:[%s347 + $0x30] sm:$0xff]
          %v448 = vld [vmem:[%s347 + $0x38] sm:$0xff]
          %v449 = vld [vmem:[%s347 + $0x40] sm:$0xff]
          %v450 = vld [vmem:[%s347 + $0x48] sm:$0xff]
          %v451 = vld [vmem:[%s347 + $0x50] sm:$0xff]
          %v452 = vld [vmem:[%s347 + $0x58] sm:$0xff]
          %v453 = vld [vmem:[%s347 + $0x60] sm:$0xff]
          %v454 = vld [vmem:[%s347 + $0x68] sm:$0xff]
          %v455 = vld [vmem:[%s347 + $0x70] sm:$0xff]
          %v456 = vld [vmem:[%s347 + $0x78] sm:$0xff]
          %v457 = vld [vmem:[%s347 + $0x80] sm:$0xff]
          %v458 = vld [vmem:[%s347 + $0x88] sm:$0xff]
          %v459 = vld [vmem:[%s347 + $0x90] sm:$0xff]
          %v460 = vld [vmem:[%s347 + $0x98] sm:$0xff]
          %v461 = vld [vmem:[%s347 + $0xa0] sm:$0xff]
          %v462 = vld [vmem:[%s347 + $0xa8] sm:$0xff]
          %v463 = vld [vmem:[%s347 + $0xb0] sm:$0xff]
          %v464 = vld [vmem:[%s347 + $0xb8] sm:$0xff]
          %v465 = vld [vmem:[%s347 + $0xc0] sm:$0xff]
          %v466 = vld [vmem:[%s347 + $0xc8] sm:$0xff]
          %v467 = vld [vmem:[%s347 + $0xd0] sm:$0xff]
          %v468 = vld [vmem:[%s347 + $0xd8] sm:$0xff]
          %v469 = vld [vmem:[%s347 + $0xe0] sm:$0xff]
          %v470 = vld [vmem:[%s347 + $0xe8] sm:$0xff]
          %v471 = vld [vmem:[%s347 + $0xf0] sm:$0xff]
          %v472 = vld [vmem:[%s347 + $0xf8] sm:$0xff]
          %v473 = vld [vmem:[#allocation6] sm:$0xff]
          %v474 = vld [vmem:[#allocation6 + $0x8] sm:$0xff]
          %v475 = vld [vmem:[#allocation6 + $0x10] sm:$0xff]
          %v476 = vld [vmem:[#allocation6 + $0x18] sm:$0xff]
          %v477 = vld [vmem:[#allocation6 + $0x20] sm:$0xff]
          %v478 = vld [vmem:[#allocation6 + $0x28] sm:$0xff]
          %v479 = vld [vmem:[#allocation6 + $0x30] sm:$0xff]
          %v480 = vld [vmem:[#allocation6 + $0x38] sm:$0xff]
          %v481 = vld [vmem:[#allocation6 + $0x40] sm:$0xff]
          %v482 = vld [vmem:[#allocation6 + $0x48] sm:$0xff]
          %v483 = vld [vmem:[#allocation6 + $0x50] sm:$0xff]
          %v484 = vld [vmem:[#allocation6 + $0x58] sm:$0xff]
          %v485 = vld [vmem:[#allocation6 + $0x60] sm:$0xff]
          %v486 = vld [vmem:[#allocation6 + $0x68] sm:$0xff]
          %v487 = vld [vmem:[#allocation6 + $0x70] sm:$0xff]
          %v488 = vld [vmem:[#allocation6 + $0x78] sm:$0xff]
          %v489 = vld [vmem:[%s2] sm:$0x1]
          %v491 = vlaneseq
          %v492 = vshrl.u32 %v491, 7
          %v493 = vsub.s32 0, %v492
          %v494 = vrot.slane %v489, %v493
          %496 = vmatprep.subr.mxu0 0.0
          %497 = vmatpush1.msra.mxu0 %v473
          %498 = vmatprep.subr.mxu0 0.0
          %499 = vmatpush1.msra.mxu0 %v474
          %500 = vmatprep.subr.mxu0 0.0
          %501 = vmatpush1.msra.mxu0 %v475
          %502 = vmatprep.subr.mxu0 0.0
          %503 = vmatpush1.msra.mxu0 %v476
          %504 = vmatprep.subr.mxu0 0.0
          %505 = vmatpush1.msra.mxu0 %v477
          %506 = vmatprep.subr.mxu0 0.0
          %507 = vmatpush1.msra.mxu0 %v478
          %508 = vmatprep.subr.mxu0 0.0
          %509 = vmatpush1.msra.mxu0 %v479
          %510 = vmatprep.subr.mxu0 0.0
          %511 = vmatpush1.msra.mxu0 %v480
          %512 = vmatprep.subr.mxu0 0.0
          %513 = vmatpush1.msra.mxu0 %v481
          %514 = vmatprep.subr.mxu0 0.0
          %515 = vmatpush1.msra.mxu0 %v482
          %516 = vmatprep.subr.mxu0 0.0
          %517 = vmatpush1.msra.mxu0 %v483
          %518 = vmatprep.subr.mxu0 0.0
          %519 = vmatpush1.msra.mxu0 %v484
          %520 = vmatprep.subr.mxu0 0.0
          %521 = vmatpush1.msra.mxu0 %v485
          %522 = vmatprep.subr.mxu0 0.0
          %523 = vmatpush1.msra.mxu0 %v486
          %524 = vmatprep.subr.mxu0 0.0
          %525 = vmatpush1.msra.mxu0 %v487
          %526 = vmatprep.subr.mxu0 0.0
          %527 = vmatpush1.msra.mxu0 %v488
          %528 = vmatprep.subr.mxu0 0.0
          %529 = vmatpush1.msra.mxu0 0.0
          %530 = vmatprep.subr.mxu0 0.0
          %531 = vmatpush1.msra.mxu0 0.0
          %532 = vmatprep.subr.mxu0 0.0
          %533 = vmatpush1.msra.mxu0 0.0
          %534 = vmatprep.subr.mxu0 0.0
          %535 = vmatpush1.msra.mxu0 0.0
          %536 = vmatprep.subr.mxu0 0.0
          %537 = vmatpush1.msra.mxu0 0.0
          %538 = vmatprep.subr.mxu0 0.0
          %539 = vmatpush1.msra.mxu0 0.0
          %540 = vmatprep.subr.mxu0 0.0
          %541 = vmatpush1.msra.mxu0 0.0
          %542 = vmatprep.subr.mxu0 0.0
          %543 = vmatpush1.msra.mxu0 0.0
          %544 = vmatprep.subr.mxu0 0.0
          %545 = vmatpush1.msra.mxu0 0.0
          %546 = vmatprep.subr.mxu0 0.0
          %547 = vmatpush1.msra.mxu0 0.0
          %548 = vmatprep.subr.mxu0 0.0
          %549 = vmatpush1.msra.mxu0 0.0
          %550 = vmatprep.subr.mxu0 0.0
          %551 = vmatpush1.msra.mxu0 0.0
          %552 = vmatprep.subr.mxu0 0.0
          %553 = vmatpush1.msra.mxu0 0.0
          %554 = vmatprep.subr.mxu0 0.0
          %555 = vmatpush1.msra.mxu0 0.0
          %556 = vmatprep.subr.mxu0 0.0
          %557 = vmatpush1.msra.mxu0 0.0
          %558 = vmatprep.subr.mxu0 0.0
          %559 = vmatpush1.msra.mxu0 0.0
          %560 = vmatprep.mubr.f32.mxu0 0.0
          %561 = vmatmul.mubr.f32.gmra.mrb[0].mxu0 %v441
          %v562 = vpop.f32.mrb[0].mxu0
          %v563 = vadd.f32 %v494, %v562
          %v564 = vpop.f32.mrb[0].mxu0
          %565 = vmatprep.mubr.f32.mxu0 0.0
          %566 = vmatmul.mubr.f32.gmra.mrb[0].mxu0 %v442
          %v567 = vpop.f32.mrb[0].mxu0
          %v568 = vadd.f32 %v494, %v567
          %v569 = vpop.f32.mrb[0].mxu0
          %570 = vmatprep.mubr.f32.mxu0 0.0
          %571 = vmatmul.mubr.f32.gmra.mrb[0].mxu0 %v443
          %v572 = vpop.f32.mrb[0].mxu0
          %v573 = vadd.f32 %v494, %v572
          %v574 = vpop.f32.mrb[0].mxu0
          %575 = vmatprep.mubr.f32.mxu0 0.0
          %576 = vmatmul.mubr.f32.gmra.mrb[0].mxu0 %v444
          %v577 = vpop.f32.mrb[0].mxu0
          %v578 = vadd.f32 %v494, %v577
          %v579 = vpop.f32.mrb[0].mxu0
          %580 = vmatprep.mubr.f32.mxu0 0.0
          %581 = vmatmul.mubr.f32.gmra.mrb[0].mxu0 %v445
          %v582 = vpop.f32.mrb[0].mxu0
          %v583 = vadd.f32 %v494, %v582
          %v584 = vpop.f32.mrb[0].mxu0
          %585 = vmatprep.mubr.f32.mxu0 0.0
          %586 = vmatmul.mubr.f32.gmra.mrb[0].mxu0 %v446
          %v587 = vpop.f32.mrb[0].mxu0
          %v588 = vadd.f32 %v494, %v587
          %v589 = vpop.f32.mrb[0].mxu0
          %590 = vmatprep.mubr.f32.mxu0 0.0
          %591 = vmatmul.mubr.f32.gmra.mrb[0].mxu0 %v447
          %v592 = vpop.f32.mrb[0].mxu0
          %v593 = vadd.f32 %v494, %v592
          %v594 = vpop.f32.mrb[0].mxu0
          %595 = vmatprep.mubr.f32.mxu0 0.0
          %596 = vmatmul.mubr.f32.gmra.mrb[0].mxu0 %v448
          %v597 = vpop.f32.mrb[0].mxu0
          %v598 = vadd.f32 %v494, %v597
          %v599 = vpop.f32.mrb[0].mxu0
          %600 = vmatprep.mubr.f32.mxu0 0.0
          %601 = vmatmul.mubr.f32.gmra.mrb[0].mxu0 %v449
          %v602 = vpop.f32.mrb[0].mxu0
          %v603 = vadd.f32 %v494, %v602
          %v604 = vpop.f32.mrb[0].mxu0
          %605 = vmatprep.mubr.f32.mxu0 0.0
          %606 = vmatmul.mubr.f32.gmra.mrb[0].mxu0 %v450
          %v607 = vpop.f32.mrb[0].mxu0
          %v608 = vadd.f32 %v494, %v607
          %v609 = vpop.f32.mrb[0].mxu0
          %610 = vmatprep.mubr.f32.mxu0 0.0
          %611 = vmatmul.mubr.f32.gmra.mrb[0].mxu0 %v451
          %v612 = vpop.f32.mrb[0].mxu0
          %v613 = vadd.f32 %v494, %v612
          %v614 = vpop.f32.mrb[0].mxu0
          %615 = vmatprep.mubr.f32.mxu0 0.0
          %616 = vmatmul.mubr.f32.gmra.mrb[0].mxu0 %v452
          %v617 = vpop.f32.mrb[0].mxu0
          %v618 = vadd.f32 %v494, %v617
          %v619 = vpop.f32.mrb[0].mxu0
          %620 = vmatprep.mubr.f32.mxu0 0.0
          %621 = vmatmul.mubr.f32.gmra.mrb[0].mxu0 %v453
          %v622 = vpop.f32.mrb[0].mxu0
          %v623 = vadd.f32 %v494, %v622
          %v624 = vpop.f32.mrb[0].mxu0
          %625 = vmatprep.mubr.f32.mxu0 0.0
          %626 = vmatmul.mubr.f32.gmra.mrb[0].mxu0 %v454
          %v627 = vpop.f32.mrb[0].mxu0
          %v628 = vadd.f32 %v494, %v627
          %v629 = vpop.f32.mrb[0].mxu0
          %630 = vmatprep.mubr.f32.mxu0 0.0
          %631 = vmatmul.mubr.f32.gmra.mrb[0].mxu0 %v455
          %v632 = vpop.f32.mrb[0].mxu0
          %v633 = vadd.f32 %v494, %v632
          %v634 = vpop.f32.mrb[0].mxu0
          %635 = vmatprep.mubr.f32.mxu0 0.0
          %636 = vmatmul.mubr.f32.gmra.mrb[0].mxu0 %v456
          %v637 = vpop.f32.mrb[0].mxu0
          %v638 = vadd.f32 %v494, %v637
          %v639 = vpop.f32.mrb[0].mxu0
          %640 = vmatprep.mubr.f32.mxu0 0.0
          %641 = vmatmul.mubr.f32.gmra.mrb[0].mxu0 %v457
          %v642 = vpop.f32.mrb[0].mxu0
          %v643 = vadd.f32 %v494, %v642
          %v644 = vpop.f32.mrb[0].mxu0
          %645 = vmatprep.mubr.f32.mxu0 0.0
          %646 = vmatmul.mubr.f32.gmra.mrb[0].mxu0 %v458
          %v647 = vpop.f32.mrb[0].mxu0
          %v648 = vadd.f32 %v494, %v647
          %v649 = vpop.f32.mrb[0].mxu0
          %650 = vmatprep.mubr.f32.mxu0 0.0
          %651 = vmatmul.mubr.f32.gmra.mrb[0].mxu0 %v459
          %v652 = vpop.f32.mrb[0].mxu0
          %v653 = vadd.f32 %v494, %v652
          %v654 = vpop.f32.mrb[0].mxu0
          %655 = vmatprep.mubr.f32.mxu0 0.0
          %656 = vmatmul.mubr.f32.gmra.mrb[0].mxu0 %v460
          %v657 = vpop.f32.mrb[0].mxu0
          %v658 = vadd.f32 %v494, %v657
          %v659 = vpop.f32.mrb[0].mxu0
          %660 = vmatprep.mubr.f32.mxu0 0.0
          %661 = vmatmul.mubr.f32.gmra.mrb[0].mxu0 %v461
          %v662 = vpop.f32.mrb[0].mxu0
          %v663 = vadd.f32 %v494, %v662
          %v664 = vpop.f32.mrb[0].mxu0
          %665 = vmatprep.mubr.f32.mxu0 0.0
          %666 = vmatmul.mubr.f32.gmra.mrb[0].mxu0 %v462
          %v667 = vpop.f32.mrb[0].mxu0
          %v668 = vadd.f32 %v494, %v667
          %v669 = vpop.f32.mrb[0].mxu0
          %670 = vmatprep.mubr.f32.mxu0 0.0
          %671 = vmatmul.mubr.f32.gmra.mrb[0].mxu0 %v463
          %v672 = vpop.f32.mrb[0].mxu0
          %v673 = vadd.f32 %v494, %v672
          %v674 = vpop.f32.mrb[0].mxu0
          %675 = vmatprep.mubr.f32.mxu0 0.0
          %676 = vmatmul.mubr.f32.gmra.mrb[0].mxu0 %v464
          %v677 = vpop.f32.mrb[0].mxu0
          %v678 = vadd.f32 %v494, %v677
          %v679 = vpop.f32.mrb[0].mxu0
          %680 = vmatprep.mubr.f32.mxu0 0.0
          %681 = vmatmul.mubr.f32.gmra.mrb[0].mxu0 %v465
          %v682 = vpop.f32.mrb[0].mxu0
          %v683 = vadd.f32 %v494, %v682
          %v684 = vpop.f32.mrb[0].mxu0
          %685 = vmatprep.mubr.f32.mxu0 0.0
          %686 = vmatmul.mubr.f32.gmra.mrb[0].mxu0 %v466
          %v687 = vpop.f32.mrb[0].mxu0
          %v688 = vadd.f32 %v494, %v687
          %v689 = vpop.f32.mrb[0].mxu0
          %690 = vmatprep.mubr.f32.mxu0 0.0
          %691 = vmatmul.mubr.f32.gmra.mrb[0].mxu0 %v467
          %v692 = vpop.f32.mrb[0].mxu0
          %v693 = vadd.f32 %v494, %v692
          %v694 = vpop.f32.mrb[0].mxu0
          %695 = vmatprep.mubr.f32.mxu0 0.0
          %696 = vmatmul.mubr.f32.gmra.mrb[0].mxu0 %v468
          %v697 = vpop.f32.mrb[0].mxu0
          %v698 = vadd.f32 %v494, %v697
          %v699 = vpop.f32.mrb[0].mxu0
          %700 = vmatprep.mubr.f32.mxu0 0.0
          %701 = vmatmul.mubr.f32.gmra.mrb[0].mxu0 %v469
          %v702 = vpop.f32.mrb[0].mxu0
          %v703 = vadd.f32 %v494, %v702
          %v704 = vpop.f32.mrb[0].mxu0
          %705 = vmatprep.mubr.f32.mxu0 0.0
          %706 = vmatmul.mubr.f32.gmra.mrb[0].mxu0 %v470
          %v707 = vpop.f32.mrb[0].mxu0
          %v708 = vadd.f32 %v494, %v707
          %v709 = vpop.f32.mrb[0].mxu0
          %710 = vmatprep.mubr.f32.mxu0 0.0
          %711 = vmatmul.mubr.f32.gmra.mrb[0].mxu0 %v471
          %v712 = vpop.f32.mrb[0].mxu0
          %v713 = vadd.f32 %v494, %v712
          %v714 = vpop.f32.mrb[0].mxu0
          %715 = vmatprep.mubr.f32.mxu0 0.0
          %716 = vmatmul.mubr.f32.gmra.mrb[0].mxu0 %v472
          %v717 = vpop.f32.mrb[0].mxu0
          %v718 = vadd.f32 %v494, %v717
          %v719 = vpop.f32.mrb[0].mxu0
          %720 = vdwg.mxu0
          %v721 = vmax.f32 %v563, 0.0
          %v722 = vmax.f32 %v568, 0.0
          %v723 = vmax.f32 %v573, 0.0
          %v724 = vmax.f32 %v578, 0.0
          %v725 = vmax.f32 %v583, 0.0
          %v726 = vmax.f32 %v588, 0.0
          %v727 = vmax.f32 %v593, 0.0
          %v728 = vmax.f32 %v598, 0.0
          %v729 = vmax.f32 %v603, 0.0
          %v730 = vmax.f32 %v608, 0.0
          %v731 = vmax.f32 %v613, 0.0
          %v732 = vmax.f32 %v618, 0.0
          %v733 = vmax.f32 %v623, 0.0
          %v734 = vmax.f32 %v628, 0.0
          %v735 = vmax.f32 %v633, 0.0
          %v736 = vmax.f32 %v638, 0.0
          %v737 = vmax.f32 %v643, 0.0
          %v738 = vmax.f32 %v648, 0.0
          %v739 = vmax.f32 %v653, 0.0
          %v740 = vmax.f32 %v658, 0.0
          %v741 = vmax.f32 %v663, 0.0
          %v742 = vmax.f32 %v668, 0.0
          %v743 = vmax.f32 %v673, 0.0
          %v744 = vmax.f32 %v678, 0.0
          %v745 = vmax.f32 %v683, 0.0
          %v746 = vmax.f32 %v688, 0.0
          %v747 = vmax.f32 %v693, 0.0
          %v748 = vmax.f32 %v698, 0.0
          %v749 = vmax.f32 %v703, 0.0
          %v750 = vmax.f32 %v708, 0.0
          %v751 = vmax.f32 %v713, 0.0
          %v752 = vmax.f32 %v718, 0.0
          %753 = vst [vmem:[%s408 + $0x1] sm:$0xff] %v721
          %754 = vst [vmem:[%s408 + $0x9] sm:$0xff] %v722
          %755 = vst [vmem:[%s408 + $0x19] sm:$0xff] %v723
          %756 = vst [vmem:[%s408 + $0x21] sm:$0xff] %v724
          %757 = vst [vmem:[%s408 + $0x31] sm:$0xff] %v725
          %758 = vst [vmem:[%s408 + $0x39] sm:$0xff] %v726
          %759 = vst [vmem:[%s408 + $0x49] sm:$0xff] %v727
          %760 = vst [vmem:[%s408 + $0x51] sm:$0xff] %v728
          %761 = vst [vmem:[%s408 + $0x61] sm:$0xff] %v729
          %762 = vst [vmem:[%s408 + $0x69] sm:$0xff] %v730
          %763 = vst [vmem:[%s408 + $0x79] sm:$0xff] %v731
          %764 = vst [vmem:[%s408 + $0x81] sm:$0xff] %v732
          %765 = vst [vmem:[%s408 + $0x91] sm:$0xff] %v733
          %766 = vst [vmem:[%s408 + $0x99] sm:$0xff] %v734
          %767 = vst [vmem:[%s408 + $0xa9] sm:$0xff] %v735
          %768 = vst [vmem:[%s408 + $0xb1] sm:$0xff] %v736
          %769 = vst [vmem:[%s408 + $0xc1] sm:$0xff] %v737
          %770 = vst [vmem:[%s408 + $0xc9] sm:$0xff] %v738
          %771 = vst [vmem:[%s408 + $0xd9] sm:$0xff] %v739
          %772 = vst [vmem:[%s408 + $0xe1] sm:$0xff] %v740
          %773 = vst [vmem:[%s408 + $0xf1] sm:$0xff] %v741
          %774 = vst [vmem:[%s408 + $0xf9] sm:$0xff] %v742
          %775 = vst [vmem:[%s408 + $0x109] sm:$0xff] %v743
          %776 = vst [vmem:[%s408 + $0x111] sm:$0xff] %v744
          %777 = vst [vmem:[%s408 + $0x121] sm:$0xff] %v745
          %778 = vst [vmem:[%s408 + $0x129] sm:$0xff] %v746
          %779 = vst [vmem:[%s408 + $0x139] sm:$0xff] %v747
          %780 = vst [vmem:[%s408 + $0x141] sm:$0xff] %v748
          %781 = vst [vmem:[%s408 + $0x151] sm:$0xff] %v749
          %782 = vst [vmem:[%s408 + $0x159] sm:$0xff] %v750
          %783 = vst [vmem:[%s408 + $0x169] sm:$0xff] %v751
          %784 = vst [vmem:[%s408 + $0x171] sm:$0xff] %v752
        $region76: #{tpu_custom_call.1} parent=51 // pred_fallthru
          _
        %s785 = smul.u32 %s32, 8
        %s786 = smul.u32 %s785, 24
        %s787 = scalar_lea.vmem [#allocation2], %s786
        %v788 = vld [vmem:[%s787] sm:$0xff]
        %v789 = vld [vmem:[%s787 + $0x8] sm:$0xff]
        %v790 = vld [vmem:[%s787 + $0x18] sm:$0xff]
        %v791 = vld [vmem:[%s787 + $0x20] sm:$0xff]
        %v792 = vld [vmem:[%s787 + $0x30] sm:$0xff]
        %v793 = vld [vmem:[%s787 + $0x38] sm:$0xff]
        %v794 = vld [vmem:[%s787 + $0x48] sm:$0xff]
        %v795 = vld [vmem:[%s787 + $0x50] sm:$0xff]
        %v796 = vld [vmem:[%s787 + $0x60] sm:$0xff]
        %v797 = vld [vmem:[%s787 + $0x68] sm:$0xff]
        %v798 = vld [vmem:[%s787 + $0x78] sm:$0xff]
        %v799 = vld [vmem:[%s787 + $0x80] sm:$0xff]
        %v800 = vld [vmem:[%s787 + $0x90] sm:$0xff]
        %v801 = vld [vmem:[%s787 + $0x98] sm:$0xff]
        %v802 = vld [vmem:[%s787 + $0xa8] sm:$0xff]
        %v803 = vld [vmem:[%s787 + $0xb0] sm:$0xff]
        %v804 = vld [vmem:[#allocation8] sm:$0xff]
        %v805 = vld [vmem:[#allocation8 + $0x8] sm:$0xff]
        %v806 = vld [vmem:[#allocation8 + $0x10] sm:$0xff]
        %v807 = vld [vmem:[#allocation8 + $0x18] sm:$0xff]
        %v808 = vld [vmem:[#allocation8 + $0x20] sm:$0xff]
        %v809 = vld [vmem:[#allocation8 + $0x28] sm:$0xff]
        %v810 = vld [vmem:[#allocation8 + $0x30] sm:$0xff]
        %v811 = vld [vmem:[#allocation8 + $0x38] sm:$0xff]
        %v812 = vld [vmem:[#allocation8 + $0x40] sm:$0xff]
        %v813 = vld [vmem:[#allocation8 + $0x48] sm:$0xff]
        %v814 = vld [vmem:[#allocation8 + $0x50] sm:$0xff]
        %v815 = vld [vmem:[#allocation8 + $0x58] sm:$0xff]
        %v816 = vld [vmem:[#allocation8 + $0x60] sm:$0xff]
        %v817 = vld [vmem:[#allocation8 + $0x68] sm:$0xff]
        %v818 = vld [vmem:[#allocation8 + $0x70] sm:$0xff]
        %v819 = vld [vmem:[#allocation8 + $0x78] sm:$0xff]
        %v820 = vld [vmem:[%s787 + $0x1] sm:$0xff]
        %v821 = vld [vmem:[%s787 + $0x9] sm:$0xff]
        %v822 = vld [vmem:[%s787 + $0x19] sm:$0xff]
        %v823 = vld [vmem:[%s787 + $0x21] sm:$0xff]
        %v824 = vld [vmem:[%s787 + $0x31] sm:$0xff]
        %v825 = vld [vmem:[%s787 + $0x39] sm:$0xff]
        %v826 = vld [vmem:[%s787 + $0x49] sm:$0xff]
        %v827 = vld [vmem:[%s787 + $0x51] sm:$0xff]
        %v828 = vld [vmem:[%s787 + $0x61] sm:$0xff]
        %v829 = vld [vmem:[%s787 + $0x69] sm:$0xff]
        %v830 = vld [vmem:[%s787 + $0x79] sm:$0xff]
        %v831 = vld [vmem:[%s787 + $0x81] sm:$0xff]
        %v832 = vld [vmem:[%s787 + $0x91] sm:$0xff]
        %v833 = vld [vmem:[%s787 + $0x99] sm:$0xff]
        %v834 = vld [vmem:[%s787 + $0xa9] sm:$0xff]
        %v835 = vld [vmem:[%s787 + $0xb1] sm:$0xff]
        %s836 = scalar_lea.vmem [#allocation8], 128
        %v837 = vld [vmem:[%s836] sm:$0xff]
        %v838 = vld [vmem:[%s836 + $0x8] sm:$0xff]
        %v839 = vld [vmem:[%s836 + $0x10] sm:$0xff]
        %v840 = vld [vmem:[%s836 + $0x18] sm:$0xff]
        %v841 = vld [vmem:[%s836 + $0x20] sm:$0xff]
        %v842 = vld [vmem:[%s836 + $0x28] sm:$0xff]
        %v843 = vld [vmem:[%s836 + $0x30] sm:$0xff]
        %v844 = vld [vmem:[%s836 + $0x38] sm:$0xff]
        %v845 = vld [vmem:[%s836 + $0x40] sm:$0xff]
        %v846 = vld [vmem:[%s836 + $0x48] sm:$0xff]
        %v847 = vld [vmem:[%s836 + $0x50] sm:$0xff]
        %v848 = vld [vmem:[%s836 + $0x58] sm:$0xff]
        %v849 = vld [vmem:[%s836 + $0x60] sm:$0xff]
        %v850 = vld [vmem:[%s836 + $0x68] sm:$0xff]
        %v851 = vld [vmem:[%s836 + $0x70] sm:$0xff]
        %v852 = vld [vmem:[%s836 + $0x78] sm:$0xff]
        %853 = vmatprep.subr.mxu0 0.0
        %854 = vmatpush1.msra.mxu0 %v837
        %855 = vmatprep.subr.mxu0 0.0
        %856 = vmatpush1.msra.mxu0 %v838
        %857 = vmatprep.subr.mxu0 0.0
        %858 = vmatpush1.msra.mxu0 %v839
        %859 = vmatprep.subr.mxu0 0.0
        %860 = vmatpush1.msra.mxu0 %v840
        %861 = vmatprep.subr.mxu0 0.0
        %862 = vmatpush1.msra.mxu0 %v841
        %863 = vmatprep.subr.mxu0 0.0
        %864 = vmatpush1.msra.mxu0 %v842
        %865 = vmatprep.subr.mxu0 0.0
        %866 = vmatpush1.msra.mxu0 %v843
        %867 = vmatprep.subr.mxu0 0.0
        %868 = vmatpush1.msra.mxu0 %v844
        %869 = vmatprep.subr.mxu0 0.0
        %870 = vmatpush1.msra.mxu0 %v845
        %871 = vmatprep.subr.mxu0 0.0
        %872 = vmatpush1.msra.mxu0 %v846
        %873 = vmatprep.subr.mxu0 0.0
        %874 = vmatpush1.msra.mxu0 %v847
        %875 = vmatprep.subr.mxu0 0.0
        %876 = vmatpush1.msra.mxu0 %v848
        %877 = vmatprep.subr.mxu0 0.0
        %878 = vmatpush1.msra.mxu0 %v849
        %879 = vmatprep.subr.mxu0 0.0
        %880 = vmatpush1.msra.mxu0 %v850
        %881 = vmatprep.subr.mxu0 0.0
        %882 = vmatpush1.msra.mxu0 %v851
        %883 = vmatprep.subr.mxu0 0.0
        %884 = vmatpush1.msra.mxu0 %v852
        %885 = vmatprep.subr.mxu0 0.0
        %886 = vmatpush1.msra.mxu0 0.0
        %887 = vmatprep.subr.mxu0 0.0
        %888 = vmatpush1.msra.mxu0 0.0
        %889 = vmatprep.subr.mxu0 0.0
        %890 = vmatpush1.msra.mxu0 0.0
        %891 = vmatprep.subr.mxu0 0.0
        %892 = vmatpush1.msra.mxu0 0.0
        %893 = vmatprep.subr.mxu0 0.0
        %894 = vmatpush1.msra.mxu0 0.0
        %895 = vmatprep.subr.mxu0 0.0
        %896 = vmatpush1.msra.mxu0 0.0
        %897 = vmatprep.subr.mxu0 0.0
        %898 = vmatpush1.msra.mxu0 0.0
        %899 = vmatprep.subr.mxu0 0.0
        %900 = vmatpush1.msra.mxu0 0.0
        %901 = vmatprep.subr.mxu0 0.0
        %902 = vmatpush1.msra.mxu0 0.0
        %903 = vmatprep.subr.mxu0 0.0
        %904 = vmatpush1.msra.mxu0 0.0
        %905 = vmatprep.subr.mxu0 0.0
        %906 = vmatpush1.msra.mxu0 0.0
        %907 = vmatprep.subr.mxu0 0.0
        %908 = vmatpush1.msra.mxu0 0.0
        %909 = vmatprep.subr.mxu0 0.0
        %910 = vmatpush1.msra.mxu0 0.0
        %911 = vmatprep.subr.mxu0 0.0
        %912 = vmatpush1.msra.mxu0 0.0
        %913 = vmatprep.subr.mxu0 0.0
        %914 = vmatpush1.msra.mxu0 0.0
        %915 = vmatprep.subr.mxu0 0.0
        %916 = vmatpush1.msra.mxu0 0.0
        %917 = vmatprep.mubr.f32.mxu0 0.0
        %918 = vmatmul.mubr.f32.gmra.mrb[0].mxu0 %v820
        %v919 = vpop.f32.mrb[0].mxu0
        %v920 = vadd.f32 0.0, %v919
        %v921 = vpop.f32.mrb[0].mxu0
        %922 = vmatprep.mubr.f32.mxu0 0.0
        %923 = vmatmul.mubr.f32.gmra.mrb[0].mxu0 %v821
        %v924 = vpop.f32.mrb[0].mxu0
        %v925 = vadd.f32 0.0, %v924
        %v926 = vpop.f32.mrb[0].mxu0
        %927 = vmatprep.mubr.f32.mxu0 0.0
        %928 = vmatmul.mubr.f32.gmra.mrb[0].mxu0 %v822
        %v929 = vpop.f32.mrb[0].mxu0
        %v930 = vadd.f32 0.0, %v929
        %v931 = vpop.f32.mrb[0].mxu0
        %932 = vmatprep.mubr.f32.mxu0 0.0
        %933 = vmatmul.mubr.f32.gmra.mrb[0].mxu0 %v823
        %v934 = vpop.f32.mrb[0].mxu0
        %v935 = vadd.f32 0.0, %v934
        %v936 = vpop.f32.mrb[0].mxu0
        %937 = vmatprep.mubr.f32.mxu0 0.0
        %938 = vmatmul.mubr.f32.gmra.mrb[0].mxu0 %v824
        %v939 = vpop.f32.mrb[0].mxu0
        %v940 = vadd.f32 0.0, %v939
        %v941 = vpop.f32.mrb[0].mxu0
        %942 = vmatprep.mubr.f32.mxu0 0.0
        %943 = vmatmul.mubr.f32.gmra.mrb[0].mxu0 %v825
        %v944 = vpop.f32.mrb[0].mxu0
        %v945 = vadd.f32 0.0, %v944
        %v946 = vpop.f32.mrb[0].mxu0
        %947 = vmatprep.mubr.f32.mxu0 0.0
        %948 = vmatmul.mubr.f32.gmra.mrb[0].mxu0 %v826
        %v949 = vpop.f32.mrb[0].mxu0
        %v950 = vadd.f32 0.0, %v949
        %v951 = vpop.f32.mrb[0].mxu0
        %952 = vmatprep.mubr.f32.mxu0 0.0
        %953 = vmatmul.mubr.f32.gmra.mrb[0].mxu0 %v827
        %v954 = vpop.f32.mrb[0].mxu0
        %v955 = vadd.f32 0.0, %v954
        %v956 = vpop.f32.mrb[0].mxu0
        %957 = vmatprep.mubr.f32.mxu0 0.0
        %958 = vmatmul.mubr.f32.gmra.mrb[0].mxu0 %v828
        %v959 = vpop.f32.mrb[0].mxu0
        %v960 = vadd.f32 0.0, %v959
        %v961 = vpop.f32.mrb[0].mxu0
        %962 = vmatprep.mubr.f32.mxu0 0.0
        %963 = vmatmul.mubr.f32.gmra.mrb[0].mxu0 %v829
        %v964 = vpop.f32.mrb[0].mxu0
        %v965 = vadd.f32 0.0, %v964
        %v966 = vpop.f32.mrb[0].mxu0
        %967 = vmatprep.mubr.f32.mxu0 0.0
        %968 = vmatmul.mubr.f32.gmra.mrb[0].mxu0 %v830
        %v969 = vpop.f32.mrb[0].mxu0
        %v970 = vadd.f32 0.0, %v969
        %v971 = vpop.f32.mrb[0].mxu0
        %972 = vmatprep.mubr.f32.mxu0 0.0
        %973 = vmatmul.mubr.f32.gmra.mrb[0].mxu0 %v831
        %v974 = vpop.f32.mrb[0].mxu0
        %v975 = vadd.f32 0.0, %v974
        %v976 = vpop.f32.mrb[0].mxu0
        %977 = vmatprep.mubr.f32.mxu0 0.0
        %978 = vmatmul.mubr.f32.gmra.mrb[0].mxu0 %v832
        %v979 = vpop.f32.mrb[0].mxu0
        %v980 = vadd.f32 0.0, %v979
        %v981 = vpop.f32.mrb[0].mxu0
        %982 = vmatprep.mubr.f32.mxu0 0.0
        %983 = vmatmul.mubr.f32.gmra.mrb[0].mxu0 %v833
        %v984 = vpop.f32.mrb[0].mxu0
        %v985 = vadd.f32 0.0, %v984
        %v986 = vpop.f32.mrb[0].mxu0
        %987 = vmatprep.mubr.f32.mxu0 0.0
        %988 = vmatmul.mubr.f32.gmra.mrb[0].mxu0 %v834
        %v989 = vpop.f32.mrb[0].mxu0
        %v990 = vadd.f32 0.0, %v989
        %v991 = vpop.f32.mrb[0].mxu0
        %992 = vmatprep.mubr.f32.mxu0 0.0
        %993 = vmatmul.mubr.f32.gmra.mrb[0].mxu0 %v835
        %v994 = vpop.f32.mrb[0].mxu0
        %v995 = vadd.f32 0.0, %v994
        %v996 = vpop.f32.mrb[0].mxu0
        %997 = vdwg.mxu0
        %998 = vmatprep.subr.mxu0 0.0
        %999 = vmatpush1.msra.mxu0 %v804
        %1000 = vmatprep.subr.mxu0 0.0
        %1001 = vmatpush1.msra.mxu0 %v805
        %1002 = vmatprep.subr.mxu0 0.0
        %1003 = vmatpush1.msra.mxu0 %v806
        %1004 = vmatprep.subr.mxu0 0.0
        %1005 = vmatpush1.msra.mxu0 %v807
        %1006 = vmatprep.subr.mxu0 0.0
        %1007 = vmatpush1.msra.mxu0 %v808
        %1008 = vmatprep.subr.mxu0 0.0
        %1009 = vmatpush1.msra.mxu0 %v809
        %1010 = vmatprep.subr.mxu0 0.0
        %1011 = vmatpush1.msra.mxu0 %v810
        %1012 = vmatprep.subr.mxu0 0.0
        %1013 = vmatpush1.msra.mxu0 %v811
        %1014 = vmatprep.subr.mxu0 0.0
        %1015 = vmatpush1.msra.mxu0 %v812
        %1016 = vmatprep.subr.mxu0 0.0
        %1017 = vmatpush1.msra.mxu0 %v813
        %1018 = vmatprep.subr.mxu0 0.0
        %1019 = vmatpush1.msra.mxu0 %v814
        %1020 = vmatprep.subr.mxu0 0.0
        %1021 = vmatpush1.msra.mxu0 %v815
        %1022 = vmatprep.subr.mxu0 0.0
        %1023 = vmatpush1.msra.mxu0 %v816
        %1024 = vmatprep.subr.mxu0 0.0
        %1025 = vmatpush1.msra.mxu0 %v817
        %1026 = vmatprep.subr.mxu0 0.0
        %1027 = vmatpush1.msra.mxu0 %v818
        %1028 = vmatprep.subr.mxu0 0.0
        %1029 = vmatpush1.msra.mxu0 %v819
        %1030 = vmatprep.subr.mxu0 0.0
        %1031 = vmatpush1.msra.mxu0 0.0
        %1032 = vmatprep.subr.mxu0 0.0
        %1033 = vmatpush1.msra.mxu0 0.0
        %1034 = vmatprep.subr.mxu0 0.0
        %1035 = vmatpush1.msra.mxu0 0.0
        %1036 = vmatprep.subr.mxu0 0.0
        %1037 = vmatpush1.msra.mxu0 0.0
        %1038 = vmatprep.subr.mxu0 0.0
        %1039 = vmatpush1.msra.mxu0 0.0
        %1040 = vmatprep.subr.mxu0 0.0
        %1041 = vmatpush1.msra.mxu0 0.0
        %1042 = vmatprep.subr.mxu0 0.0
        %1043 = vmatpush1.msra.mxu0 0.0
        %1044 = vmatprep.subr.mxu0 0.0
        %1045 = vmatpush1.msra.mxu0 0.0
        %1046 = vmatprep.subr.mxu0 0.0
        %1047 = vmatpush1.msra.mxu0 0.0
        %1048 = vmatprep.subr.mxu0 0.0
        %1049 = vmatpush1.msra.mxu0 0.0
        %1050 = vmatprep.subr.mxu0 0.0
        %1051 = vmatpush1.msra.mxu0 0.0
        %1052 = vmatprep.subr.mxu0 0.0
        %1053 = vmatpush1.msra.mxu0 0.0
        %1054 = vmatprep.subr.mxu0 0.0
        %1055 = vmatpush1.msra.mxu0 0.0
        %1056 = vmatprep.subr.mxu0 0.0
        %1057 = vmatpush1.msra.mxu0 0.0
        %1058 = vmatprep.subr.mxu0 0.0
        %1059 = vmatpush1.msra.mxu0 0.0
        %1060 = vmatprep.subr.mxu0 0.0
        %1061 = vmatpush1.msra.mxu0 0.0
        %1062 = vmatprep.mubr.f32.mxu0 0.0
        %1063 = vmatmul.mubr.f32.gmra.mrb[0].mxu0 %v788
        %v1064 = vpop.f32.mrb[0].mxu0
        %v1065 = vadd.f32 %v920, %v1064
        %v1066 = vpop.f32.mrb[0].mxu0
        %1067 = vmatprep.mubr.f32.mxu0 0.0
        %1068 = vmatmul.mubr.f32.gmra.mrb[0].mxu0 %v789
        %v1069 = vpop.f32.mrb[0].mxu0
        %v1070 = vadd.f32 %v925, %v1069
        %v1071 = vpop.f32.mrb[0].mxu0
        %1072 = vmatprep.mubr.f32.mxu0 0.0
        %1073 = vmatmul.mubr.f32.gmra.mrb[0].mxu0 %v790
        %v1074 = vpop.f32.mrb[0].mxu0
        %v1075 = vadd.f32 %v930, %v1074
        %v1076 = vpop.f32.mrb[0].mxu0
        %1077 = vmatprep.mubr.f32.mxu0 0.0
        %1078 = vmatmul.mubr.f32.gmra.mrb[0].mxu0 %v791
        %v1079 = vpop.f32.mrb[0].mxu0
        %v1080 = vadd.f32 %v935, %v1079
        %v1081 = vpop.f32.mrb[0].mxu0
        %1082 = vmatprep.mubr.f32.mxu0 0.0
        %1083 = vmatmul.mubr.f32.gmra.mrb[0].mxu0 %v792
        %v1084 = vpop.f32.mrb[0].mxu0
        %v1085 = vadd.f32 %v940, %v1084
        %v1086 = vpop.f32.mrb[0].mxu0
        %1087 = vmatprep.mubr.f32.mxu0 0.0
        %1088 = vmatmul.mubr.f32.gmra.mrb[0].mxu0 %v793
        %v1089 = vpop.f32.mrb[0].mxu0
        %v1090 = vadd.f32 %v945, %v1089
        %v1091 = vpop.f32.mrb[0].mxu0
        %1092 = vmatprep.mubr.f32.mxu0 0.0
        %1093 = vmatmul.mubr.f32.gmra.mrb[0].mxu0 %v794
        %v1094 = vpop.f32.mrb[0].mxu0
        %v1095 = vadd.f32 %v950, %v1094
        %v1096 = vpop.f32.mrb[0].mxu0
        %1097 = vmatprep.mubr.f32.mxu0 0.0
        %1098 = vmatmul.mubr.f32.gmra.mrb[0].mxu0 %v795
        %v1099 = vpop.f32.mrb[0].mxu0
        %v1100 = vadd.f32 %v955, %v1099
        %v1101 = vpop.f32.mrb[0].mxu0
        %1102 = vmatprep.mubr.f32.mxu0 0.0
        %1103 = vmatmul.mubr.f32.gmra.mrb[0].mxu0 %v796
        %v1104 = vpop.f32.mrb[0].mxu0
        %v1105 = vadd.f32 %v960, %v1104
        %v1106 = vpop.f32.mrb[0].mxu0
        %1107 = vmatprep.mubr.f32.mxu0 0.0
        %1108 = vmatmul.mubr.f32.gmra.mrb[0].mxu0 %v797
        %v1109 = vpop.f32.mrb[0].mxu0
        %v1110 = vadd.f32 %v965, %v1109
        %v1111 = vpop.f32.mrb[0].mxu0
        %1112 = vmatprep.mubr.f32.mxu0 0.0
        %1113 = vmatmul.mubr.f32.gmra.mrb[0].mxu0 %v798
        %v1114 = vpop.f32.mrb[0].mxu0
        %v1115 = vadd.f32 %v970, %v1114
        %v1116 = vpop.f32.mrb[0].mxu0
        %1117 = vmatprep.mubr.f32.mxu0 0.0
        %1118 = vmatmul.mubr.f32.gmra.mrb[0].mxu0 %v799
        %v1119 = vpop.f32.mrb[0].mxu0
        %v1120 = vadd.f32 %v975, %v1119
        %v1121 = vpop.f32.mrb[0].mxu0
        %1122 = vmatprep.mubr.f32.mxu0 0.0
        %1123 = vmatmul.mubr.f32.gmra.mrb[0].mxu0 %v800
        %v1124 = vpop.f32.mrb[0].mxu0
        %v1125 = vadd.f32 %v980, %v1124
        %v1126 = vpop.f32.mrb[0].mxu0
        %1127 = vmatprep.mubr.f32.mxu0 0.0
        %1128 = vmatmul.mubr.f32.gmra.mrb[0].mxu0 %v801
        %v1129 = vpop.f32.mrb[0].mxu0
        %v1130 = vadd.f32 %v985, %v1129
        %v1131 = vpop.f32.mrb[0].mxu0
        %1132 = vmatprep.mubr.f32.mxu0 0.0
        %1133 = vmatmul.mubr.f32.gmra.mrb[0].mxu0 %v802
        %v1134 = vpop.f32.mrb[0].mxu0
        %v1135 = vadd.f32 %v990, %v1134
        %v1136 = vpop.f32.mrb[0].mxu0
        %1137 = vmatprep.mubr.f32.mxu0 0.0
        %1138 = vmatmul.mubr.f32.gmra.mrb[0].mxu0 %v803
        %v1139 = vpop.f32.mrb[0].mxu0
        %v1140 = vadd.f32 %v995, %v1139
        %v1141 = vpop.f32.mrb[0].mxu0
        %1142 = vdwg.mxu0
        %v1143 = vld [vmem:[%s787 + $0x2] sm:$0xff]
        %v1144 = vld [vmem:[%s787 + $0xa] sm:$0xff]
        %v1145 = vld [vmem:[%s787 + $0x1a] sm:$0xff]
        %v1146 = vld [vmem:[%s787 + $0x22] sm:$0xff]
        %v1147 = vld [vmem:[%s787 + $0x32] sm:$0xff]
        %v1148 = vld [vmem:[%s787 + $0x3a] sm:$0xff]
        %v1149 = vld [vmem:[%s787 + $0x4a] sm:$0xff]
        %v1150 = vld [vmem:[%s787 + $0x52] sm:$0xff]
        %v1151 = vld [vmem:[%s787 + $0x62] sm:$0xff]
        %v1152 = vld [vmem:[%s787 + $0x6a] sm:$0xff]
        %v1153 = vld [vmem:[%s787 + $0x7a] sm:$0xff]
        %v1154 = vld [vmem:[%s787 + $0x82] sm:$0xff]
        %v1155 = vld [vmem:[%s787 + $0x92] sm:$0xff]
        %v1156 = vld [vmem:[%s787 + $0x9a] sm:$0xff]
        %v1157 = vld [vmem:[%s787 + $0xaa] sm:$0xff]
        %v1158 = vld [vmem:[%s787 + $0xb2] sm:$0xff]
        %s1159 = scalar_lea.vmem [#allocation8], 256
        %v1160 = vld [vmem:[%s1159] sm:$0xff]
        %v1161 = vld [vmem:[%s1159 + $0x8] sm:$0xff]
        %v1162 = vld [vmem:[%s1159 + $0x10] sm:$0xff]
        %v1163 = vld [vmem:[%s1159 + $0x18] sm:$0xff]
        %v1164 = vld [vmem:[%s1159 + $0x20] sm:$0xff]
        %v1165 = vld [vmem:[%s1159 + $0x28] sm:$0xff]
        %v1166 = vld [vmem:[%s1159 + $0x30] sm:$0xff]
        %v1167 = vld [vmem:[%s1159 + $0x38] sm:$0xff]
        %v1168 = vld [vmem:[%s1159 + $0x40] sm:$0xff]
        %v1169 = vld [vmem:[%s1159 + $0x48] sm:$0xff]
        %v1170 = vld [vmem:[%s1159 + $0x50] sm:$0xff]
        %v1171 = vld [vmem:[%s1159 + $0x58] sm:$0xff]
        %v1172 = vld [vmem:[%s1159 + $0x60] sm:$0xff]
        %v1173 = vld [vmem:[%s1159 + $0x68] sm:$0xff]
        %v1174 = vld [vmem:[%s1159 + $0x70] sm:$0xff]
        %v1175 = vld [vmem:[%s1159 + $0x78] sm:$0xff]
        %1176 = vmatprep.subr.mxu0 0.0
        %1177 = vmatpush1.msra.mxu0 %v1160
        %1178 = vmatprep.subr.mxu0 0.0
        %1179 = vmatpush1.msra.mxu0 %v1161
        %1180 = vmatprep.subr.mxu0 0.0
        %1181 = vmatpush1.msra.mxu0 %v1162
        %1182 = vmatprep.subr.mxu0 0.0
        %1183 = vmatpush1.msra.mxu0 %v1163
        %1184 = vmatprep.subr.mxu0 0.0
        %1185 = vmatpush1.msra.mxu0 %v1164
        %1186 = vmatprep.subr.mxu0 0.0
        %1187 = vmatpush1.msra.mxu0 %v1165
        %1188 = vmatprep.subr.mxu0 0.0
        %1189 = vmatpush1.msra.mxu0 %v1166
        %1190 = vmatprep.subr.mxu0 0.0
        %1191 = vmatpush1.msra.mxu0 %v1167
        %1192 = vmatprep.subr.mxu0 0.0
        %1193 = vmatpush1.msra.mxu0 %v1168
        %1194 = vmatprep.subr.mxu0 0.0
        %1195 = vmatpush1.msra.mxu0 %v1169
        %1196 = vmatprep.subr.mxu0 0.0
        %1197 = vmatpush1.msra.mxu0 %v1170
        %1198 = vmatprep.subr.mxu0 0.0
        %1199 = vmatpush1.msra.mxu0 %v1171
        %1200 = vmatprep.subr.mxu0 0.0
        %1201 = vmatpush1.msra.mxu0 %v1172
        %1202 = vmatprep.subr.mxu0 0.0
        %1203 = vmatpush1.msra.mxu0 %v1173
        %1204 = vmatprep.subr.mxu0 0.0
        %1205 = vmatpush1.msra.mxu0 %v1174
        %1206 = vmatprep.subr.mxu0 0.0
        %1207 = vmatpush1.msra.mxu0 %v1175
        %1208 = vmatprep.subr.mxu0 0.0
        %1209 = vmatpush1.msra.mxu0 0.0
        %1210 = vmatprep.subr.mxu0 0.0
        %1211 = vmatpush1.msra.mxu0 0.0
        %1212 = vmatprep.subr.mxu0 0.0
        %1213 = vmatpush1.msra.mxu0 0.0
        %1214 = vmatprep.subr.mxu0 0.0
        %1215 = vmatpush1.msra.mxu0 0.0
        %1216 = vmatprep.subr.mxu0 0.0
        %1217 = vmatpush1.msra.mxu0 0.0
        %1218 = vmatprep.subr.mxu0 0.0
        %1219 = vmatpush1.msra.mxu0 0.0
        %1220 = vmatprep.subr.mxu0 0.0
        %1221 = vmatpush1.msra.mxu0 0.0
        %1222 = vmatprep.subr.mxu0 0.0
        %1223 = vmatpush1.msra.mxu0 0.0
        %1224 = vmatprep.subr.mxu0 0.0
        %1225 = vmatpush1.msra.mxu0 0.0
        %1226 = vmatprep.subr.mxu0 0.0
        %1227 = vmatpush1.msra.mxu0 0.0
        %1228 = vmatprep.subr.mxu0 0.0
        %1229 = vmatpush1.msra.mxu0 0.0
        %1230 = vmatprep.subr.mxu0 0.0
        %1231 = vmatpush1.msra.mxu0 0.0
        %1232 = vmatprep.subr.mxu0 0.0
        %1233 = vmatpush1.msra.mxu0 0.0
        %1234 = vmatprep.subr.mxu0 0.0
        %1235 = vmatpush1.msra.mxu0 0.0
        %1236 = vmatprep.subr.mxu0 0.0
        %1237 = vmatpush1.msra.mxu0 0.0
        %1238 = vmatprep.subr.mxu0 0.0
        %1239 = vmatpush1.msra.mxu0 0.0
        %1240 = vmatprep.mubr.f32.mxu0 0.0
        %1241 = vmatmul.mubr.f32.gmra.mrb[0].mxu0 %v1143
        %v1242 = vpop.f32.mrb[0].mxu0
        %v1243 = vadd.f32 0.0, %v1242
        %v1244 = vpop.f32.mrb[0].mxu0
        %1245 = vmatprep.mubr.f32.mxu0 0.0
        %1246 = vmatmul.mubr.f32.gmra.mrb[0].mxu0 %v1144
        %v1247 = vpop.f32.mrb[0].mxu0
        %v1248 = vadd.f32 0.0, %v1247
        %v1249 = vpop.f32.mrb[0].mxu0
        %1250 = vmatprep.mubr.f32.mxu0 0.0
        %1251 = vmatmul.mubr.f32.gmra.mrb[0].mxu0 %v1145
        %v1252 = vpop.f32.mrb[0].mxu0
        %v1253 = vadd.f32 0.0, %v1252
        %v1254 = vpop.f32.mrb[0].mxu0
        %1255 = vmatprep.mubr.f32.mxu0 0.0
        %1256 = vmatmul.mubr.f32.gmra.mrb[0].mxu0 %v1146
        %v1257 = vpop.f32.mrb[0].mxu0
        %v1258 = vadd.f32 0.0, %v1257
        %v1259 = vpop.f32.mrb[0].mxu0
        %1260 = vmatprep.mubr.f32.mxu0 0.0
        %1261 = vmatmul.mubr.f32.gmra.mrb[0].mxu0 %v1147
        %v1262 = vpop.f32.mrb[0].mxu0
        %v1263 = vadd.f32 0.0, %v1262
        %v1264 = vpop.f32.mrb[0].mxu0
        %1265 = vmatprep.mubr.f32.mxu0 0.0
        %1266 = vmatmul.mubr.f32.gmra.mrb[0].mxu0 %v1148
        %v1267 = vpop.f32.mrb[0].mxu0
        %v1268 = vadd.f32 0.0, %v1267
        %v1269 = vpop.f32.mrb[0].mxu0
        %1270 = vmatprep.mubr.f32.mxu0 0.0
        %1271 = vmatmul.mubr.f32.gmra.mrb[0].mxu0 %v1149
        %v1272 = vpop.f32.mrb[0].mxu0
        %v1273 = vadd.f32 0.0, %v1272
        %v1274 = vpop.f32.mrb[0].mxu0
        %1275 = vmatprep.mubr.f32.mxu0 0.0
        %1276 = vmatmul.mubr.f32.gmra.mrb[0].mxu0 %v1150
        %v1277 = vpop.f32.mrb[0].mxu0
        %v1278 = vadd.f32 0.0, %v1277
        %v1279 = vpop.f32.mrb[0].mxu0
        %1280 = vmatprep.mubr.f32.mxu0 0.0
        %1281 = vmatmul.mubr.f32.gmra.mrb[0].mxu0 %v1151
        %v1282 = vpop.f32.mrb[0].mxu0
        %v1283 = vadd.f32 0.0, %v1282
        %v1284 = vpop.f32.mrb[0].mxu0
        %1285 = vmatprep.mubr.f32.mxu0 0.0
        %1286 = vmatmul.mubr.f32.gmra.mrb[0].mxu0 %v1152
        %v1287 = vpop.f32.mrb[0].mxu0
        %v1288 = vadd.f32 0.0, %v1287
        %v1289 = vpop.f32.mrb[0].mxu0
        %1290 = vmatprep.mubr.f32.mxu0 0.0
        %1291 = vmatmul.mubr.f32.gmra.mrb[0].mxu0 %v1153
        %v1292 = vpop.f32.mrb[0].mxu0
        %v1293 = vadd.f32 0.0, %v1292
        %v1294 = vpop.f32.mrb[0].mxu0
        %1295 = vmatprep.mubr.f32.mxu0 0.0
        %1296 = vmatmul.mubr.f32.gmra.mrb[0].mxu0 %v1154
        %v1297 = vpop.f32.mrb[0].mxu0
        %v1298 = vadd.f32 0.0, %v1297
        %v1299 = vpop.f32.mrb[0].mxu0
        %1300 = vmatprep.mubr.f32.mxu0 0.0
        %1301 = vmatmul.mubr.f32.gmra.mrb[0].mxu0 %v1155
        %v1302 = vpop.f32.mrb[0].mxu0
        %v1303 = vadd.f32 0.0, %v1302
        %v1304 = vpop.f32.mrb[0].mxu0
        %1305 = vmatprep.mubr.f32.mxu0 0.0
        %1306 = vmatmul.mubr.f32.gmra.mrb[0].mxu0 %v1156
        %v1307 = vpop.f32.mrb[0].mxu0
        %v1308 = vadd.f32 0.0, %v1307
        %v1309 = vpop.f32.mrb[0].mxu0
        %1310 = vmatprep.mubr.f32.mxu0 0.0
        %1311 = vmatmul.mubr.f32.gmra.mrb[0].mxu0 %v1157
        %v1312 = vpop.f32.mrb[0].mxu0
        %v1313 = vadd.f32 0.0, %v1312
        %v1314 = vpop.f32.mrb[0].mxu0
        %1315 = vmatprep.mubr.f32.mxu0 0.0
        %1316 = vmatmul.mubr.f32.gmra.mrb[0].mxu0 %v1158
        %v1317 = vpop.f32.mrb[0].mxu0
        %v1318 = vadd.f32 0.0, %v1317
        %v1319 = vpop.f32.mrb[0].mxu0
        %1320 = vdwg.mxu0
        %v1321 = vadd.f32 %v1065, %v1243
        %v1322 = vadd.f32 %v1070, %v1248
        %v1323 = vadd.f32 %v1075, %v1253
        %v1324 = vadd.f32 %v1080, %v1258
        %v1325 = vadd.f32 %v1085, %v1263
        %v1326 = vadd.f32 %v1090, %v1268
        %v1327 = vadd.f32 %v1095, %v1273
        %v1328 = vadd.f32 %v1100, %v1278
        %v1329 = vadd.f32 %v1105, %v1283
        %v1330 = vadd.f32 %v1110, %v1288
        %v1331 = vadd.f32 %v1115, %v1293
        %v1332 = vadd.f32 %v1120, %v1298
        %v1333 = vadd.f32 %v1125, %v1303
        %v1334 = vadd.f32 %v1130, %v1308
        %v1335 = vadd.f32 %v1135, %v1313
        %v1336 = vadd.f32 %v1140, %v1318
        %s1337 = sadd.s32 %s785, 1
        %s1338 = smul.u32 %s1337, 24
        %s1339 = scalar_lea.vmem [#allocation2], %s1338
        %v1340 = vld [vmem:[%s1339] sm:$0xff]
        %v1341 = vld [vmem:[%s1339 + $0x8] sm:$0xff]
        %v1342 = vld [vmem:[%s1339 + $0x18] sm:$0xff]
        %v1343 = vld [vmem:[%s1339 + $0x20] sm:$0xff]
        %v1344 = vld [vmem:[%s1339 + $0x30] sm:$0xff]
        %v1345 = vld [vmem:[%s1339 + $0x38] sm:$0xff]
        %v1346 = vld [vmem:[%s1339 + $0x48] sm:$0xff]
        %v1347 = vld [vmem:[%s1339 + $0x50] sm:$0xff]
        %v1348 = vld [vmem:[%s1339 + $0x60] sm:$0xff]
        %v1349 = vld [vmem:[%s1339 + $0x68] sm:$0xff]
        %v1350 = vld [vmem:[%s1339 + $0x78] sm:$0xff]
        %v1351 = vld [vmem:[%s1339 + $0x80] sm:$0xff]
        %v1352 = vld [vmem:[%s1339 + $0x90] sm:$0xff]
        %v1353 = vld [vmem:[%s1339 + $0x98] sm:$0xff]
        %v1354 = vld [vmem:[%s1339 + $0xa8] sm:$0xff]
        %v1355 = vld [vmem:[%s1339 + $0xb0] sm:$0xff]
        %s1356 = scalar_lea.vmem [#allocation8], 384
        %v1357 = vld [vmem:[%s1356] sm:$0xff]
        %v1358 = vld [vmem:[%s1356 + $0x8] sm:$0xff]
        %v1359 = vld [vmem:[%s1356 + $0x10] sm:$0xff]
        %v1360 = vld [vmem:[%s1356 + $0x18] sm:$0xff]
        %v1361 = vld [vmem:[%s1356 + $0x20] sm:$0xff]
        %v1362 = vld [vmem:[%s1356 + $0x28] sm:$0xff]
        %v1363 = vld [vmem:[%s1356 + $0x30] sm:$0xff]
        %v1364 = vld [vmem:[%s1356 + $0x38] sm:$0xff]
        %v1365 = vld [vmem:[%s1356 + $0x40] sm:$0xff]
        %v1366 = vld [vmem:[%s1356 + $0x48] sm:$0xff]
        %v1367 = vld [vmem:[%s1356 + $0x50] sm:$0xff]
        %v1368 = vld [vmem:[%s1356 + $0x58] sm:$0xff]
        %v1369 = vld [vmem:[%s1356 + $0x60] sm:$0xff]
        %v1370 = vld [vmem:[%s1356 + $0x68] sm:$0xff]
        %v1371 = vld [vmem:[%s1356 + $0x70] sm:$0xff]
        %v1372 = vld [vmem:[%s1356 + $0x78] sm:$0xff]
        %1373 = vmatprep.subr.mxu0 0.0
        %1374 = vmatpush1.msra.mxu0 %v1357
        %1375 = vmatprep.subr.mxu0 0.0
        %1376 = vmatpush1.msra.mxu0 %v1358
        %1377 = vmatprep.subr.mxu0 0.0
        %1378 = vmatpush1.msra.mxu0 %v1359
        %1379 = vmatprep.subr.mxu0 0.0
        %1380 = vmatpush1.msra.mxu0 %v1360
        %1381 = vmatprep.subr.mxu0 0.0
        %1382 = vmatpush1.msra.mxu0 %v1361
        %1383 = vmatprep.subr.mxu0 0.0
        %1384 = vmatpush1.msra.mxu0 %v1362
        %1385 = vmatprep.subr.mxu0 0.0
        %1386 = vmatpush1.msra.mxu0 %v1363
        %1387 = vmatprep.subr.mxu0 0.0
        %1388 = vmatpush1.msra.mxu0 %v1364
        %1389 = vmatprep.subr.mxu0 0.0
        %1390 = vmatpush1.msra.mxu0 %v1365
        %1391 = vmatprep.subr.mxu0 0.0
        %1392 = vmatpush1.msra.mxu0 %v1366
        %1393 = vmatprep.subr.mxu0 0.0
        %1394 = vmatpush1.msra.mxu0 %v1367
        %1395 = vmatprep.subr.mxu0 0.0
        %1396 = vmatpush1.msra.mxu0 %v1368
        %1397 = vmatprep.subr.mxu0 0.0
        %1398 = vmatpush1.msra.mxu0 %v1369
        %1399 = vmatprep.subr.mxu0 0.0
        %1400 = vmatpush1.msra.mxu0 %v1370
        %1401 = vmatprep.subr.mxu0 0.0
        %1402 = vmatpush1.msra.mxu0 %v1371
        %1403 = vmatprep.subr.mxu0 0.0
        %1404 = vmatpush1.msra.mxu0 %v1372
        %1405 = vmatprep.subr.mxu0 0.0
        %1406 = vmatpush1.msra.mxu0 0.0
        %1407 = vmatprep.subr.mxu0 0.0
        %1408 = vmatpush1.msra.mxu0 0.0
        %1409 = vmatprep.subr.mxu0 0.0
        %1410 = vmatpush1.msra.mxu0 0.0
        %1411 = vmatprep.subr.mxu0 0.0
        %1412 = vmatpush1.msra.mxu0 0.0
        %1413 = vmatprep.subr.mxu0 0.0
        %1414 = vmatpush1.msra.mxu0 0.0
        %1415 = vmatprep.subr.mxu0 0.0
        %1416 = vmatpush1.msra.mxu0 0.0
        %1417 = vmatprep.subr.mxu0 0.0
        %1418 = vmatpush1.msra.mxu0 0.0
        %1419 = vmatprep.subr.mxu0 0.0
        %1420 = vmatpush1.msra.mxu0 0.0
        %1421 = vmatprep.subr.mxu0 0.0
        %1422 = vmatpush1.msra.mxu0 0.0
        %1423 = vmatprep.subr.mxu0 0.0
        %1424 = vmatpush1.msra.mxu0 0.0
        %1425 = vmatprep.subr.mxu0 0.0
        %1426 = vmatpush1.msra.mxu0 0.0
        %1427 = vmatprep.subr.mxu0 0.0
        %1428 = vmatpush1.msra.mxu0 0.0
        %1429 = vmatprep.subr.mxu0 0.0
        %1430 = vmatpush1.msra.mxu0 0.0
        %1431 = vmatprep.subr.mxu0 0.0
        %1432 = vmatpush1.msra.mxu0 0.0
        %1433 = vmatprep.subr.mxu0 0.0
        %1434 = vmatpush1.msra.mxu0 0.0
        %1435 = vmatprep.subr.mxu0 0.0
        %1436 = vmatpush1.msra.mxu0 0.0
        %1437 = vmatprep.mubr.f32.mxu0 0.0
        %1438 = vmatmul.mubr.f32.gmra.mrb[0].mxu0 %v1340
        %v1439 = vpop.f32.mrb[0].mxu0
        %v1440 = vadd.f32 0.0, %v1439
        %v1441 = vpop.f32.mrb[0].mxu0
        %1442 = vmatprep.mubr.f32.mxu0 0.0
        %1443 = vmatmul.mubr.f32.gmra.mrb[0].mxu0 %v1341
        %v1444 = vpop.f32.mrb[0].mxu0
        %v1445 = vadd.f32 0.0, %v1444
        %v1446 = vpop.f32.mrb[0].mxu0
        %1447 = vmatprep.mubr.f32.mxu0 0.0
        %1448 = vmatmul.mubr.f32.gmra.mrb[0].mxu0 %v1342
        %v1449 = vpop.f32.mrb[0].mxu0
        %v1450 = vadd.f32 0.0, %v1449
        %v1451 = vpop.f32.mrb[0].mxu0
        %1452 = vmatprep.mubr.f32.mxu0 0.0
        %1453 = vmatmul.mubr.f32.gmra.mrb[0].mxu0 %v1343
        %v1454 = vpop.f32.mrb[0].mxu0
        %v1455 = vadd.f32 0.0, %v1454
        %v1456 = vpop.f32.mrb[0].mxu0
        %1457 = vmatprep.mubr.f32.mxu0 0.0
        %1458 = vmatmul.mubr.f32.gmra.mrb[0].mxu0 %v1344
        %v1459 = vpop.f32.mrb[0].mxu0
        %v1460 = vadd.f32 0.0, %v1459
        %v1461 = vpop.f32.mrb[0].mxu0
        %1462 = vmatprep.mubr.f32.mxu0 0.0
        %1463 = vmatmul.mubr.f32.gmra.mrb[0].mxu0 %v1345
        %v1464 = vpop.f32.mrb[0].mxu0
        %v1465 = vadd.f32 0.0, %v1464
        %v1466 = vpop.f32.mrb[0].mxu0
        %1467 = vmatprep.mubr.f32.mxu0 0.0
        %1468 = vmatmul.mubr.f32.gmra.mrb[0].mxu0 %v1346
        %v1469 = vpop.f32.mrb[0].mxu0
        %v1470 = vadd.f32 0.0, %v1469
        %v1471 = vpop.f32.mrb[0].mxu0
        %1472 = vmatprep.mubr.f32.mxu0 0.0
        %1473 = vmatmul.mubr.f32.gmra.mrb[0].mxu0 %v1347
        %v1474 = vpop.f32.mrb[0].mxu0
        %v1475 = vadd.f32 0.0, %v1474
        %v1476 = vpop.f32.mrb[0].mxu0
        %1477 = vmatprep.mubr.f32.mxu0 0.0
        %1478 = vmatmul.mubr.f32.gmra.mrb[0].mxu0 %v1348
        %v1479 = vpop.f32.mrb[0].mxu0
        %v1480 = vadd.f32 0.0, %v1479
        %v1481 = vpop.f32.mrb[0].mxu0
        %1482 = vmatprep.mubr.f32.mxu0 0.0
        %1483 = vmatmul.mubr.f32.gmra.mrb[0].mxu0 %v1349
        %v1484 = vpop.f32.mrb[0].mxu0
        %v1485 = vadd.f32 0.0, %v1484
        %v1486 = vpop.f32.mrb[0].mxu0
        %1487 = vmatprep.mubr.f32.mxu0 0.0
        %1488 = vmatmul.mubr.f32.gmra.mrb[0].mxu0 %v1350
        %v1489 = vpop.f32.mrb[0].mxu0
        %v1490 = vadd.f32 0.0, %v1489
        %v1491 = vpop.f32.mrb[0].mxu0
        %1492 = vmatprep.mubr.f32.mxu0 0.0
        %1493 = vmatmul.mubr.f32.gmra.mrb[0].mxu0 %v1351
        %v1494 = vpop.f32.mrb[0].mxu0
        %v1495 = vadd.f32 0.0, %v1494
        %v1496 = vpop.f32.mrb[0].mxu0
        %1497 = vmatprep.mubr.f32.mxu0 0.0
        %1498 = vmatmul.mubr.f32.gmra.mrb[0].mxu0 %v1352
        %v1499 = vpop.f32.mrb[0].mxu0
        %v1500 = vadd.f32 0.0, %v1499
        %v1501 = vpop.f32.mrb[0].mxu0
        %1502 = vmatprep.mubr.f32.mxu0 0.0
        %1503 = vmatmul.mubr.f32.gmra.mrb[0].mxu0 %v1353
        %v1504 = vpop.f32.mrb[0].mxu0
        %v1505 = vadd.f32 0.0, %v1504
        %v1506 = vpop.f32.mrb[0].mxu0
        %1507 = vmatprep.mubr.f32.mxu0 0.0
        %1508 = vmatmul.mubr.f32.gmra.mrb[0].mxu0 %v1354
        %v1509 = vpop.f32.mrb[0].mxu0
        %v1510 = vadd.f32 0.0, %v1509
        %v1511 = vpop.f32.mrb[0].mxu0
        %1512 = vmatprep.mubr.f32.mxu0 0.0
        %1513 = vmatmul.mubr.f32.gmra.mrb[0].mxu0 %v1355
        %v1514 = vpop.f32.mrb[0].mxu0
        %v1515 = vadd.f32 0.0, %v1514
        %v1516 = vpop.f32.mrb[0].mxu0
        %1517 = vdwg.mxu0
        %v1518 = vadd.f32 %v1321, %v1440
        %v1519 = vadd.f32 %v1322, %v1445
        %v1520 = vadd.f32 %v1323, %v1450
        %v1521 = vadd.f32 %v1324, %v1455
        %v1522 = vadd.f32 %v1325, %v1460
        %v1523 = vadd.f32 %v1326, %v1465
        %v1524 = vadd.f32 %v1327, %v1470
        %v1525 = vadd.f32 %v1328, %v1475
        %v1526 = vadd.f32 %v1329, %v1480
        %v1527 = vadd.f32 %v1330, %v1485
        %v1528 = vadd.f32 %v1331, %v1490
        %v1529 = vadd.f32 %v1332, %v1495
        %v1530 = vadd.f32 %v1333, %v1500
        %v1531 = vadd.f32 %v1334, %v1505
        %v1532 = vadd.f32 %v1335, %v1510
        %v1533 = vadd.f32 %v1336, %v1515
        %v1534 = vld [vmem:[%s1339 + $0x1] sm:$0xff]
        %v1535 = vld [vmem:[%s1339 + $0x9] sm:$0xff]
        %v1536 = vld [vmem:[%s1339 + $0x19] sm:$0xff]
        %v1537 = vld [vmem:[%s1339 + $0x21] sm:$0xff]
        %v1538 = vld [vmem:[%s1339 + $0x31] sm:$0xff]
        %v1539 = vld [vmem:[%s1339 + $0x39] sm:$0xff]
        %v1540 = vld [vmem:[%s1339 + $0x49] sm:$0xff]
        %v1541 = vld [vmem:[%s1339 + $0x51] sm:$0xff]
        %v1542 = vld [vmem:[%s1339 + $0x61] sm:$0xff]
        %v1543 = vld [vmem:[%s1339 + $0x69] sm:$0xff]
        %v1544 = vld [vmem:[%s1339 + $0x79] sm:$0xff]
        %v1545 = vld [vmem:[%s1339 + $0x81] sm:$0xff]
        %v1546 = vld [vmem:[%s1339 + $0x91] sm:$0xff]
        %v1547 = vld [vmem:[%s1339 + $0x99] sm:$0xff]
        %v1548 = vld [vmem:[%s1339 + $0xa9] sm:$0xff]
        %v1549 = vld [vmem:[%s1339 + $0xb1] sm:$0xff]
        %s1550 = scalar_lea.vmem [#allocation8], 512
        %v1551 = vld [vmem:[%s1550] sm:$0xff]
        %v1552 = vld [vmem:[%s1550 + $0x8] sm:$0xff]
        %v1553 = vld [vmem:[%s1550 + $0x10] sm:$0xff]
        %v1554 = vld [vmem:[%s1550 + $0x18] sm:$0xff]
        %v1555 = vld [vmem:[%s1550 + $0x20] sm:$0xff]
        %v1556 = vld [vmem:[%s1550 + $0x28] sm:$0xff]
        %v1557 = vld [vmem:[%s1550 + $0x30] sm:$0xff]
        %v1558 = vld [vmem:[%s1550 + $0x38] sm:$0xff]
        %v1559 = vld [vmem:[%s1550 + $0x40] sm:$0xff]
        %v1560 = vld [vmem:[%s1550 + $0x48] sm:$0xff]
        %v1561 = vld [vmem:[%s1550 + $0x50] sm:$0xff]
        %v1562 = vld [vmem:[%s1550 + $0x58] sm:$0xff]
        %v1563 = vld [vmem:[%s1550 + $0x60] sm:$0xff]
        %v1564 = vld [vmem:[%s1550 + $0x68] sm:$0xff]
        %v1565 = vld [vmem:[%s1550 + $0x70] sm:$0xff]
        %v1566 = vld [vmem:[%s1550 + $0x78] sm:$0xff]
        %1567 = vmatprep.subr.mxu0 0.0
        %1568 = vmatpush1.msra.mxu0 %v1551
        %1569 = vmatprep.subr.mxu0 0.0
        %1570 = vmatpush1.msra.mxu0 %v1552
        %1571 = vmatprep.subr.mxu0 0.0
        %1572 = vmatpush1.msra.mxu0 %v1553
        %1573 = vmatprep.subr.mxu0 0.0
        %1574 = vmatpush1.msra.mxu0 %v1554
        %1575 = vmatprep.subr.mxu0 0.0
        %1576 = vmatpush1.msra.mxu0 %v1555
        %1577 = vmatprep.subr.mxu0 0.0
        %1578 = vmatpush1.msra.mxu0 %v1556
        %1579 = vmatprep.subr.mxu0 0.0
        %1580 = vmatpush1.msra.mxu0 %v1557
        %1581 = vmatprep.subr.mxu0 0.0
        %1582 = vmatpush1.msra.mxu0 %v1558
        %1583 = vmatprep.subr.mxu0 0.0
        %1584 = vmatpush1.msra.mxu0 %v1559
        %1585 = vmatprep.subr.mxu0 0.0
        %1586 = vmatpush1.msra.mxu0 %v1560
        %1587 = vmatprep.subr.mxu0 0.0
        %1588 = vmatpush1.msra.mxu0 %v1561
        %1589 = vmatprep.subr.mxu0 0.0
        %1590 = vmatpush1.msra.mxu0 %v1562
        %1591 = vmatprep.subr.mxu0 0.0
        %1592 = vmatpush1.msra.mxu0 %v1563
        %1593 = vmatprep.subr.mxu0 0.0
        %1594 = vmatpush1.msra.mxu0 %v1564
        %1595 = vmatprep.subr.mxu0 0.0
        %1596 = vmatpush1.msra.mxu0 %v1565
        %1597 = vmatprep.subr.mxu0 0.0
        %1598 = vmatpush1.msra.mxu0 %v1566
        %1599 = vmatprep.subr.mxu0 0.0
        %1600 = vmatpush1.msra.mxu0 0.0
        %1601 = vmatprep.subr.mxu0 0.0
        %1602 = vmatpush1.msra.mxu0 0.0
        %1603 = vmatprep.subr.mxu0 0.0
        %1604 = vmatpush1.msra.mxu0 0.0
        %1605 = vmatprep.subr.mxu0 0.0
        %1606 = vmatpush1.msra.mxu0 0.0
        %1607 = vmatprep.subr.mxu0 0.0
        %1608 = vmatpush1.msra.mxu0 0.0
        %1609 = vmatprep.subr.mxu0 0.0
        %1610 = vmatpush1.msra.mxu0 0.0
        %1611 = vmatprep.subr.mxu0 0.0
        %1612 = vmatpush1.msra.mxu0 0.0
        %1613 = vmatprep.subr.mxu0 0.0
        %1614 = vmatpush1.msra.mxu0 0.0
        %1615 = vmatprep.subr.mxu0 0.0
        %1616 = vmatpush1.msra.mxu0 0.0
        %1617 = vmatprep.subr.mxu0 0.0
        %1618 = vmatpush1.msra.mxu0 0.0
        %1619 = vmatprep.subr.mxu0 0.0
        %1620 = vmatpush1.msra.mxu0 0.0
        %1621 = vmatprep.subr.mxu0 0.0
        %1622 = vmatpush1.msra.mxu0 0.0
        %1623 = vmatprep.subr.mxu0 0.0
        %1624 = vmatpush1.msra.mxu0 0.0
        %1625 = vmatprep.subr.mxu0 0.0
        %1626 = vmatpush1.msra.mxu0 0.0
        %1627 = vmatprep.subr.mxu0 0.0
        %1628 = vmatpush1.msra.mxu0 0.0
        %1629 = vmatprep.subr.mxu0 0.0
        %1630 = vmatpush1.msra.mxu0 0.0
        %1631 = vmatprep.mubr.f32.mxu0 0.0
        %1632 = vmatmul.mubr.f32.gmra.mrb[0].mxu0 %v1534
        %v1633 = vpop.f32.mrb[0].mxu0
        %v1634 = vadd.f32 0.0, %v1633
        %v1635 = vpop.f32.mrb[0].mxu0
        %1636 = vmatprep.mubr.f32.mxu0 0.0
        %1637 = vmatmul.mubr.f32.gmra.mrb[0].mxu0 %v1535
        %v1638 = vpop.f32.mrb[0].mxu0
        %v1639 = vadd.f32 0.0, %v1638
        %v1640 = vpop.f32.mrb[0].mxu0
        %1641 = vmatprep.mubr.f32.mxu0 0.0
        %1642 = vmatmul.mubr.f32.gmra.mrb[0].mxu0 %v1536
        %v1643 = vpop.f32.mrb[0].mxu0
        %v1644 = vadd.f32 0.0, %v1643
        %v1645 = vpop.f32.mrb[0].mxu0
        %1646 = vmatprep.mubr.f32.mxu0 0.0
        %1647 = vmatmul.mubr.f32.gmra.mrb[0].mxu0 %v1537
        %v1648 = vpop.f32.mrb[0].mxu0
        %v1649 = vadd.f32 0.0, %v1648
        %v1650 = vpop.f32.mrb[0].mxu0
        %1651 = vmatprep.mubr.f32.mxu0 0.0
        %1652 = vmatmul.mubr.f32.gmra.mrb[0].mxu0 %v1538
        %v1653 = vpop.f32.mrb[0].mxu0
        %v1654 = vadd.f32 0.0, %v1653
        %v1655 = vpop.f32.mrb[0].mxu0
        %1656 = vmatprep.mubr.f32.mxu0 0.0
        %1657 = vmatmul.mubr.f32.gmra.mrb[0].mxu0 %v1539
        %v1658 = vpop.f32.mrb[0].mxu0
        %v1659 = vadd.f32 0.0, %v1658
        %v1660 = vpop.f32.mrb[0].mxu0
        %1661 = vmatprep.mubr.f32.mxu0 0.0
        %1662 = vmatmul.mubr.f32.gmra.mrb[0].mxu0 %v1540
        %v1663 = vpop.f32.mrb[0].mxu0
        %v1664 = vadd.f32 0.0, %v1663
        %v1665 = vpop.f32.mrb[0].mxu0
        %1666 = vmatprep.mubr.f32.mxu0 0.0
        %1667 = vmatmul.mubr.f32.gmra.mrb[0].mxu0 %v1541
        %v1668 = vpop.f32.mrb[0].mxu0
        %v1669 = vadd.f32 0.0, %v1668
        %v1670 = vpop.f32.mrb[0].mxu0
        %1671 = vmatprep.mubr.f32.mxu0 0.0
        %1672 = vmatmul.mubr.f32.gmra.mrb[0].mxu0 %v1542
        %v1673 = vpop.f32.mrb[0].mxu0
        %v1674 = vadd.f32 0.0, %v1673
        %v1675 = vpop.f32.mrb[0].mxu0
        %1676 = vmatprep.mubr.f32.mxu0 0.0
        %1677 = vmatmul.mubr.f32.gmra.mrb[0].mxu0 %v1543
        %v1678 = vpop.f32.mrb[0].mxu0
        %v1679 = vadd.f32 0.0, %v1678
        %v1680 = vpop.f32.mrb[0].mxu0
        %1681 = vmatprep.mubr.f32.mxu0 0.0
        %1682 = vmatmul.mubr.f32.gmra.mrb[0].mxu0 %v1544
        %v1683 = vpop.f32.mrb[0].mxu0
        %v1684 = vadd.f32 0.0, %v1683
        %v1685 = vpop.f32.mrb[0].mxu0
        %1686 = vmatprep.mubr.f32.mxu0 0.0
        %1687 = vmatmul.mubr.f32.gmra.mrb[0].mxu0 %v1545
        %v1688 = vpop.f32.mrb[0].mxu0
        %v1689 = vadd.f32 0.0, %v1688
        %v1690 = vpop.f32.mrb[0].mxu0
        %1691 = vmatprep.mubr.f32.mxu0 0.0
        %1692 = vmatmul.mubr.f32.gmra.mrb[0].mxu0 %v1546
        %v1693 = vpop.f32.mrb[0].mxu0
        %v1694 = vadd.f32 0.0, %v1693
        %v1695 = vpop.f32.mrb[0].mxu0
        %1696 = vmatprep.mubr.f32.mxu0 0.0
        %1697 = vmatmul.mubr.f32.gmra.mrb[0].mxu0 %v1547
        %v1698 = vpop.f32.mrb[0].mxu0
        %v1699 = vadd.f32 0.0, %v1698
        %v1700 = vpop.f32.mrb[0].mxu0
        %1701 = vmatprep.mubr.f32.mxu0 0.0
        %1702 = vmatmul.mubr.f32.gmra.mrb[0].mxu0 %v1548
        %v1703 = vpop.f32.mrb[0].mxu0
        %v1704 = vadd.f32 0.0, %v1703
        %v1705 = vpop.f32.mrb[0].mxu0
        %1706 = vmatprep.mubr.f32.mxu0 0.0
        %1707 = vmatmul.mubr.f32.gmra.mrb[0].mxu0 %v1549
        %v1708 = vpop.f32.mrb[0].mxu0
        %v1709 = vadd.f32 0.0, %v1708
        %v1710 = vpop.f32.mrb[0].mxu0
        %1711 = vdwg.mxu0
        %v1712 = vadd.f32 %v1518, %v1634
        %v1713 = vadd.f32 %v1519, %v1639
        %v1714 = vadd.f32 %v1520, %v1644
        %v1715 = vadd.f32 %v1521, %v1649
        %v1716 = vadd.f32 %v1522, %v1654
        %v1717 = vadd.f32 %v1523, %v1659
        %v1718 = vadd.f32 %v1524, %v1664
        %v1719 = vadd.f32 %v1525, %v1669
        %v1720 = vadd.f32 %v1526, %v1674
        %v1721 = vadd.f32 %v1527, %v1679
        %v1722 = vadd.f32 %v1528, %v1684
        %v1723 = vadd.f32 %v1529, %v1689
        %v1724 = vadd.f32 %v1530, %v1694
        %v1725 = vadd.f32 %v1531, %v1699
        %v1726 = vadd.f32 %v1532, %v1704
        %v1727 = vadd.f32 %v1533, %v1709
        %v1728 = vld [vmem:[%s1339 + $0x2] sm:$0xff]
        %v1729 = vld [vmem:[%s1339 + $0xa] sm:$0xff]
        %v1730 = vld [vmem:[%s1339 + $0x1a] sm:$0xff]
        %v1731 = vld [vmem:[%s1339 + $0x22] sm:$0xff]
        %v1732 = vld [vmem:[%s1339 + $0x32] sm:$0xff]
        %v1733 = vld [vmem:[%s1339 + $0x3a] sm:$0xff]
        %v1734 = vld [vmem:[%s1339 + $0x4a] sm:$0xff]
        %v1735 = vld [vmem:[%s1339 + $0x52] sm:$0xff]
        %v1736 = vld [vmem:[%s1339 + $0x62] sm:$0xff]
        %v1737 = vld [vmem:[%s1339 + $0x6a] sm:$0xff]
        %v1738 = vld [vmem:[%s1339 + $0x7a] sm:$0xff]
        %v1739 = vld [vmem:[%s1339 + $0x82] sm:$0xff]
        %v1740 = vld [vmem:[%s1339 + $0x92] sm:$0xff]
        %v1741 = vld [vmem:[%s1339 + $0x9a] sm:$0xff]
        %v1742 = vld [vmem:[%s1339 + $0xaa] sm:$0xff]
        %v1743 = vld [vmem:[%s1339 + $0xb2] sm:$0xff]
        %s1744 = scalar_lea.vmem [#allocation8], 640
        %v1745 = vld [vmem:[%s1744] sm:$0xff]
        %v1746 = vld [vmem:[%s1744 + $0x8] sm:$0xff]
        %v1747 = vld [vmem:[%s1744 + $0x10] sm:$0xff]
        %v1748 = vld [vmem:[%s1744 + $0x18] sm:$0xff]
        %v1749 = vld [vmem:[%s1744 + $0x20] sm:$0xff]
        %v1750 = vld [vmem:[%s1744 + $0x28] sm:$0xff]
        %v1751 = vld [vmem:[%s1744 + $0x30] sm:$0xff]
        %v1752 = vld [vmem:[%s1744 + $0x38] sm:$0xff]
        %v1753 = vld [vmem:[%s1744 + $0x40] sm:$0xff]
        %v1754 = vld [vmem:[%s1744 + $0x48] sm:$0xff]
        %v1755 = vld [vmem:[%s1744 + $0x50] sm:$0xff]
        %v1756 = vld [vmem:[%s1744 + $0x58] sm:$0xff]
        %v1757 = vld [vmem:[%s1744 + $0x60] sm:$0xff]
        %v1758 = vld [vmem:[%s1744 + $0x68] sm:$0xff]
        %v1759 = vld [vmem:[%s1744 + $0x70] sm:$0xff]
        %v1760 = vld [vmem:[%s1744 + $0x78] sm:$0xff]
        %1761 = vmatprep.subr.mxu0 0.0
        %1762 = vmatpush1.msra.mxu0 %v1745
        %1763 = vmatprep.subr.mxu0 0.0
        %1764 = vmatpush1.msra.mxu0 %v1746
        %1765 = vmatprep.subr.mxu0 0.0
        %1766 = vmatpush1.msra.mxu0 %v1747
        %1767 = vmatprep.subr.mxu0 0.0
        %1768 = vmatpush1.msra.mxu0 %v1748
        %1769 = vmatprep.subr.mxu0 0.0
        %1770 = vmatpush1.msra.mxu0 %v1749
        %1771 = vmatprep.subr.mxu0 0.0
        %1772 = vmatpush1.msra.mxu0 %v1750
        %1773 = vmatprep.subr.mxu0 0.0
        %1774 = vmatpush1.msra.mxu0 %v1751
        %1775 = vmatprep.subr.mxu0 0.0
        %1776 = vmatpush1.msra.mxu0 %v1752
        %1777 = vmatprep.subr.mxu0 0.0
        %1778 = vmatpush1.msra.mxu0 %v1753
        %1779 = vmatprep.subr.mxu0 0.0
        %1780 = vmatpush1.msra.mxu0 %v1754
        %1781 = vmatprep.subr.mxu0 0.0
        %1782 = vmatpush1.msra.mxu0 %v1755
        %1783 = vmatprep.subr.mxu0 0.0
        %1784 = vmatpush1.msra.mxu0 %v1756
        %1785 = vmatprep.subr.mxu0 0.0
        %1786 = vmatpush1.msra.mxu0 %v1757
        %1787 = vmatprep.subr.mxu0 0.0
        %1788 = vmatpush1.msra.mxu0 %v1758
        %1789 = vmatprep.subr.mxu0 0.0
        %1790 = vmatpush1.msra.mxu0 %v1759
        %1791 = vmatprep.subr.mxu0 0.0
        %1792 = vmatpush1.msra.mxu0 %v1760
        %1793 = vmatprep.subr.mxu0 0.0
        %1794 = vmatpush1.msra.mxu0 0.0
        %1795 = vmatprep.subr.mxu0 0.0
        %1796 = vmatpush1.msra.mxu0 0.0
        %1797 = vmatprep.subr.mxu0 0.0
        %1798 = vmatpush1.msra.mxu0 0.0
        %1799 = vmatprep.subr.mxu0 0.0
        %1800 = vmatpush1.msra.mxu0 0.0
        %1801 = vmatprep.subr.mxu0 0.0
        %1802 = vmatpush1.msra.mxu0 0.0
        %1803 = vmatprep.subr.mxu0 0.0
        %1804 = vmatpush1.msra.mxu0 0.0
        %1805 = vmatprep.subr.mxu0 0.0
        %1806 = vmatpush1.msra.mxu0 0.0
        %1807 = vmatprep.subr.mxu0 0.0
        %1808 = vmatpush1.msra.mxu0 0.0
        %1809 = vmatprep.subr.mxu0 0.0
        %1810 = vmatpush1.msra.mxu0 0.0
        %1811 = vmatprep.subr.mxu0 0.0
        %1812 = vmatpush1.msra.mxu0 0.0
        %1813 = vmatprep.subr.mxu0 0.0
        %1814 = vmatpush1.msra.mxu0 0.0
        %1815 = vmatprep.subr.mxu0 0.0
        %1816 = vmatpush1.msra.mxu0 0.0
        %1817 = vmatprep.subr.mxu0 0.0
        %1818 = vmatpush1.msra.mxu0 0.0
        %1819 = vmatprep.subr.mxu0 0.0
        %1820 = vmatpush1.msra.mxu0 0.0
        %1821 = vmatprep.subr.mxu0 0.0
        %1822 = vmatpush1.msra.mxu0 0.0
        %1823 = vmatprep.subr.mxu0 0.0
        %1824 = vmatpush1.msra.mxu0 0.0
        %1825 = vmatprep.mubr.f32.mxu0 0.0
        %1826 = vmatmul.mubr.f32.gmra.mrb[0].mxu0 %v1728
        %v1827 = vpop.f32.mrb[0].mxu0
        %v1828 = vadd.f32 0.0, %v1827
        %v1829 = vpop.f32.mrb[0].mxu0
        %1830 = vmatprep.mubr.f32.mxu0 0.0
        %1831 = vmatmul.mubr.f32.gmra.mrb[0].mxu0 %v1729
        %v1832 = vpop.f32.mrb[0].mxu0
        %v1833 = vadd.f32 0.0, %v1832
        %v1834 = vpop.f32.mrb[0].mxu0
        %1835 = vmatprep.mubr.f32.mxu0 0.0
        %1836 = vmatmul.mubr.f32.gmra.mrb[0].mxu0 %v1730
        %v1837 = vpop.f32.mrb[0].mxu0
        %v1838 = vadd.f32 0.0, %v1837
        %v1839 = vpop.f32.mrb[0].mxu0
        %1840 = vmatprep.mubr.f32.mxu0 0.0
        %1841 = vmatmul.mubr.f32.gmra.mrb[0].mxu0 %v1731
        %v1842 = vpop.f32.mrb[0].mxu0
        %v1843 = vadd.f32 0.0, %v1842
        %v1844 = vpop.f32.mrb[0].mxu0
        %1845 = vmatprep.mubr.f32.mxu0 0.0
        %1846 = vmatmul.mubr.f32.gmra.mrb[0].mxu0 %v1732
        %v1847 = vpop.f32.mrb[0].mxu0
        %v1848 = vadd.f32 0.0, %v1847
        %v1849 = vpop.f32.mrb[0].mxu0
        %1850 = vmatprep.mubr.f32.mxu0 0.0
        %1851 = vmatmul.mubr.f32.gmra.mrb[0].mxu0 %v1733
        %v1852 = vpop.f32.mrb[0].mxu0
        %v1853 = vadd.f32 0.0, %v1852
        %v1854 = vpop.f32.mrb[0].mxu0
        %1855 = vmatprep.mubr.f32.mxu0 0.0
        %1856 = vmatmul.mubr.f32.gmra.mrb[0].mxu0 %v1734
        %v1857 = vpop.f32.mrb[0].mxu0
        %v1858 = vadd.f32 0.0, %v1857
        %v1859 = vpop.f32.mrb[0].mxu0
        %1860 = vmatprep.mubr.f32.mxu0 0.0
        %1861 = vmatmul.mubr.f32.gmra.mrb[0].mxu0 %v1735
        %v1862 = vpop.f32.mrb[0].mxu0
        %v1863 = vadd.f32 0.0, %v1862
        %v1864 = vpop.f32.mrb[0].mxu0
        %1865 = vmatprep.mubr.f32.mxu0 0.0
        %1866 = vmatmul.mubr.f32.gmra.mrb[0].mxu0 %v1736
        %v1867 = vpop.f32.mrb[0].mxu0
        %v1868 = vadd.f32 0.0, %v1867
        %v1869 = vpop.f32.mrb[0].mxu0
        %1870 = vmatprep.mubr.f32.mxu0 0.0
        %1871 = vmatmul.mubr.f32.gmra.mrb[0].mxu0 %v1737
        %v1872 = vpop.f32.mrb[0].mxu0
        %v1873 = vadd.f32 0.0, %v1872
        %v1874 = vpop.f32.mrb[0].mxu0
        %1875 = vmatprep.mubr.f32.mxu0 0.0
        %1876 = vmatmul.mubr.f32.gmra.mrb[0].mxu0 %v1738
        %v1877 = vpop.f32.mrb[0].mxu0
        %v1878 = vadd.f32 0.0, %v1877
        %v1879 = vpop.f32.mrb[0].mxu0
        %1880 = vmatprep.mubr.f32.mxu0 0.0
        %1881 = vmatmul.mubr.f32.gmra.mrb[0].mxu0 %v1739
        %v1882 = vpop.f32.mrb[0].mxu0
        %v1883 = vadd.f32 0.0, %v1882
        %v1884 = vpop.f32.mrb[0].mxu0
        %1885 = vmatprep.mubr.f32.mxu0 0.0
        %1886 = vmatmul.mubr.f32.gmra.mrb[0].mxu0 %v1740
        %v1887 = vpop.f32.mrb[0].mxu0
        %v1888 = vadd.f32 0.0, %v1887
        %v1889 = vpop.f32.mrb[0].mxu0
        %1890 = vmatprep.mubr.f32.mxu0 0.0
        %1891 = vmatmul.mubr.f32.gmra.mrb[0].mxu0 %v1741
        %v1892 = vpop.f32.mrb[0].mxu0
        %v1893 = vadd.f32 0.0, %v1892
        %v1894 = vpop.f32.mrb[0].mxu0
        %1895 = vmatprep.mubr.f32.mxu0 0.0
        %1896 = vmatmul.mubr.f32.gmra.mrb[0].mxu0 %v1742
        %v1897 = vpop.f32.mrb[0].mxu0
        %v1898 = vadd.f32 0.0, %v1897
        %v1899 = vpop.f32.mrb[0].mxu0
        %1900 = vmatprep.mubr.f32.mxu0 0.0
        %1901 = vmatmul.mubr.f32.gmra.mrb[0].mxu0 %v1743
        %v1902 = vpop.f32.mrb[0].mxu0
        %v1903 = vadd.f32 0.0, %v1902
        %v1904 = vpop.f32.mrb[0].mxu0
        %1905 = vdwg.mxu0
        %v1906 = vadd.f32 %v1712, %v1828
        %v1907 = vadd.f32 %v1713, %v1833
        %v1908 = vadd.f32 %v1714, %v1838
        %v1909 = vadd.f32 %v1715, %v1843
        %v1910 = vadd.f32 %v1716, %v1848
        %v1911 = vadd.f32 %v1717, %v1853
        %v1912 = vadd.f32 %v1718, %v1858
        %v1913 = vadd.f32 %v1719, %v1863
        %v1914 = vadd.f32 %v1720, %v1868
        %v1915 = vadd.f32 %v1721, %v1873
        %v1916 = vadd.f32 %v1722, %v1878
        %v1917 = vadd.f32 %v1723, %v1883
        %v1918 = vadd.f32 %v1724, %v1888
        %v1919 = vadd.f32 %v1725, %v1893
        %v1920 = vadd.f32 %v1726, %v1898
        %v1921 = vadd.f32 %v1727, %v1903
        %s1922 = sadd.s32 %s785, 2
        %s1923 = smul.u32 %s1922, 24
        %s1924 = scalar_lea.vmem [#allocation2], %s1923
        %v1925 = vld [vmem:[%s1924] sm:$0xff]
        %v1926 = vld [vmem:[%s1924 + $0x8] sm:$0xff]
        %v1927 = vld [vmem:[%s1924 + $0x18] sm:$0xff]
        %v1928 = vld [vmem:[%s1924 + $0x20] sm:$0xff]
        %v1929 = vld [vmem:[%s1924 + $0x30] sm:$0xff]
        %v1930 = vld [vmem:[%s1924 + $0x38] sm:$0xff]
        %v1931 = vld [vmem:[%s1924 + $0x48] sm:$0xff]
        %v1932 = vld [vmem:[%s1924 + $0x50] sm:$0xff]
        %v1933 = vld [vmem:[%s1924 + $0x60] sm:$0xff]
        %v1934 = vld [vmem:[%s1924 + $0x68] sm:$0xff]
        %v1935 = vld [vmem:[%s1924 + $0x78] sm:$0xff]
        %v1936 = vld [vmem:[%s1924 + $0x80] sm:$0xff]
        %v1937 = vld [vmem:[%s1924 + $0x90] sm:$0xff]
        %v1938 = vld [vmem:[%s1924 + $0x98] sm:$0xff]
        %v1939 = vld [vmem:[%s1924 + $0xa8] sm:$0xff]
        %v1940 = vld [vmem:[%s1924 + $0xb0] sm:$0xff]
        %s1941 = scalar_lea.vmem [#allocation8], 768
        %v1942 = vld [vmem:[%s1941] sm:$0xff]
        %v1943 = vld [vmem:[%s1941 + $0x8] sm:$0xff]
        %v1944 = vld [vmem:[%s1941 + $0x10] sm:$0xff]
        %v1945 = vld [vmem:[%s1941 + $0x18] sm:$0xff]
        %v1946 = vld [vmem:[%s1941 + $0x20] sm:$0xff]
        %v1947 = vld [vmem:[%s1941 + $0x28] sm:$0xff]
        %v1948 = vld [vmem:[%s1941 + $0x30] sm:$0xff]
        %v1949 = vld [vmem:[%s1941 + $0x38] sm:$0xff]
        %v1950 = vld [vmem:[%s1941 + $0x40] sm:$0xff]
        %v1951 = vld [vmem:[%s1941 + $0x48] sm:$0xff]
        %v1952 = vld [vmem:[%s1941 + $0x50] sm:$0xff]
        %v1953 = vld [vmem:[%s1941 + $0x58] sm:$0xff]
        %v1954 = vld [vmem:[%s1941 + $0x60] sm:$0xff]
        %v1955 = vld [vmem:[%s1941 + $0x68] sm:$0xff]
        %v1956 = vld [vmem:[%s1941 + $0x70] sm:$0xff]
        %v1957 = vld [vmem:[%s1941 + $0x78] sm:$0xff]
        %1958 = vmatprep.subr.mxu0 0.0
        %1959 = vmatpush1.msra.mxu0 %v1942
        %1960 = vmatprep.subr.mxu0 0.0
        %1961 = vmatpush1.msra.mxu0 %v1943
        %1962 = vmatprep.subr.mxu0 0.0
        %1963 = vmatpush1.msra.mxu0 %v1944
        %1964 = vmatprep.subr.mxu0 0.0
        %1965 = vmatpush1.msra.mxu0 %v1945
        %1966 = vmatprep.subr.mxu0 0.0
        %1967 = vmatpush1.msra.mxu0 %v1946
        %1968 = vmatprep.subr.mxu0 0.0
        %1969 = vmatpush1.msra.mxu0 %v1947
        %1970 = vmatprep.subr.mxu0 0.0
        %1971 = vmatpush1.msra.mxu0 %v1948
        %1972 = vmatprep.subr.mxu0 0.0
        %1973 = vmatpush1.msra.mxu0 %v1949
        %1974 = vmatprep.subr.mxu0 0.0
        %1975 = vmatpush1.msra.mxu0 %v1950
        %1976 = vmatprep.subr.mxu0 0.0
        %1977 = vmatpush1.msra.mxu0 %v1951
        %1978 = vmatprep.subr.mxu0 0.0
        %1979 = vmatpush1.msra.mxu0 %v1952
        %1980 = vmatprep.subr.mxu0 0.0
        %1981 = vmatpush1.msra.mxu0 %v1953
        %1982 = vmatprep.subr.mxu0 0.0
        %1983 = vmatpush1.msra.mxu0 %v1954
        %1984 = vmatprep.subr.mxu0 0.0
        %1985 = vmatpush1.msra.mxu0 %v1955
        %1986 = vmatprep.subr.mxu0 0.0
        %1987 = vmatpush1.msra.mxu0 %v1956
        %1988 = vmatprep.subr.mxu0 0.0
        %1989 = vmatpush1.msra.mxu0 %v1957
        %1990 = vmatprep.subr.mxu0 0.0
        %1991 = vmatpush1.msra.mxu0 0.0
        %1992 = vmatprep.subr.mxu0 0.0
        %1993 = vmatpush1.msra.mxu0 0.0
        %1994 = vmatprep.subr.mxu0 0.0
        %1995 = vmatpush1.msra.mxu0 0.0
        %1996 = vmatprep.subr.mxu0 0.0
        %1997 = vmatpush1.msra.mxu0 0.0
        %1998 = vmatprep.subr.mxu0 0.0
        %1999 = vmatpush1.msra.mxu0 0.0
        %2000 = vmatprep.subr.mxu0 0.0
        %2001 = vmatpush1.msra.mxu0 0.0
        %2002 = vmatprep.subr.mxu0 0.0
        %2003 = vmatpush1.msra.mxu0 0.0
        %2004 = vmatprep.subr.mxu0 0.0
        %2005 = vmatpush1.msra.mxu0 0.0
        %2006 = vmatprep.subr.mxu0 0.0
        %2007 = vmatpush1.msra.mxu0 0.0
        %2008 = vmatprep.subr.mxu0 0.0
        %2009 = vmatpush1.msra.mxu0 0.0
        %2010 = vmatprep.subr.mxu0 0.0
        %2011 = vmatpush1.msra.mxu0 0.0
        %2012 = vmatprep.subr.mxu0 0.0
        %2013 = vmatpush1.msra.mxu0 0.0
        %2014 = vmatprep.subr.mxu0 0.0
        %2015 = vmatpush1.msra.mxu0 0.0
        %2016 = vmatprep.subr.mxu0 0.0
        %2017 = vmatpush1.msra.mxu0 0.0
        %2018 = vmatprep.subr.mxu0 0.0
        %2019 = vmatpush1.msra.mxu0 0.0
        %2020 = vmatprep.subr.mxu0 0.0
        %2021 = vmatpush1.msra.mxu0 0.0
        %2022 = vmatprep.mubr.f32.mxu0 0.0
        %2023 = vmatmul.mubr.f32.gmra.mrb[0].mxu0 %v1925
        %v2024 = vpop.f32.mrb[0].mxu0
        %v2025 = vadd.f32 0.0, %v2024
        %v2026 = vpop.f32.mrb[0].mxu0
        %2027 = vmatprep.mubr.f32.mxu0 0.0
        %2028 = vmatmul.mubr.f32.gmra.mrb[0].mxu0 %v1926
        %v2029 = vpop.f32.mrb[0].mxu0
        %v2030 = vadd.f32 0.0, %v2029
        %v2031 = vpop.f32.mrb[0].mxu0
        %2032 = vmatprep.mubr.f32.mxu0 0.0
        %2033 = vmatmul.mubr.f32.gmra.mrb[0].mxu0 %v1927
        %v2034 = vpop.f32.mrb[0].mxu0
        %v2035 = vadd.f32 0.0, %v2034
        %v2036 = vpop.f32.mrb[0].mxu0
        %2037 = vmatprep.mubr.f32.mxu0 0.0
        %2038 = vmatmul.mubr.f32.gmra.mrb[0].mxu0 %v1928
        %v2039 = vpop.f32.mrb[0].mxu0
        %v2040 = vadd.f32 0.0, %v2039
        %v2041 = vpop.f32.mrb[0].mxu0
        %2042 = vmatprep.mubr.f32.mxu0 0.0
        %2043 = vmatmul.mubr.f32.gmra.mrb[0].mxu0 %v1929
        %v2044 = vpop.f32.mrb[0].mxu0
        %v2045 = vadd.f32 0.0, %v2044
        %v2046 = vpop.f32.mrb[0].mxu0
        %2047 = vmatprep.mubr.f32.mxu0 0.0
        %2048 = vmatmul.mubr.f32.gmra.mrb[0].mxu0 %v1930
        %v2049 = vpop.f32.mrb[0].mxu0
        %v2050 = vadd.f32 0.0, %v2049
        %v2051 = vpop.f32.mrb[0].mxu0
        %2052 = vmatprep.mubr.f32.mxu0 0.0
        %2053 = vmatmul.mubr.f32.gmra.mrb[0].mxu0 %v1931
        %v2054 = vpop.f32.mrb[0].mxu0
        %v2055 = vadd.f32 0.0, %v2054
        %v2056 = vpop.f32.mrb[0].mxu0
        %2057 = vmatprep.mubr.f32.mxu0 0.0
        %2058 = vmatmul.mubr.f32.gmra.mrb[0].mxu0 %v1932
        %v2059 = vpop.f32.mrb[0].mxu0
        %v2060 = vadd.f32 0.0, %v2059
        %v2061 = vpop.f32.mrb[0].mxu0
        %2062 = vmatprep.mubr.f32.mxu0 0.0
        %2063 = vmatmul.mubr.f32.gmra.mrb[0].mxu0 %v1933
        %v2064 = vpop.f32.mrb[0].mxu0
        %v2065 = vadd.f32 0.0, %v2064
        %v2066 = vpop.f32.mrb[0].mxu0
        %2067 = vmatprep.mubr.f32.mxu0 0.0
        %2068 = vmatmul.mubr.f32.gmra.mrb[0].mxu0 %v1934
        %v2069 = vpop.f32.mrb[0].mxu0
        %v2070 = vadd.f32 0.0, %v2069
        %v2071 = vpop.f32.mrb[0].mxu0
        %2072 = vmatprep.mubr.f32.mxu0 0.0
        %2073 = vmatmul.mubr.f32.gmra.mrb[0].mxu0 %v1935
        %v2074 = vpop.f32.mrb[0].mxu0
        %v2075 = vadd.f32 0.0, %v2074
        %v2076 = vpop.f32.mrb[0].mxu0
        %2077 = vmatprep.mubr.f32.mxu0 0.0
        %2078 = vmatmul.mubr.f32.gmra.mrb[0].mxu0 %v1936
        %v2079 = vpop.f32.mrb[0].mxu0
        %v2080 = vadd.f32 0.0, %v2079
        %v2081 = vpop.f32.mrb[0].mxu0
        %2082 = vmatprep.mubr.f32.mxu0 0.0
        %2083 = vmatmul.mubr.f32.gmra.mrb[0].mxu0 %v1937
        %v2084 = vpop.f32.mrb[0].mxu0
        %v2085 = vadd.f32 0.0, %v2084
        %v2086 = vpop.f32.mrb[0].mxu0
        %2087 = vmatprep.mubr.f32.mxu0 0.0
        %2088 = vmatmul.mubr.f32.gmra.mrb[0].mxu0 %v1938
        %v2089 = vpop.f32.mrb[0].mxu0
        %v2090 = vadd.f32 0.0, %v2089
        %v2091 = vpop.f32.mrb[0].mxu0
        %2092 = vmatprep.mubr.f32.mxu0 0.0
        %2093 = vmatmul.mubr.f32.gmra.mrb[0].mxu0 %v1939
        %v2094 = vpop.f32.mrb[0].mxu0
        %v2095 = vadd.f32 0.0, %v2094
        %v2096 = vpop.f32.mrb[0].mxu0
        %2097 = vmatprep.mubr.f32.mxu0 0.0
        %2098 = vmatmul.mubr.f32.gmra.mrb[0].mxu0 %v1940
        %v2099 = vpop.f32.mrb[0].mxu0
        %v2100 = vadd.f32 0.0, %v2099
        %v2101 = vpop.f32.mrb[0].mxu0
        %2102 = vdwg.mxu0
        %v2103 = vadd.f32 %v1906, %v2025
        %v2104 = vadd.f32 %v1907, %v2030
        %v2105 = vadd.f32 %v1908, %v2035
        %v2106 = vadd.f32 %v1909, %v2040
        %v2107 = vadd.f32 %v1910, %v2045
        %v2108 = vadd.f32 %v1911, %v2050
        %v2109 = vadd.f32 %v1912, %v2055
        %v2110 = vadd.f32 %v1913, %v2060
        %v2111 = vadd.f32 %v1914, %v2065
        %v2112 = vadd.f32 %v1915, %v2070
        %v2113 = vadd.f32 %v1916, %v2075
        %v2114 = vadd.f32 %v1917, %v2080
        %v2115 = vadd.f32 %v1918, %v2085
        %v2116 = vadd.f32 %v1919, %v2090
        %v2117 = vadd.f32 %v1920, %v2095
        %v2118 = vadd.f32 %v1921, %v2100
        %v2119 = vld [vmem:[%s1924 + $0x1] sm:$0xff]
        %v2120 = vld [vmem:[%s1924 + $0x9] sm:$0xff]
        %v2121 = vld [vmem:[%s1924 + $0x19] sm:$0xff]
        %v2122 = vld [vmem:[%s1924 + $0x21] sm:$0xff]
        %v2123 = vld [vmem:[%s1924 + $0x31] sm:$0xff]
        %v2124 = vld [vmem:[%s1924 + $0x39] sm:$0xff]
        %v2125 = vld [vmem:[%s1924 + $0x49] sm:$0xff]
        %v2126 = vld [vmem:[%s1924 + $0x51] sm:$0xff]
        %v2127 = vld [vmem:[%s1924 + $0x61] sm:$0xff]
        %v2128 = vld [vmem:[%s1924 + $0x69] sm:$0xff]
        %v2129 = vld [vmem:[%s1924 + $0x79] sm:$0xff]
        %v2130 = vld [vmem:[%s1924 + $0x81] sm:$0xff]
        %v2131 = vld [vmem:[%s1924 + $0x91] sm:$0xff]
        %v2132 = vld [vmem:[%s1924 + $0x99] sm:$0xff]
        %v2133 = vld [vmem:[%s1924 + $0xa9] sm:$0xff]
        %v2134 = vld [vmem:[%s1924 + $0xb1] sm:$0xff]
        %s2135 = scalar_lea.vmem [#allocation8], 896
        %v2136 = vld [vmem:[%s2135] sm:$0xff]
        %v2137 = vld [vmem:[%s2135 + $0x8] sm:$0xff]
        %v2138 = vld [vmem:[%s2135 + $0x10] sm:$0xff]
        %v2139 = vld [vmem:[%s2135 + $0x18] sm:$0xff]
        %v2140 = vld [vmem:[%s2135 + $0x20] sm:$0xff]
        %v2141 = vld [vmem:[%s2135 + $0x28] sm:$0xff]
        %v2142 = vld [vmem:[%s2135 + $0x30] sm:$0xff]
        %v2143 = vld [vmem:[%s2135 + $0x38] sm:$0xff]
        %v2144 = vld [vmem:[%s2135 + $0x40] sm:$0xff]
        %v2145 = vld [vmem:[%s2135 + $0x48] sm:$0xff]
        %v2146 = vld [vmem:[%s2135 + $0x50] sm:$0xff]
        %v2147 = vld [vmem:[%s2135 + $0x58] sm:$0xff]
        %v2148 = vld [vmem:[%s2135 + $0x60] sm:$0xff]
        %v2149 = vld [vmem:[%s2135 + $0x68] sm:$0xff]
        %v2150 = vld [vmem:[%s2135 + $0x70] sm:$0xff]
        %v2151 = vld [vmem:[%s2135 + $0x78] sm:$0xff]
        %2152 = vmatprep.subr.mxu0 0.0
        %2153 = vmatpush1.msra.mxu0 %v2136
        %2154 = vmatprep.subr.mxu0 0.0
        %2155 = vmatpush1.msra.mxu0 %v2137
        %2156 = vmatprep.subr.mxu0 0.0
        %2157 = vmatpush1.msra.mxu0 %v2138
        %2158 = vmatprep.subr.mxu0 0.0
        %2159 = vmatpush1.msra.mxu0 %v2139
        %2160 = vmatprep.subr.mxu0 0.0
        %2161 = vmatpush1.msra.mxu0 %v2140
        %2162 = vmatprep.subr.mxu0 0.0
        %2163 = vmatpush1.msra.mxu0 %v2141
        %2164 = vmatprep.subr.mxu0 0.0
        %2165 = vmatpush1.msra.mxu0 %v2142
        %2166 = vmatprep.subr.mxu0 0.0
        %2167 = vmatpush1.msra.mxu0 %v2143
        %2168 = vmatprep.subr.mxu0 0.0
        %2169 = vmatpush1.msra.mxu0 %v2144
        %2170 = vmatprep.subr.mxu0 0.0
        %2171 = vmatpush1.msra.mxu0 %v2145
        %2172 = vmatprep.subr.mxu0 0.0
        %2173 = vmatpush1.msra.mxu0 %v2146
        %2174 = vmatprep.subr.mxu0 0.0
        %2175 = vmatpush1.msra.mxu0 %v2147
        %2176 = vmatprep.subr.mxu0 0.0
        %2177 = vmatpush1.msra.mxu0 %v2148
        %2178 = vmatprep.subr.mxu0 0.0
        %2179 = vmatpush1.msra.mxu0 %v2149
        %2180 = vmatprep.subr.mxu0 0.0
        %2181 = vmatpush1.msra.mxu0 %v2150
        %2182 = vmatprep.subr.mxu0 0.0
        %2183 = vmatpush1.msra.mxu0 %v2151
        %2184 = vmatprep.subr.mxu0 0.0
        %2185 = vmatpush1.msra.mxu0 0.0
        %2186 = vmatprep.subr.mxu0 0.0
        %2187 = vmatpush1.msra.mxu0 0.0
        %2188 = vmatprep.subr.mxu0 0.0
        %2189 = vmatpush1.msra.mxu0 0.0
        %2190 = vmatprep.subr.mxu0 0.0
        %2191 = vmatpush1.msra.mxu0 0.0
        %2192 = vmatprep.subr.mxu0 0.0
        %2193 = vmatpush1.msra.mxu0 0.0
        %2194 = vmatprep.subr.mxu0 0.0
        %2195 = vmatpush1.msra.mxu0 0.0
        %2196 = vmatprep.subr.mxu0 0.0
        %2197 = vmatpush1.msra.mxu0 0.0
        %2198 = vmatprep.subr.mxu0 0.0
        %2199 = vmatpush1.msra.mxu0 0.0
        %2200 = vmatprep.subr.mxu0 0.0
        %2201 = vmatpush1.msra.mxu0 0.0
        %2202 = vmatprep.subr.mxu0 0.0
        %2203 = vmatpush1.msra.mxu0 0.0
        %2204 = vmatprep.subr.mxu0 0.0
        %2205 = vmatpush1.msra.mxu0 0.0
        %2206 = vmatprep.subr.mxu0 0.0
        %2207 = vmatpush1.msra.mxu0 0.0
        %2208 = vmatprep.subr.mxu0 0.0
        %2209 = vmatpush1.msra.mxu0 0.0
        %2210 = vmatprep.subr.mxu0 0.0
        %2211 = vmatpush1.msra.mxu0 0.0
        %2212 = vmatprep.subr.mxu0 0.0
        %2213 = vmatpush1.msra.mxu0 0.0
        %2214 = vmatprep.subr.mxu0 0.0
        %2215 = vmatpush1.msra.mxu0 0.0
        %2216 = vmatprep.mubr.f32.mxu0 0.0
        %2217 = vmatmul.mubr.f32.gmra.mrb[0].mxu0 %v2119
        %v2218 = vpop.f32.mrb[0].mxu0
        %v2219 = vadd.f32 0.0, %v2218
        %v2220 = vpop.f32.mrb[0].mxu0
        %2221 = vmatprep.mubr.f32.mxu0 0.0
        %2222 = vmatmul.mubr.f32.gmra.mrb[0].mxu0 %v2120
        %v2223 = vpop.f32.mrb[0].mxu0
        %v2224 = vadd.f32 0.0, %v2223
        %v2225 = vpop.f32.mrb[0].mxu0
        %2226 = vmatprep.mubr.f32.mxu0 0.0
        %2227 = vmatmul.mubr.f32.gmra.mrb[0].mxu0 %v2121
        %v2228 = vpop.f32.mrb[0].mxu0
        %v2229 = vadd.f32 0.0, %v2228
        %v2230 = vpop.f32.mrb[0].mxu0
        %2231 = vmatprep.mubr.f32.mxu0 0.0
        %2232 = vmatmul.mubr.f32.gmra.mrb[0].mxu0 %v2122
        %v2233 = vpop.f32.mrb[0].mxu0
        %v2234 = vadd.f32 0.0, %v2233
        %v2235 = vpop.f32.mrb[0].mxu0
        %2236 = vmatprep.mubr.f32.mxu0 0.0
        %2237 = vmatmul.mubr.f32.gmra.mrb[0].mxu0 %v2123
        %v2238 = vpop.f32.mrb[0].mxu0
        %v2239 = vadd.f32 0.0, %v2238
        %v2240 = vpop.f32.mrb[0].mxu0
        %2241 = vmatprep.mubr.f32.mxu0 0.0
        %2242 = vmatmul.mubr.f32.gmra.mrb[0].mxu0 %v2124
        %v2243 = vpop.f32.mrb[0].mxu0
        %v2244 = vadd.f32 0.0, %v2243
        %v2245 = vpop.f32.mrb[0].mxu0
        %2246 = vmatprep.mubr.f32.mxu0 0.0
        %2247 = vmatmul.mubr.f32.gmra.mrb[0].mxu0 %v2125
        %v2248 = vpop.f32.mrb[0].mxu0
        %v2249 = vadd.f32 0.0, %v2248
        %v2250 = vpop.f32.mrb[0].mxu0
        %2251 = vmatprep.mubr.f32.mxu0 0.0
        %2252 = vmatmul.mubr.f32.gmra.mrb[0].mxu0 %v2126
        %v2253 = vpop.f32.mrb[0].mxu0
        %v2254 = vadd.f32 0.0, %v2253
        %v2255 = vpop.f32.mrb[0].mxu0
        %2256 = vmatprep.mubr.f32.mxu0 0.0
        %2257 = vmatmul.mubr.f32.gmra.mrb[0].mxu0 %v2127
        %v2258 = vpop.f32.mrb[0].mxu0
        %v2259 = vadd.f32 0.0, %v2258
        %v2260 = vpop.f32.mrb[0].mxu0
        %2261 = vmatprep.mubr.f32.mxu0 0.0
        %2262 = vmatmul.mubr.f32.gmra.mrb[0].mxu0 %v2128
        %v2263 = vpop.f32.mrb[0].mxu0
        %v2264 = vadd.f32 0.0, %v2263
        %v2265 = vpop.f32.mrb[0].mxu0
        %2266 = vmatprep.mubr.f32.mxu0 0.0
        %2267 = vmatmul.mubr.f32.gmra.mrb[0].mxu0 %v2129
        %v2268 = vpop.f32.mrb[0].mxu0
        %v2269 = vadd.f32 0.0, %v2268
        %v2270 = vpop.f32.mrb[0].mxu0
        %2271 = vmatprep.mubr.f32.mxu0 0.0
        %2272 = vmatmul.mubr.f32.gmra.mrb[0].mxu0 %v2130
        %v2273 = vpop.f32.mrb[0].mxu0
        %v2274 = vadd.f32 0.0, %v2273
        %v2275 = vpop.f32.mrb[0].mxu0
        %2276 = vmatprep.mubr.f32.mxu0 0.0
        %2277 = vmatmul.mubr.f32.gmra.mrb[0].mxu0 %v2131
        %v2278 = vpop.f32.mrb[0].mxu0
        %v2279 = vadd.f32 0.0, %v2278
        %v2280 = vpop.f32.mrb[0].mxu0
        %2281 = vmatprep.mubr.f32.mxu0 0.0
        %2282 = vmatmul.mubr.f32.gmra.mrb[0].mxu0 %v2132
        %v2283 = vpop.f32.mrb[0].mxu0
        %v2284 = vadd.f32 0.0, %v2283
        %v2285 = vpop.f32.mrb[0].mxu0
        %2286 = vmatprep.mubr.f32.mxu0 0.0
        %2287 = vmatmul.mubr.f32.gmra.mrb[0].mxu0 %v2133
        %v2288 = vpop.f32.mrb[0].mxu0
        %v2289 = vadd.f32 0.0, %v2288
        %v2290 = vpop.f32.mrb[0].mxu0
        %2291 = vmatprep.mubr.f32.mxu0 0.0
        %2292 = vmatmul.mubr.f32.gmra.mrb[0].mxu0 %v2134
        %v2293 = vpop.f32.mrb[0].mxu0
        %v2294 = vadd.f32 0.0, %v2293
        %v2295 = vpop.f32.mrb[0].mxu0
        %2296 = vdwg.mxu0
        %v2297 = vadd.f32 %v2103, %v2219
        %v2298 = vadd.f32 %v2104, %v2224
        %v2299 = vadd.f32 %v2105, %v2229
        %v2300 = vadd.f32 %v2106, %v2234
        %v2301 = vadd.f32 %v2107, %v2239
        %v2302 = vadd.f32 %v2108, %v2244
        %v2303 = vadd.f32 %v2109, %v2249
        %v2304 = vadd.f32 %v2110, %v2254
        %v2305 = vadd.f32 %v2111, %v2259
        %v2306 = vadd.f32 %v2112, %v2264
        %v2307 = vadd.f32 %v2113, %v2269
        %v2308 = vadd.f32 %v2114, %v2274
        %v2309 = vadd.f32 %v2115, %v2279
        %v2310 = vadd.f32 %v2116, %v2284
        %v2311 = vadd.f32 %v2117, %v2289
        %v2312 = vadd.f32 %v2118, %v2294
        %v2313 = vld [vmem:[%s1924 + $0x2] sm:$0xff]
        %v2314 = vld [vmem:[%s1924 + $0xa] sm:$0xff]
        %v2315 = vld [vmem:[%s1924 + $0x1a] sm:$0xff]
        %v2316 = vld [vmem:[%s1924 + $0x22] sm:$0xff]
        %v2317 = vld [vmem:[%s1924 + $0x32] sm:$0xff]
        %v2318 = vld [vmem:[%s1924 + $0x3a] sm:$0xff]
        %v2319 = vld [vmem:[%s1924 + $0x4a] sm:$0xff]
        %v2320 = vld [vmem:[%s1924 + $0x52] sm:$0xff]
        %v2321 = vld [vmem:[%s1924 + $0x62] sm:$0xff]
        %v2322 = vld [vmem:[%s1924 + $0x6a] sm:$0xff]
        %v2323 = vld [vmem:[%s1924 + $0x7a] sm:$0xff]
        %v2324 = vld [vmem:[%s1924 + $0x82] sm:$0xff]
        %v2325 = vld [vmem:[%s1924 + $0x92] sm:$0xff]
        %v2326 = vld [vmem:[%s1924 + $0x9a] sm:$0xff]
        %v2327 = vld [vmem:[%s1924 + $0xaa] sm:$0xff]
        %v2328 = vld [vmem:[%s1924 + $0xb2] sm:$0xff]
        %s2329 = scalar_lea.vmem [#allocation8], 1024
        %v2330 = vld [vmem:[%s2329] sm:$0xff]
        %v2331 = vld [vmem:[%s2329 + $0x8] sm:$0xff]
        %v2332 = vld [vmem:[%s2329 + $0x10] sm:$0xff]
        %v2333 = vld [vmem:[%s2329 + $0x18] sm:$0xff]
        %v2334 = vld [vmem:[%s2329 + $0x20] sm:$0xff]
        %v2335 = vld [vmem:[%s2329 + $0x28] sm:$0xff]
        %v2336 = vld [vmem:[%s2329 + $0x30] sm:$0xff]
        %v2337 = vld [vmem:[%s2329 + $0x38] sm:$0xff]
        %v2338 = vld [vmem:[%s2329 + $0x40] sm:$0xff]
        %v2339 = vld [vmem:[%s2329 + $0x48] sm:$0xff]
        %v2340 = vld [vmem:[%s2329 + $0x50] sm:$0xff]
        %v2341 = vld [vmem:[%s2329 + $0x58] sm:$0xff]
        %v2342 = vld [vmem:[%s2329 + $0x60] sm:$0xff]
        %v2343 = vld [vmem:[%s2329 + $0x68] sm:$0xff]
        %v2344 = vld [vmem:[%s2329 + $0x70] sm:$0xff]
        %v2345 = vld [vmem:[%s2329 + $0x78] sm:$0xff]
        %2346 = vmatprep.subr.mxu0 0.0
        %2347 = vmatpush1.msra.mxu0 %v2330
        %2348 = vmatprep.subr.mxu0 0.0
        %2349 = vmatpush1.msra.mxu0 %v2331
        %2350 = vmatprep.subr.mxu0 0.0
        %2351 = vmatpush1.msra.mxu0 %v2332
        %2352 = vmatprep.subr.mxu0 0.0
        %2353 = vmatpush1.msra.mxu0 %v2333
        %2354 = vmatprep.subr.mxu0 0.0
        %2355 = vmatpush1.msra.mxu0 %v2334
        %2356 = vmatprep.subr.mxu0 0.0
        %2357 = vmatpush1.msra.mxu0 %v2335
        %2358 = vmatprep.subr.mxu0 0.0
        %2359 = vmatpush1.msra.mxu0 %v2336
        %2360 = vmatprep.subr.mxu0 0.0
        %2361 = vmatpush1.msra.mxu0 %v2337
        %2362 = vmatprep.subr.mxu0 0.0
        %2363 = vmatpush1.msra.mxu0 %v2338
        %2364 = vmatprep.subr.mxu0 0.0
        %2365 = vmatpush1.msra.mxu0 %v2339
        %2366 = vmatprep.subr.mxu0 0.0
        %2367 = vmatpush1.msra.mxu0 %v2340
        %2368 = vmatprep.subr.mxu0 0.0
        %2369 = vmatpush1.msra.mxu0 %v2341
        %2370 = vmatprep.subr.mxu0 0.0
        %2371 = vmatpush1.msra.mxu0 %v2342
        %2372 = vmatprep.subr.mxu0 0.0
        %2373 = vmatpush1.msra.mxu0 %v2343
        %2374 = vmatprep.subr.mxu0 0.0
        %2375 = vmatpush1.msra.mxu0 %v2344
        %2376 = vmatprep.subr.mxu0 0.0
        %2377 = vmatpush1.msra.mxu0 %v2345
        %2378 = vmatprep.subr.mxu0 0.0
        %2379 = vmatpush1.msra.mxu0 0.0
        %2380 = vmatprep.subr.mxu0 0.0
        %2381 = vmatpush1.msra.mxu0 0.0
        %2382 = vmatprep.subr.mxu0 0.0
        %2383 = vmatpush1.msra.mxu0 0.0
        %2384 = vmatprep.subr.mxu0 0.0
        %2385 = vmatpush1.msra.mxu0 0.0
        %2386 = vmatprep.subr.mxu0 0.0
        %2387 = vmatpush1.msra.mxu0 0.0
        %2388 = vmatprep.subr.mxu0 0.0
        %2389 = vmatpush1.msra.mxu0 0.0
        %2390 = vmatprep.subr.mxu0 0.0
        %2391 = vmatpush1.msra.mxu0 0.0
        %2392 = vmatprep.subr.mxu0 0.0
        %2393 = vmatpush1.msra.mxu0 0.0
        %2394 = vmatprep.subr.mxu0 0.0
        %2395 = vmatpush1.msra.mxu0 0.0
        %2396 = vmatprep.subr.mxu0 0.0
        %2397 = vmatpush1.msra.mxu0 0.0
        %2398 = vmatprep.subr.mxu0 0.0
        %2399 = vmatpush1.msra.mxu0 0.0
        %2400 = vmatprep.subr.mxu0 0.0
        %2401 = vmatpush1.msra.mxu0 0.0
        %2402 = vmatprep.subr.mxu0 0.0
        %2403 = vmatpush1.msra.mxu0 0.0
        %2404 = vmatprep.subr.mxu0 0.0
        %2405 = vmatpush1.msra.mxu0 0.0
        %2406 = vmatprep.subr.mxu0 0.0
        %2407 = vmatpush1.msra.mxu0 0.0
        %2408 = vmatprep.subr.mxu0 0.0
        %2409 = vmatpush1.msra.mxu0 0.0
        %2410 = vmatprep.mubr.f32.mxu0 0.0
        %2411 = vmatmul.mubr.f32.gmra.mrb[0].mxu0 %v2313
        %v2412 = vpop.f32.mrb[0].mxu0
        %v2413 = vadd.f32 0.0, %v2412
        %v2414 = vpop.f32.mrb[0].mxu0
        %2415 = vmatprep.mubr.f32.mxu0 0.0
        %2416 = vmatmul.mubr.f32.gmra.mrb[0].mxu0 %v2314
        %v2417 = vpop.f32.mrb[0].mxu0
        %v2418 = vadd.f32 0.0, %v2417
        %v2419 = vpop.f32.mrb[0].mxu0
        %2420 = vmatprep.mubr.f32.mxu0 0.0
        %2421 = vmatmul.mubr.f32.gmra.mrb[0].mxu0 %v2315
        %v2422 = vpop.f32.mrb[0].mxu0
        %v2423 = vadd.f32 0.0, %v2422
        %v2424 = vpop.f32.mrb[0].mxu0
        %2425 = vmatprep.mubr.f32.mxu0 0.0
        %2426 = vmatmul.mubr.f32.gmra.mrb[0].mxu0 %v2316
        %v2427 = vpop.f32.mrb[0].mxu0
        %v2428 = vadd.f32 0.0, %v2427
        %v2429 = vpop.f32.mrb[0].mxu0
        %2430 = vmatprep.mubr.f32.mxu0 0.0
        %2431 = vmatmul.mubr.f32.gmra.mrb[0].mxu0 %v2317
        %v2432 = vpop.f32.mrb[0].mxu0
        %v2433 = vadd.f32 0.0, %v2432
        %v2434 = vpop.f32.mrb[0].mxu0
        %2435 = vmatprep.mubr.f32.mxu0 0.0
        %2436 = vmatmul.mubr.f32.gmra.mrb[0].mxu0 %v2318
        %v2437 = vpop.f32.mrb[0].mxu0
        %v2438 = vadd.f32 0.0, %v2437
        %v2439 = vpop.f32.mrb[0].mxu0
        %2440 = vmatprep.mubr.f32.mxu0 0.0
        %2441 = vmatmul.mubr.f32.gmra.mrb[0].mxu0 %v2319
        %v2442 = vpop.f32.mrb[0].mxu0
        %v2443 = vadd.f32 0.0, %v2442
        %v2444 = vpop.f32.mrb[0].mxu0
        %2445 = vmatprep.mubr.f32.mxu0 0.0
        %2446 = vmatmul.mubr.f32.gmra.mrb[0].mxu0 %v2320
        %v2447 = vpop.f32.mrb[0].mxu0
        %v2448 = vadd.f32 0.0, %v2447
        %v2449 = vpop.f32.mrb[0].mxu0
        %2450 = vmatprep.mubr.f32.mxu0 0.0
        %2451 = vmatmul.mubr.f32.gmra.mrb[0].mxu0 %v2321
        %v2452 = vpop.f32.mrb[0].mxu0
        %v2453 = vadd.f32 0.0, %v2452
        %v2454 = vpop.f32.mrb[0].mxu0
        %2455 = vmatprep.mubr.f32.mxu0 0.0
        %2456 = vmatmul.mubr.f32.gmra.mrb[0].mxu0 %v2322
        %v2457 = vpop.f32.mrb[0].mxu0
        %v2458 = vadd.f32 0.0, %v2457
        %v2459 = vpop.f32.mrb[0].mxu0
        %2460 = vmatprep.mubr.f32.mxu0 0.0
        %2461 = vmatmul.mubr.f32.gmra.mrb[0].mxu0 %v2323
        %v2462 = vpop.f32.mrb[0].mxu0
        %v2463 = vadd.f32 0.0, %v2462
        %v2464 = vpop.f32.mrb[0].mxu0
        %2465 = vmatprep.mubr.f32.mxu0 0.0
        %2466 = vmatmul.mubr.f32.gmra.mrb[0].mxu0 %v2324
        %v2467 = vpop.f32.mrb[0].mxu0
        %v2468 = vadd.f32 0.0, %v2467
        %v2469 = vpop.f32.mrb[0].mxu0
        %2470 = vmatprep.mubr.f32.mxu0 0.0
        %2471 = vmatmul.mubr.f32.gmra.mrb[0].mxu0 %v2325
        %v2472 = vpop.f32.mrb[0].mxu0
        %v2473 = vadd.f32 0.0, %v2472
        %v2474 = vpop.f32.mrb[0].mxu0
        %2475 = vmatprep.mubr.f32.mxu0 0.0
        %2476 = vmatmul.mubr.f32.gmra.mrb[0].mxu0 %v2326
        %v2477 = vpop.f32.mrb[0].mxu0
        %v2478 = vadd.f32 0.0, %v2477
        %v2479 = vpop.f32.mrb[0].mxu0
        %2480 = vmatprep.mubr.f32.mxu0 0.0
        %2481 = vmatmul.mubr.f32.gmra.mrb[0].mxu0 %v2327
        %v2482 = vpop.f32.mrb[0].mxu0
        %v2483 = vadd.f32 0.0, %v2482
        %v2484 = vpop.f32.mrb[0].mxu0
        %2485 = vmatprep.mubr.f32.mxu0 0.0
        %2486 = vmatmul.mubr.f32.gmra.mrb[0].mxu0 %v2328
        %v2487 = vpop.f32.mrb[0].mxu0
        %v2488 = vadd.f32 0.0, %v2487
        %v2489 = vpop.f32.mrb[0].mxu0
        %2490 = vdwg.mxu0
        %v2491 = vadd.f32 %v2297, %v2413
        %v2492 = vadd.f32 %v2298, %v2418
        %v2493 = vadd.f32 %v2299, %v2423
        %v2494 = vadd.f32 %v2300, %v2428
        %v2495 = vadd.f32 %v2301, %v2433
        %v2496 = vadd.f32 %v2302, %v2438
        %v2497 = vadd.f32 %v2303, %v2443
        %v2498 = vadd.f32 %v2304, %v2448
        %v2499 = vadd.f32 %v2305, %v2453
        %v2500 = vadd.f32 %v2306, %v2458
        %v2501 = vadd.f32 %v2307, %v2463
        %v2502 = vadd.f32 %v2308, %v2468
        %v2503 = vadd.f32 %v2309, %v2473
        %v2504 = vadd.f32 %v2310, %v2478
        %v2505 = vadd.f32 %v2311, %v2483
        %v2506 = vadd.f32 %v2312, %v2488
        %v2507 = vld [vmem:[%s4] sm:$0x1]
        %v2509 = vlaneseq
        %v2510 = vshrl.u32 %v2509, 7
        %v2511 = vsub.s32 0, %v2510
        %v2512 = vrot.slane %v2507, %v2511
        %v2514 = vadd.f32 %v2491, %v2512
        %v2515 = vadd.f32 %v2492, %v2512
        %v2516 = vadd.f32 %v2493, %v2512
        %v2517 = vadd.f32 %v2494, %v2512
        %v2518 = vadd.f32 %v2495, %v2512
        %v2519 = vadd.f32 %v2496, %v2512
        %v2520 = vadd.f32 %v2497, %v2512
        %v2521 = vadd.f32 %v2498, %v2512
        %v2522 = vadd.f32 %v2499, %v2512
        %v2523 = vadd.f32 %v2500, %v2512
        %v2524 = vadd.f32 %v2501, %v2512
        %v2525 = vadd.f32 %v2502, %v2512
        %v2526 = vadd.f32 %v2503, %v2512
        %v2527 = vadd.f32 %v2504, %v2512
        %v2528 = vadd.f32 %v2505, %v2512
        %v2529 = vadd.f32 %v2506, %v2512
        %v2530 = vmax.f32 %v2514, 0.0
        %v2531 = vmax.f32 %v2515, 0.0
        %v2532 = vmax.f32 %v2516, 0.0
        %v2533 = vmax.f32 %v2517, 0.0
        %v2534 = vmax.f32 %v2518, 0.0
        %v2535 = vmax.f32 %v2519, 0.0
        %v2536 = vmax.f32 %v2520, 0.0
        %v2537 = vmax.f32 %v2521, 0.0
        %v2538 = vmax.f32 %v2522, 0.0
        %v2539 = vmax.f32 %v2523, 0.0
        %v2540 = vmax.f32 %v2524, 0.0
        %v2541 = vmax.f32 %v2525, 0.0
        %v2542 = vmax.f32 %v2526, 0.0
        %v2543 = vmax.f32 %v2527, 0.0
        %v2544 = vmax.f32 %v2528, 0.0
        %v2545 = vmax.f32 %v2529, 0.0
        %v2546 = vld [vmem:[#allocation9] sm:$0xff]
        %v2547 = vld [vmem:[#allocation9 + $0x8] sm:$0xff]
        %v2548 = vld [vmem:[#allocation9 + $0x10] sm:$0xff]
        %v2549 = vld [vmem:[#allocation9 + $0x18] sm:$0xff]
        %v2550 = vld [vmem:[#allocation9 + $0x20] sm:$0xff]
        %v2551 = vld [vmem:[#allocation9 + $0x28] sm:$0xff]
        %v2552 = vld [vmem:[#allocation9 + $0x30] sm:$0xff]
        %v2553 = vld [vmem:[#allocation9 + $0x38] sm:$0xff]
        %v2554 = vld [vmem:[#allocation9 + $0x40] sm:$0xff]
        %v2555 = vld [vmem:[#allocation9 + $0x48] sm:$0xff]
        %v2556 = vld [vmem:[#allocation9 + $0x50] sm:$0xff]
        %v2557 = vld [vmem:[#allocation9 + $0x58] sm:$0xff]
        %v2558 = vld [vmem:[#allocation9 + $0x60] sm:$0xff]
        %v2559 = vld [vmem:[#allocation9 + $0x68] sm:$0xff]
        %v2560 = vld [vmem:[#allocation9 + $0x70] sm:$0xff]
        %v2561 = vld [vmem:[#allocation9 + $0x78] sm:$0xff]
        %v2562 = vld [vmem:[%s6] sm:$0x1]
        %v2564 = vlaneseq
        %v2565 = vshrl.u32 %v2564, 7
        %v2566 = vsub.s32 0, %v2565
        %v2567 = vrot.slane %v2562, %v2566
        %2569 = vmatprep.subr.mxu0 0.0
        %2570 = vmatpush1.msra.mxu0 %v2546
        %2571 = vmatprep.subr.mxu0 0.0
        %2572 = vmatpush1.msra.mxu0 %v2547
        %2573 = vmatprep.subr.mxu0 0.0
        %2574 = vmatpush1.msra.mxu0 %v2548
        %2575 = vmatprep.subr.mxu0 0.0
        %2576 = vmatpush1.msra.mxu0 %v2549
        %2577 = vmatprep.subr.mxu0 0.0
        %2578 = vmatpush1.msra.mxu0 %v2550
        %2579 = vmatprep.subr.mxu0 0.0
        %2580 = vmatpush1.msra.mxu0 %v2551
        %2581 = vmatprep.subr.mxu0 0.0
        %2582 = vmatpush1.msra.mxu0 %v2552
        %2583 = vmatprep.subr.mxu0 0.0
        %2584 = vmatpush1.msra.mxu0 %v2553
        %2585 = vmatprep.subr.mxu0 0.0
        %2586 = vmatpush1.msra.mxu0 %v2554
        %2587 = vmatprep.subr.mxu0 0.0
        %2588 = vmatpush1.msra.mxu0 %v2555
        %2589 = vmatprep.subr.mxu0 0.0
        %2590 = vmatpush1.msra.mxu0 %v2556
        %2591 = vmatprep.subr.mxu0 0.0
        %2592 = vmatpush1.msra.mxu0 %v2557
        %2593 = vmatprep.subr.mxu0 0.0
        %2594 = vmatpush1.msra.mxu0 %v2558
        %2595 = vmatprep.subr.mxu0 0.0
        %2596 = vmatpush1.msra.mxu0 %v2559
        %2597 = vmatprep.subr.mxu0 0.0
        %2598 = vmatpush1.msra.mxu0 %v2560
        %2599 = vmatprep.subr.mxu0 0.0
        %2600 = vmatpush1.msra.mxu0 %v2561
        %2601 = vmatprep.subr.mxu0 0.0
        %2602 = vmatpush1.msra.mxu0 0.0
        %2603 = vmatprep.subr.mxu0 0.0
        %2604 = vmatpush1.msra.mxu0 0.0
        %2605 = vmatprep.subr.mxu0 0.0
        %2606 = vmatpush1.msra.mxu0 0.0
        %2607 = vmatprep.subr.mxu0 0.0
        %2608 = vmatpush1.msra.mxu0 0.0
        %2609 = vmatprep.subr.mxu0 0.0
        %2610 = vmatpush1.msra.mxu0 0.0
        %2611 = vmatprep.subr.mxu0 0.0
        %2612 = vmatpush1.msra.mxu0 0.0
        %2613 = vmatprep.subr.mxu0 0.0
        %2614 = vmatpush1.msra.mxu0 0.0
        %2615 = vmatprep.subr.mxu0 0.0
        %2616 = vmatpush1.msra.mxu0 0.0
        %2617 = vmatprep.subr.mxu0 0.0
        %2618 = vmatpush1.msra.mxu0 0.0
        %2619 = vmatprep.subr.mxu0 0.0
        %2620 = vmatpush1.msra.mxu0 0.0
        %2621 = vmatprep.subr.mxu0 0.0
        %2622 = vmatpush1.msra.mxu0 0.0
        %2623 = vmatprep.subr.mxu0 0.0
        %2624 = vmatpush1.msra.mxu0 0.0
        %2625 = vmatprep.subr.mxu0 0.0
        %2626 = vmatpush1.msra.mxu0 0.0
        %2627 = vmatprep.subr.mxu0 0.0
        %2628 = vmatpush1.msra.mxu0 0.0
        %2629 = vmatprep.subr.mxu0 0.0
        %2630 = vmatpush1.msra.mxu0 0.0
        %2631 = vmatprep.subr.mxu0 0.0
        %2632 = vmatpush1.msra.mxu0 0.0
        %2633 = vmatprep.mubr.f32.mxu0 0.0
        %2634 = vmatmul.mubr.f32.gmra.mrb[0].mxu0 %v2530
        %v2635 = vpop.f32.mrb[0].mxu0
        %v2636 = vadd.f32 %v2567, %v2635
        %v2637 = vpop.f32.mrb[0].mxu0
        %2638 = vmatprep.mubr.f32.mxu0 0.0
        %2639 = vmatmul.mubr.f32.gmra.mrb[0].mxu0 %v2531
        %v2640 = vpop.f32.mrb[0].mxu0
        %v2641 = vadd.f32 %v2567, %v2640
        %v2642 = vpop.f32.mrb[0].mxu0
        %2643 = vmatprep.mubr.f32.mxu0 0.0
        %2644 = vmatmul.mubr.f32.gmra.mrb[0].mxu0 %v2532
        %v2645 = vpop.f32.mrb[0].mxu0
        %v2646 = vadd.f32 %v2567, %v2645
        %v2647 = vpop.f32.mrb[0].mxu0
        %2648 = vmatprep.mubr.f32.mxu0 0.0
        %2649 = vmatmul.mubr.f32.gmra.mrb[0].mxu0 %v2533
        %v2650 = vpop.f32.mrb[0].mxu0
        %v2651 = vadd.f32 %v2567, %v2650
        %v2652 = vpop.f32.mrb[0].mxu0
        %2653 = vmatprep.mubr.f32.mxu0 0.0
        %2654 = vmatmul.mubr.f32.gmra.mrb[0].mxu0 %v2534
        %v2655 = vpop.f32.mrb[0].mxu0
        %v2656 = vadd.f32 %v2567, %v2655
        %v2657 = vpop.f32.mrb[0].mxu0
        %2658 = vmatprep.mubr.f32.mxu0 0.0
        %2659 = vmatmul.mubr.f32.gmra.mrb[0].mxu0 %v2535
        %v2660 = vpop.f32.mrb[0].mxu0
        %v2661 = vadd.f32 %v2567, %v2660
        %v2662 = vpop.f32.mrb[0].mxu0
        %2663 = vmatprep.mubr.f32.mxu0 0.0
        %2664 = vmatmul.mubr.f32.gmra.mrb[0].mxu0 %v2536
        %v2665 = vpop.f32.mrb[0].mxu0
        %v2666 = vadd.f32 %v2567, %v2665
        %v2667 = vpop.f32.mrb[0].mxu0
        %2668 = vmatprep.mubr.f32.mxu0 0.0
        %2669 = vmatmul.mubr.f32.gmra.mrb[0].mxu0 %v2537
        %v2670 = vpop.f32.mrb[0].mxu0
        %v2671 = vadd.f32 %v2567, %v2670
        %v2672 = vpop.f32.mrb[0].mxu0
        %2673 = vmatprep.mubr.f32.mxu0 0.0
        %2674 = vmatmul.mubr.f32.gmra.mrb[0].mxu0 %v2538
        %v2675 = vpop.f32.mrb[0].mxu0
        %v2676 = vadd.f32 %v2567, %v2675
        %v2677 = vpop.f32.mrb[0].mxu0
        %2678 = vmatprep.mubr.f32.mxu0 0.0
        %2679 = vmatmul.mubr.f32.gmra.mrb[0].mxu0 %v2539
        %v2680 = vpop.f32.mrb[0].mxu0
        %v2681 = vadd.f32 %v2567, %v2680
        %v2682 = vpop.f32.mrb[0].mxu0
        %2683 = vmatprep.mubr.f32.mxu0 0.0
        %2684 = vmatmul.mubr.f32.gmra.mrb[0].mxu0 %v2540
        %v2685 = vpop.f32.mrb[0].mxu0
        %v2686 = vadd.f32 %v2567, %v2685
        %v2687 = vpop.f32.mrb[0].mxu0
        %2688 = vmatprep.mubr.f32.mxu0 0.0
        %2689 = vmatmul.mubr.f32.gmra.mrb[0].mxu0 %v2541
        %v2690 = vpop.f32.mrb[0].mxu0
        %v2691 = vadd.f32 %v2567, %v2690
        %v2692 = vpop.f32.mrb[0].mxu0
        %2693 = vmatprep.mubr.f32.mxu0 0.0
        %2694 = vmatmul.mubr.f32.gmra.mrb[0].mxu0 %v2542
        %v2695 = vpop.f32.mrb[0].mxu0
        %v2696 = vadd.f32 %v2567, %v2695
        %v2697 = vpop.f32.mrb[0].mxu0
        %2698 = vmatprep.mubr.f32.mxu0 0.0
        %2699 = vmatmul.mubr.f32.gmra.mrb[0].mxu0 %v2543
        %v2700 = vpop.f32.mrb[0].mxu0
        %v2701 = vadd.f32 %v2567, %v2700
        %v2702 = vpop.f32.mrb[0].mxu0
        %2703 = vmatprep.mubr.f32.mxu0 0.0
        %2704 = vmatmul.mubr.f32.gmra.mrb[0].mxu0 %v2544
        %v2705 = vpop.f32.mrb[0].mxu0
        %v2706 = vadd.f32 %v2567, %v2705
        %v2707 = vpop.f32.mrb[0].mxu0
        %2708 = vmatprep.mubr.f32.mxu0 0.0
        %2709 = vmatmul.mubr.f32.gmra.mrb[0].mxu0 %v2545
        %v2710 = vpop.f32.mrb[0].mxu0
        %v2711 = vadd.f32 %v2567, %v2710
        %v2712 = vpop.f32.mrb[0].mxu0
        %2713 = vdwg.mxu0
        %s2714 = smul.u32 %s785, 16
        %s2715 = scalar_lea.vmem %s347, %s2714 [#allocation3]
        %v2716 = vld [vmem:[%s2715] sm:$0xff]
        %v2717 = vld [vmem:[%s2715 + $0x8] sm:$0xff]
        %v2718 = vld [vmem:[%s2715 + $0x10] sm:$0xff]
        %v2719 = vld [vmem:[%s2715 + $0x18] sm:$0xff]
        %v2720 = vld [vmem:[%s2715 + $0x20] sm:$0xff]
        %v2721 = vld [vmem:[%s2715 + $0x28] sm:$0xff]
        %v2722 = vld [vmem:[%s2715 + $0x30] sm:$0xff]
        %v2723 = vld [vmem:[%s2715 + $0x38] sm:$0xff]
        %v2724 = vld [vmem:[%s2715 + $0x40] sm:$0xff]
        %v2725 = vld [vmem:[%s2715 + $0x48] sm:$0xff]
        %v2726 = vld [vmem:[%s2715 + $0x50] sm:$0xff]
        %v2727 = vld [vmem:[%s2715 + $0x58] sm:$0xff]
        %v2728 = vld [vmem:[%s2715 + $0x60] sm:$0xff]
        %v2729 = vld [vmem:[%s2715 + $0x68] sm:$0xff]
        %v2730 = vld [vmem:[%s2715 + $0x70] sm:$0xff]
        %v2731 = vld [vmem:[%s2715 + $0x78] sm:$0xff]
        %v2732 = vld [vmem:[#allocation11] sm:$0xff]
        %v2733 = vld [vmem:[#allocation11 + $0x8] sm:$0xff]
        %v2734 = vld [vmem:[#allocation11 + $0x10] sm:$0xff]
        %v2735 = vld [vmem:[#allocation11 + $0x18] sm:$0xff]
        %v2736 = vld [vmem:[#allocation11 + $0x20] sm:$0xff]
        %v2737 = vld [vmem:[#allocation11 + $0x28] sm:$0xff]
        %v2738 = vld [vmem:[#allocation11 + $0x30] sm:$0xff]
        %v2739 = vld [vmem:[#allocation11 + $0x38] sm:$0xff]
        %v2740 = vld [vmem:[#allocation11 + $0x40] sm:$0xff]
        %v2741 = vld [vmem:[#allocation11 + $0x48] sm:$0xff]
        %v2742 = vld [vmem:[#allocation11 + $0x50] sm:$0xff]
        %v2743 = vld [vmem:[#allocation11 + $0x58] sm:$0xff]
        %v2744 = vld [vmem:[#allocation11 + $0x60] sm:$0xff]
        %v2745 = vld [vmem:[#allocation11 + $0x68] sm:$0xff]
        %v2746 = vld [vmem:[#allocation11 + $0x70] sm:$0xff]
        %v2747 = vld [vmem:[#allocation11 + $0x78] sm:$0xff]
        %2748 = vmatprep.subr.mxu0 0.0
        %2749 = vmatpush1.msra.mxu0 %v2732
        %2750 = vmatprep.subr.mxu0 0.0
        %2751 = vmatpush1.msra.mxu0 %v2733
        %2752 = vmatprep.subr.mxu0 0.0
        %2753 = vmatpush1.msra.mxu0 %v2734
        %2754 = vmatprep.subr.mxu0 0.0
        %2755 = vmatpush1.msra.mxu0 %v2735
        %2756 = vmatprep.subr.mxu0 0.0
        %2757 = vmatpush1.msra.mxu0 %v2736
        %2758 = vmatprep.subr.mxu0 0.0
        %2759 = vmatpush1.msra.mxu0 %v2737
        %2760 = vmatprep.subr.mxu0 0.0
        %2761 = vmatpush1.msra.mxu0 %v2738
        %2762 = vmatprep.subr.mxu0 0.0
        %2763 = vmatpush1.msra.mxu0 %v2739
        %2764 = vmatprep.subr.mxu0 0.0
        %2765 = vmatpush1.msra.mxu0 %v2740
        %2766 = vmatprep.subr.mxu0 0.0
        %2767 = vmatpush1.msra.mxu0 %v2741
        %2768 = vmatprep.subr.mxu0 0.0
        %2769 = vmatpush1.msra.mxu0 %v2742
        %2770 = vmatprep.subr.mxu0 0.0
        %2771 = vmatpush1.msra.mxu0 %v2743
        %2772 = vmatprep.subr.mxu0 0.0
        %2773 = vmatpush1.msra.mxu0 %v2744
        %2774 = vmatprep.subr.mxu0 0.0
        %2775 = vmatpush1.msra.mxu0 %v2745
        %2776 = vmatprep.subr.mxu0 0.0
        %2777 = vmatpush1.msra.mxu0 %v2746
        %2778 = vmatprep.subr.mxu0 0.0
        %2779 = vmatpush1.msra.mxu0 %v2747
        %2780 = vmatprep.subr.mxu0 0.0
        %2781 = vmatpush1.msra.mxu0 0.0
        %2782 = vmatprep.subr.mxu0 0.0
        %2783 = vmatpush1.msra.mxu0 0.0
        %2784 = vmatprep.subr.mxu0 0.0
        %2785 = vmatpush1.msra.mxu0 0.0
        %2786 = vmatprep.subr.mxu0 0.0
        %2787 = vmatpush1.msra.mxu0 0.0
        %2788 = vmatprep.subr.mxu0 0.0
        %2789 = vmatpush1.msra.mxu0 0.0
        %2790 = vmatprep.subr.mxu0 0.0
        %2791 = vmatpush1.msra.mxu0 0.0
        %2792 = vmatprep.subr.mxu0 0.0
        %2793 = vmatpush1.msra.mxu0 0.0
        %2794 = vmatprep.subr.mxu0 0.0
        %2795 = vmatpush1.msra.mxu0 0.0
        %2796 = vmatprep.subr.mxu0 0.0
        %2797 = vmatpush1.msra.mxu0 0.0
        %2798 = vmatprep.subr.mxu0 0.0
        %2799 = vmatpush1.msra.mxu0 0.0
        %2800 = vmatprep.subr.mxu0 0.0
        %2801 = vmatpush1.msra.mxu0 0.0
        %2802 = vmatprep.subr.mxu0 0.0
        %2803 = vmatpush1.msra.mxu0 0.0
        %2804 = vmatprep.subr.mxu0 0.0
        %2805 = vmatpush1.msra.mxu0 0.0
        %2806 = vmatprep.subr.mxu0 0.0
        %2807 = vmatpush1.msra.mxu0 0.0
        %2808 = vmatprep.subr.mxu0 0.0
        %2809 = vmatpush1.msra.mxu0 0.0
        %2810 = vmatprep.subr.mxu0 0.0
        %2811 = vmatpush1.msra.mxu0 0.0
        %2812 = vmatprep.mubr.f32.mxu0 0.0
        %2813 = vmatmul.mubr.f32.gmra.mrb[0].mxu0 %v2716
        %v2814 = vpop.f32.mrb[0].mxu0
        %v2815 = vadd.f32 0.0, %v2814
        %v2816 = vpop.f32.mrb[0].mxu0
        %2817 = vmatprep.mubr.f32.mxu0 0.0
        %2818 = vmatmul.mubr.f32.gmra.mrb[0].mxu0 %v2717
        %v2819 = vpop.f32.mrb[0].mxu0
        %v2820 = vadd.f32 0.0, %v2819
        %v2821 = vpop.f32.mrb[0].mxu0
        %2822 = vmatprep.mubr.f32.mxu0 0.0
        %2823 = vmatmul.mubr.f32.gmra.mrb[0].mxu0 %v2718
        %v2824 = vpop.f32.mrb[0].mxu0
        %v2825 = vadd.f32 0.0, %v2824
        %v2826 = vpop.f32.mrb[0].mxu0
        %2827 = vmatprep.mubr.f32.mxu0 0.0
        %2828 = vmatmul.mubr.f32.gmra.mrb[0].mxu0 %v2719
        %v2829 = vpop.f32.mrb[0].mxu0
        %v2830 = vadd.f32 0.0, %v2829
        %v2831 = vpop.f32.mrb[0].mxu0
        %2832 = vmatprep.mubr.f32.mxu0 0.0
        %2833 = vmatmul.mubr.f32.gmra.mrb[0].mxu0 %v2720
        %v2834 = vpop.f32.mrb[0].mxu0
        %v2835 = vadd.f32 0.0, %v2834
        %v2836 = vpop.f32.mrb[0].mxu0
        %2837 = vmatprep.mubr.f32.mxu0 0.0
        %2838 = vmatmul.mubr.f32.gmra.mrb[0].mxu0 %v2721
        %v2839 = vpop.f32.mrb[0].mxu0
        %v2840 = vadd.f32 0.0, %v2839
        %v2841 = vpop.f32.mrb[0].mxu0
        %2842 = vmatprep.mubr.f32.mxu0 0.0
        %2843 = vmatmul.mubr.f32.gmra.mrb[0].mxu0 %v2722
        %v2844 = vpop.f32.mrb[0].mxu0
        %v2845 = vadd.f32 0.0, %v2844
        %v2846 = vpop.f32.mrb[0].mxu0
        %2847 = vmatprep.mubr.f32.mxu0 0.0
        %2848 = vmatmul.mubr.f32.gmra.mrb[0].mxu0 %v2723
        %v2849 = vpop.f32.mrb[0].mxu0
        %v2850 = vadd.f32 0.0, %v2849
        %v2851 = vpop.f32.mrb[0].mxu0
        %2852 = vmatprep.mubr.f32.mxu0 0.0
        %2853 = vmatmul.mubr.f32.gmra.mrb[0].mxu0 %v2724
        %v2854 = vpop.f32.mrb[0].mxu0
        %v2855 = vadd.f32 0.0, %v2854
        %v2856 = vpop.f32.mrb[0].mxu0
        %2857 = vmatprep.mubr.f32.mxu0 0.0
        %2858 = vmatmul.mubr.f32.gmra.mrb[0].mxu0 %v2725
        %v2859 = vpop.f32.mrb[0].mxu0
        %v2860 = vadd.f32 0.0, %v2859
        %v2861 = vpop.f32.mrb[0].mxu0
        %2862 = vmatprep.mubr.f32.mxu0 0.0
        %2863 = vmatmul.mubr.f32.gmra.mrb[0].mxu0 %v2726
        %v2864 = vpop.f32.mrb[0].mxu0
        %v2865 = vadd.f32 0.0, %v2864
        %v2866 = vpop.f32.mrb[0].mxu0
        %2867 = vmatprep.mubr.f32.mxu0 0.0
        %2868 = vmatmul.mubr.f32.gmra.mrb[0].mxu0 %v2727
        %v2869 = vpop.f32.mrb[0].mxu0
        %v2870 = vadd.f32 0.0, %v2869
        %v2871 = vpop.f32.mrb[0].mxu0
        %2872 = vmatprep.mubr.f32.mxu0 0.0
        %2873 = vmatmul.mubr.f32.gmra.mrb[0].mxu0 %v2728
        %v2874 = vpop.f32.mrb[0].mxu0
        %v2875 = vadd.f32 0.0, %v2874
        %v2876 = vpop.f32.mrb[0].mxu0
        %2877 = vmatprep.mubr.f32.mxu0 0.0
        %2878 = vmatmul.mubr.f32.gmra.mrb[0].mxu0 %v2729
        %v2879 = vpop.f32.mrb[0].mxu0
        %v2880 = vadd.f32 0.0, %v2879
        %v2881 = vpop.f32.mrb[0].mxu0
        %2882 = vmatprep.mubr.f32.mxu0 0.0
        %2883 = vmatmul.mubr.f32.gmra.mrb[0].mxu0 %v2730
        %v2884 = vpop.f32.mrb[0].mxu0
        %v2885 = vadd.f32 0.0, %v2884
        %v2886 = vpop.f32.mrb[0].mxu0
        %2887 = vmatprep.mubr.f32.mxu0 0.0
        %2888 = vmatmul.mubr.f32.gmra.mrb[0].mxu0 %v2731
        %v2889 = vpop.f32.mrb[0].mxu0
        %v2890 = vadd.f32 0.0, %v2889
        %v2891 = vpop.f32.mrb[0].mxu0
        %2892 = vdwg.mxu0
        %v2893 = vadd.f32 %v2636, %v2815
        %v2894 = vadd.f32 %v2641, %v2820
        %v2895 = vadd.f32 %v2646, %v2825
        %v2896 = vadd.f32 %v2651, %v2830
        %v2897 = vadd.f32 %v2656, %v2835
        %v2898 = vadd.f32 %v2661, %v2840
        %v2899 = vadd.f32 %v2666, %v2845
        %v2900 = vadd.f32 %v2671, %v2850
        %v2901 = vadd.f32 %v2676, %v2855
        %v2902 = vadd.f32 %v2681, %v2860
        %v2903 = vadd.f32 %v2686, %v2865
        %v2904 = vadd.f32 %v2691, %v2870
        %v2905 = vadd.f32 %v2696, %v2875
        %v2906 = vadd.f32 %v2701, %v2880
        %v2907 = vadd.f32 %v2706, %v2885
        %v2908 = vadd.f32 %v2711, %v2890
        %v2909 = vmax.f32 %v2893, 0.0
        %v2910 = vmax.f32 %v2894, 0.0
        %v2911 = vmax.f32 %v2895, 0.0
        %v2912 = vmax.f32 %v2896, 0.0
        %v2913 = vmax.f32 %v2897, 0.0
        %v2914 = vmax.f32 %v2898, 0.0
        %v2915 = vmax.f32 %v2899, 0.0
        %v2916 = vmax.f32 %v2900, 0.0
        %v2917 = vmax.f32 %v2901, 0.0
        %v2918 = vmax.f32 %v2902, 0.0
        %v2919 = vmax.f32 %v2903, 0.0
        %v2920 = vmax.f32 %v2904, 0.0
        %v2921 = vmax.f32 %v2905, 0.0
        %v2922 = vmax.f32 %v2906, 0.0
        %v2923 = vmax.f32 %v2907, 0.0
        %v2924 = vmax.f32 %v2908, 0.0
        %2925 = vst [vmem:[%s395] sm:$0xff] %v2909
        %2926 = vst [vmem:[%s395 + $0x8] sm:$0xff] %v2910
        %2927 = vst [vmem:[%s395 + $0x10] sm:$0xff] %v2911
        %2928 = vst [vmem:[%s395 + $0x18] sm:$0xff] %v2912
        %2929 = vst [vmem:[%s395 + $0x20] sm:$0xff] %v2913
        %2930 = vst [vmem:[%s395 + $0x28] sm:$0xff] %v2914
        %2931 = vst [vmem:[%s395 + $0x30] sm:$0xff] %v2915
        %2932 = vst [vmem:[%s395 + $0x38] sm:$0xff] %v2916
        %2933 = vst [vmem:[%s395 + $0x40] sm:$0xff] %v2917
        %2934 = vst [vmem:[%s395 + $0x48] sm:$0xff] %v2918
        %2935 = vst [vmem:[%s395 + $0x50] sm:$0xff] %v2919
        %2936 = vst [vmem:[%s395 + $0x58] sm:$0xff] %v2920
        %2937 = vst [vmem:[%s395 + $0x60] sm:$0xff] %v2921
        %2938 = vst [vmem:[%s395 + $0x68] sm:$0xff] %v2922
        %2939 = vst [vmem:[%s395 + $0x70] sm:$0xff] %v2923
        %2940 = vst [vmem:[%s395 + $0x78] sm:$0xff] %v2924
        %s2941 = sand.u32 %s222, 1
        %s2942 = scalar_lea.sflag [#allocation5], %s2941
        %s2943 = sand.u32 %s222, 1
        %s2944 = smul.addr %s2943, 128
        %s2945 = scalar_lea.vmem [#allocation12], %s2944
        // Predicated region
        $region77: #{tpu_custom_call.1} parent=51 // pred_check
          %p2946 = pneg %p232
        $region78: #{tpu_custom_call.1} parent=51 // pred_check_branch
          %2948 = sbr.rel (%p2946) target = $region80
        $region79: #{tpu_custom_call.1} parent=51 // pred_region
          %s2949 = smul.u32 8, %s32
          %s2951 = ssub.s32 2048, 2048
          %2952 = vsyncadd %s2942, %s2951
          %s2953 = smul.addr %s2949, 2
          %s2954 = smul.addr %s31, 32
          %s2955 = sadd.s32 %s2953, %s2954
          %s2956 = smul.addr %s2955, 128
          %s2957 = scalar_lea.hbm %s8, %s2956
          %s2958 = sshll.u32 %s2945, 4
          %s2959 = int_to_ptr.vmem [resolvable:$true] %s2958
          %2964 = dma.vmem_to_hbm [thread:$0]  %s2959, 2048, %s2957, %s2942, 128, 128, 8
        $region80: #{tpu_custom_call.1} parent=51 // pred_fallthru
          _
      $region52: #{tpu_custom_call.1} parent=5 // pred_fallthru
        _
      %p2965 = scmp.le.s32.totalorder 2, %s22
      // Predicated region
      $region81: #{tpu_custom_call.1} parent=5 // pred_check
        %p2966 = pneg %p2965
      $region82: #{tpu_custom_call.1} parent=5 // pred_check_branch
        %2968 = sbr.rel (%p2966) target = $region84
      $region83: #{tpu_custom_call.1} parent=5 // pred_region
        %s2969 = ssub.s32 %s22, 2
        // Predicated region
        $region85: #{tpu_custom_call.1} parent=83 // pred_check
          %p2970 = pneg %p238
        $region86: #{tpu_custom_call.1} parent=83 // pred_check_branch
          %2972 = sbr.rel (%p2970) target = $region88
        $region87: #{tpu_custom_call.1} parent=83 // pred_region
          %s2973 = sand.u32 %s223, 1
          %s2974 = scalar_lea.sflag [#allocation5], %s2973
          %s2975 = sand.u32 %s223, 1
          %s2976 = smul.addr %s2975, 128
          %s2977 = scalar_lea.vmem [#allocation12], %s2976
          %2978 = dma.done %s2974, 2048
        $region88: #{tpu_custom_call.1} parent=83 // pred_fallthru
          _
      $region84: #{tpu_custom_call.1} parent=5 // pred_fallthru
        _
    $region6: #{tpu_custom_call.1} parent=1 // loop_footer
      %s26 = sadd.s32 1, %s22
    $region7: #{tpu_custom_call.1} parent=1 // loop_footer_branch
      %21 = sbr.rel target = $region3
    $region8: #{tpu_custom_call.1} parent=1 // loop_exit
      _
    %2979 = vsyncpa [#allocation4], 1
    %s2980 = scalar_lea.sflag [#allocation4], 1
    %2981 = vsyncpa %s2980, 1
    %2982 = vsyncpa [#allocation7], 1
    %2983 = vsyncpa [#allocation10], 1
    %2984 = vsyncpa [#allocation5], 1
    %s2985 = scalar_lea.sflag [#allocation5], 1
    %2986 = vsyncpa %s2985, 1

</llo_original>
